<compile_context>
chip_gen: v5e
topology: v5e:2x2
jax: 0.10.0
libtpu: 0.0.40
codegen_flags: <defaults>
</compile_context>

<pallas_src>
import functools

import jax
import jax.numpy as jnp
from jax import lax
from jax.experimental import pallas as pl
from jax.experimental.pallas import tpu as pltpu


def _gru_stack_kernel(pre1_ref, pre2_ref, pre3_ref, h0_ref,
                      whh_ref, wxh_ref, bhn_ref,
                      h3_seq_ref, h_fin_ref, *, H, S):
    """Sequential 3-layer GRU stack.

    pre1_ref/pre2_ref/pre3_ref : (S, B, 3H)  hoisted x-side gate pre-activations
        per layer (layer 1: word+cat emb + b_ih + b_hh[r,z]; layers 2/3: cat emb
        part + biases).  Gates packed densely r|z|n at lane offsets 0/H/2H.
    h0_ref  : (3, B, H)   initial hidden states.
    whh_ref : (3, H, 3H)  recurrent weights (dense gate packing).
    wxh_ref : (2, H, 3H)  h-dependent halves of layer-2/3 input weights.
    bhn_ref : (3, 1, H)   hidden bias of the n gate (r/z parts folded into pre).
    h3_seq_ref : (S, B, H)   per-step h3 (consumed by the batched FC outside).
    h_fin_ref  : (3, B, H)   final hidden states.
    """
    B = h0_ref.shape[1]

    # Hoisted loop-invariant reads/broadcasts (not CSE'd inside the unrolled
    # loop otherwise).  Weight slabs intentionally stay as per-step VMEM loads.
    bhn0 = jnp.broadcast_to(bhn_ref[0], (B, H))
    bhn1 = jnp.broadcast_to(bhn_ref[1], (B, H))
    bhn2 = jnp.broadcast_to(bhn_ref[2], (B, H))

    def cell(gi, gh, bh_n, h):
        # PyTorch GRUCell, gate order (r, z, n), gates at lanes 0/H/2H.
        # gi already holds x-side contributions + b_ih (all gates) + b_hh[r,z];
        # b_hh[n] must stay inside the r * (...) term.
        rz = jax.nn.sigmoid(gi[:, 0:2 * H] + gh[:, 0:2 * H])   # fused r,z EUP op
        r = rz[:, 0:H]
        z = rz[:, H:2 * H]
        n = jnp.tanh(gi[:, 2 * H:3 * H] + r * (gh[:, 2 * H:3 * H] + bh_n))
        return (1.0 - z) * n + z * h

    def body(step, carry):
        h1, h2, h3 = carry
        # The three recurrent matmuls depend only on the previous step's h's,
        # so the scheduler can issue them early / overlap them with the serial
        # cell -> wxh -> cell chain below.
        gh1 = jnp.dot(h1, whh_ref[0], preferred_element_type=jnp.float32)
        gh2 = jnp.dot(h2, whh_ref[1], preferred_element_type=jnp.float32)
        gh3 = jnp.dot(h3, whh_ref[2], preferred_element_type=jnp.float32)

        h1 = cell(pre1_ref[step], gh1, bhn0, h1)

        gi2 = pre2_ref[step] + jnp.dot(h1, wxh_ref[0],
                                       preferred_element_type=jnp.float32)
        h2 = cell(gi2, gh2, bhn1, h2)

        gi3 = pre3_ref[step] + jnp.dot(h2, wxh_ref[1],
                                       preferred_element_type=jnp.float32)
        h3 = cell(gi3, gh3, bhn2, h3)

        h3_seq_ref[step] = h3
        return h1, h2, h3

    # Full unroll at small S; bounded unroll keeps compile time sane if S grows.
    unroll = True if S <= 16 else 8
    h1, h2, h3 = lax.fori_loop(0, S, body, (h0_ref[0], h0_ref[1], h0_ref[2]),
                               unroll=unroll)

    h_fin_ref[0] = h1
    h_fin_ref[1] = h2
    h_fin_ref[2] = h3


def init_params(output_size, hidden_size, key):
    H, O = hidden_size, output_size
    k = 1.0 / jnp.sqrt(jnp.float32(H))
    keys = jax.random.split(key, 20)

    def u(kk, shape):
        return jax.random.uniform(kk, shape, jnp.float32, -k, k)

    p = {
        "word_emb": jax.random.normal(keys[0], (O, H), jnp.float32) * 0.1,
        "cat_emb": jax.random.normal(keys[1], (2, H), jnp.float32) * 0.1,
        "fc_w": u(keys[2], (O, 2 * H)),   # torch Linear: (out, in)
        "fc_b": u(keys[3], (O,)),
    }
    for c in (1, 2, 3):
        base = 4 * c
        p[f"w{c}_ih"] = u(keys[base + 0], (3 * H, 2 * H))   # torch GRUCell weight_ih
        p[f"w{c}_hh"] = u(keys[base + 1], (3 * H, H))       # torch GRUCell weight_hh
        p[f"b{c}_ih"] = u(keys[base + 2], (3 * H,))
        p[f"b{c}_hh"] = u(keys[base + 3], (3 * H,))
    return p


def gru_with_cells_forward(input_token, category, hidden_state, params):
    """input_token, category: (B, S) int32; hidden_state: 3-tuple of (B, H) f32.
    Returns (final_output (B, S, O), (h1, h2, h3))."""
    h1_0, h2_0, h3_0 = hidden_state
    B, S = input_token.shape
    H = h1_0.shape[1]
    O = params["word_emb"].shape[0]
    prec = jax.lax.Precision.HIGHEST

    # ---- one-time weight prep (glue) --------------------------------------
    w1T = params["w1_ih"].T           # (2H, 3H): rows :H -> first input half
    w2T = params["w2_ih"].T
    w3T = params["w3_ih"].T
    whh = jnp.stack([params["w1_hh"].T, params["w2_hh"].T, params["w3_hh"].T])  # (3,H,3H)
    wxh = jnp.stack([w2T[H:], w3T[H:]])                                          # (2,H,3H)

    def fold_bias(bih, bhh):
        # x-side bias: b_ih (all gates) + b_hh for r,z only; b_hh[n] stays
        # inside the r * (...) term (PyTorch GRUCell semantics).
        return (bih + bhh.at[2 * H:].set(0.0)).reshape(1, 3 * H)

    b1 = fold_bias(params["b1_ih"], params["b1_hh"])
    b2 = fold_bias(params["b2_ih"], params["b2_hh"])
    b3 = fold_bias(params["b3_ih"], params["b3_hh"])
    bhn = jnp.stack([params["b1_hh"][2 * H:].reshape(1, H),
                     params["b2_hh"][2 * H:].reshape(1, H),
                     params["b3_hh"][2 * H:].reshape(1, H)])                     # (3,1,H)

    # ---- embedding gather + hoisted non-recurrent matmuls (glue) ----------
    emb_w = jnp.take(params["word_emb"], input_token, axis=0)      # (B, S, H)
    emb_c = jnp.take(params["cat_emb"], category, axis=0)          # (B, S, H)
    xw = jnp.transpose(emb_w, (1, 0, 2)).reshape(S * B, H)         # seq-major
    xc = jnp.transpose(emb_c, (1, 0, 2)).reshape(S * B, H)

    pre1 = (jnp.dot(xw, w1T[:H], precision=prec)
            + jnp.dot(xc, w1T[H:], precision=prec) + b1).reshape(S, B, 3 * H)
    pre2 = (jnp.dot(xc, w2T[:H], precision=prec) + b2).reshape(S, B, 3 * H)
    pre3 = (jnp.dot(xc, w3T[:H], precision=prec) + b3).reshape(S, B, 3 * H)

    h0 = jnp.stack([h1_0, h2_0, h3_0])                             # (3, B, H)

    vmem = pl.BlockSpec(memory_space=pltpu.MemorySpace.VMEM)
    h3_seq, h_fin = pl.pallas_call(
        functools.partial(_gru_stack_kernel, H=H, S=S),
        out_shape=(jax.ShapeDtypeStruct((S, B, H), jnp.float32),
                   jax.ShapeDtypeStruct((3, B, H), jnp.float32)),
        in_specs=[vmem] * 7,
        out_specs=(vmem, vmem),
    )(pre1, pre2, pre3, h0, whh, wxh, bhn)

    # ---- FC hoisted out of the recurrence: batched over all S*B steps -----
    fcwT = params["fc_w"].T                                        # (2H, O)
    fc = (jnp.dot(xc, fcwT[:H], precision=prec)
          + jnp.dot(h3_seq.reshape(S * B, H), fcwT[H:], precision=prec)
          + params["fc_b"].reshape(1, O))                          # (S*B, O)
    final_out = jnp.transpose(fc.reshape(S, B, O), (1, 0, 2))      # (B, S, O)
    return final_out, (h_fin[0], h_fin[1], h_fin[2])


def _reference_forward(input_token, category, hidden_state, params):
    """Pure-JAX reference (mirrors the PyTorch forward loop)."""
    h1, h2, h3 = hidden_state
    B, S = input_token.shape
    H = h1.shape[1]
    prec = jax.lax.Precision.HIGHEST
    emb_w = jnp.take(params["word_emb"], input_token, axis=0)
    emb_c = jnp.take(params["cat_emb"], category, axis=0)

    def cell(x, h, wi, wh, bi, bh):
        gi = jnp.dot(x, wi.T, precision=prec) + bi
        gh = jnp.dot(h, wh.T, precision=prec) + bh
        r = jax.nn.sigmoid(gi[:, :H] + gh[:, :H])
        z = jax.nn.sigmoid(gi[:, H:2 * H] + gh[:, H:2 * H])
        n = jnp.tanh(gi[:, 2 * H:] + r * gh[:, 2 * H:])
        return (1.0 - z) * n + z * h

    outs = []
    for i in range(S):
        xw = emb_w[:, i, :]
        xc = emb_c[:, i, :]
        h1 = cell(jnp.concatenate([xw, xc], 1), h1,
                  params["w1_ih"], params["w1_hh"], params["b1_ih"], params["b1_hh"])
        h2 = cell(jnp.concatenate([xc, h1], 1), h2,
                  params["w2_ih"], params["w2_hh"], params["b2_ih"], params["b2_hh"])
        h3 = cell(jnp.concatenate([xc, h2], 1), h3,
                  params["w3_ih"], params["w3_hh"], params["b3_ih"], params["b3_hh"])
        outs.append(jnp.dot(jnp.concatenate([xc, h3], 1), params["fc_w"].T,
                            precision=prec) + params["fc_b"])
    return jnp.stack(outs, axis=1), (h1, h2, h3)


if __name__ == "__main__":
    B, S, H, O = 2, 8, 32, 40   # batch, seq, hidden_size, output_size (vocab)

    key = jax.random.PRNGKey(0)
    kp, kt, kc = jax.random.split(key, 3)
    params = init_params(O, H, kp)

    input_token = jax.random.randint(kt, (B, S), 0, O, dtype=jnp.int32)
    category = jax.random.randint(kc, (B, S), 0, 2, dtype=jnp.int32)
    hidden0 = (jnp.zeros((B, H), jnp.float32),
               jnp.zeros((B, H), jnp.float32),
               jnp.zeros((B, H), jnp.float32))

    fwd = jax.jit(gru_with_cells_forward)
    out, (h1, h2, h3) = fwd(input_token, category, hidden0, params)
    out = jax.block_until_ready(out)
    jax.block_until_ready((h1, h2, h3))

    assert out.shape == (B, S, O)
    assert h1.shape == h2.shape == h3.shape == (B, H)

    ref_out, (r1, r2, r3) = _reference_forward(input_token, category, hidden0, params)
    assert jnp.allclose(out, ref_out, atol=1e-2, rtol=1e-2)
    assert jnp.allclose(h1, r1, atol=1e-2, rtol=1e-2)
    assert jnp.allclose(h2, r2, atol=1e-2, rtol=1e-2)
    assert jnp.allclose(h3, r3, atol=1e-2, rtol=1e-2)

    print("KERNEL_OK")
</pallas_src>

<mosaic_0001>
module attributes {stable_mosaic.version = 11 : i64} {
  func.func @_gru_stack_kernel(%arg0: memref<8x2x96xf32, #tpu.memory_space<vmem>>, %arg1: memref<8x2x96xf32, #tpu.memory_space<vmem>>, %arg2: memref<8x2x96xf32, #tpu.memory_space<vmem>>, %arg3: memref<3x2x32xf32, #tpu.memory_space<vmem>>, %arg4: memref<3x32x96xf32, #tpu.memory_space<vmem>>, %arg5: memref<2x32x96xf32, #tpu.memory_space<vmem>>, %arg6: memref<3x1x32xf32, #tpu.memory_space<vmem>>, %arg7: memref<8x2x32xf32, #tpu.memory_space<vmem>>, %arg8: memref<3x2x32xf32, #tpu.memory_space<vmem>>) attributes {dimension_semantics = [], scalar_prefetch = 0 : i64, scratch_operands = 0 : i64, tpu.core_type = #tpu.core_type<tc>} {
    %c0 = arith.constant 0 : index
    %c0_0 = arith.constant 0 : index
    %c0_1 = arith.constant 0 : index
    %0 = vector.load %arg6[%c0, %c0_0, %c0_1] : memref<3x1x32xf32, #tpu.memory_space<vmem>>, vector<1x1x32xf32>
    %1 = vector.shape_cast %0 : vector<1x1x32xf32> to vector<1x32xf32>
    %2 = vector.shape_cast %1 : vector<1x32xf32> to vector<1x32xf32>
    %3 = vector.broadcast %2 : vector<1x32xf32> to vector<2x32xf32>
    %c1 = arith.constant 1 : index
    %c0_2 = arith.constant 0 : index
    %c0_3 = arith.constant 0 : index
    %4 = vector.load %arg6[%c1, %c0_2, %c0_3] : memref<3x1x32xf32, #tpu.memory_space<vmem>>, vector<1x1x32xf32>
    %5 = vector.shape_cast %4 : vector<1x1x32xf32> to vector<1x32xf32>
    %6 = vector.shape_cast %5 : vector<1x32xf32> to vector<1x32xf32>
    %7 = vector.broadcast %6 : vector<1x32xf32> to vector<2x32xf32>
    %c2 = arith.constant 2 : index
    %c0_4 = arith.constant 0 : index
    %c0_5 = arith.constant 0 : index
    %8 = vector.load %arg6[%c2, %c0_4, %c0_5] : memref<3x1x32xf32, #tpu.memory_space<vmem>>, vector<1x1x32xf32>
    %9 = vector.shape_cast %8 : vector<1x1x32xf32> to vector<1x32xf32>
    %10 = vector.shape_cast %9 : vector<1x32xf32> to vector<1x32xf32>
    %11 = vector.broadcast %10 : vector<1x32xf32> to vector<2x32xf32>
    %c0_6 = arith.constant 0 : index
    %c0_7 = arith.constant 0 : index
    %c0_8 = arith.constant 0 : index
    %12 = vector.load %arg3[%c0_6, %c0_7, %c0_8] : memref<3x2x32xf32, #tpu.memory_space<vmem>>, vector<1x2x32xf32>
    %13 = vector.shape_cast %12 : vector<1x2x32xf32> to vector<2x32xf32>
    %c1_9 = arith.constant 1 : index
    %c0_10 = arith.constant 0 : index
    %c0_11 = arith.constant 0 : index
    %14 = vector.load %arg3[%c1_9, %c0_10, %c0_11] : memref<3x2x32xf32, #tpu.memory_space<vmem>>, vector<1x2x32xf32>
    %15 = vector.shape_cast %14 : vector<1x2x32xf32> to vector<2x32xf32>
    %c2_12 = arith.constant 2 : index
    %c0_13 = arith.constant 0 : index
    %c0_14 = arith.constant 0 : index
    %16 = vector.load %arg3[%c2_12, %c0_13, %c0_14] : memref<3x2x32xf32, #tpu.memory_space<vmem>>, vector<1x2x32xf32>
    %17 = vector.shape_cast %16 : vector<1x2x32xf32> to vector<2x32xf32>
    %c0_i32 = arith.constant 0 : i32
    %c0_15 = arith.constant 0 : index
    %c0_16 = arith.constant 0 : index
    %c0_17 = arith.constant 0 : index
    %18 = vector.load %arg4[%c0_15, %c0_16, %c0_17] : memref<3x32x96xf32, #tpu.memory_space<vmem>>, vector<1x32x96xf32>
    %19 = vector.shape_cast %18 : vector<1x32x96xf32> to vector<32x96xf32>
    %cst = arith.constant dense<0.000000e+00> : vector<2x96xf32>
    %20 = tpu.matmul %13, %19, %cst {dimension_numbers = #tpu.dot_dimension_numbers<[1], [0], [0], [1], [0, 0, 1, 1], [], []>} : vector<2x32xf32>, vector<32x96xf32>, vector<2x96xf32> -> vector<2x96xf32>
    %c1_18 = arith.constant 1 : index
    %c0_19 = arith.constant 0 : index
    %c0_20 = arith.constant 0 : index
    %21 = vector.load %arg4[%c1_18, %c0_19, %c0_20] : memref<3x32x96xf32, #tpu.memory_space<vmem>>, vector<1x32x96xf32>
    %22 = vector.shape_cast %21 : vector<1x32x96xf32> to vector<32x96xf32>
    %cst_21 = arith.constant dense<0.000000e+00> : vector<2x96xf32>
    %23 = tpu.matmul %15, %22, %cst_21 {dimension_numbers = #tpu.dot_dimension_numbers<[1], [0], [0], [1], [0, 0, 1, 1], [], []>} : vector<2x32xf32>, vector<32x96xf32>, vector<2x96xf32> -> vector<2x96xf32>
    %c2_22 = arith.constant 2 : index
    %c0_23 = arith.constant 0 : index
    %c0_24 = arith.constant 0 : index
    %24 = vector.load %arg4[%c2_22, %c0_23, %c0_24] : memref<3x32x96xf32, #tpu.memory_space<vmem>>, vector<1x32x96xf32>
    %25 = vector.shape_cast %24 : vector<1x32x96xf32> to vector<32x96xf32>
    %cst_25 = arith.constant dense<0.000000e+00> : vector<2x96xf32>
    %26 = tpu.matmul %17, %25, %cst_25 {dimension_numbers = #tpu.dot_dimension_numbers<[1], [0], [0], [1], [0, 0, 1, 1], [], []>} : vector<2x32xf32>, vector<32x96xf32>, vector<2x96xf32> -> vector<2x96xf32>
    %27 = arith.index_cast %c0_i32 : i32 to index
    %c0_26 = arith.constant 0 : index
    %c0_27 = arith.constant 0 : index
    %28 = vector.load %arg0[%27, %c0_26, %c0_27] : memref<8x2x96xf32, #tpu.memory_space<vmem>>, vector<1x2x96xf32>
    %29 = vector.shape_cast %28 : vector<1x2x96xf32> to vector<2x96xf32>
    %30 = vector.extract_strided_slice %29 {offsets = [0, 0], sizes = [2, 64], strides = [1, 1]} : vector<2x96xf32> to vector<2x64xf32>
    %31 = vector.extract_strided_slice %20 {offsets = [0, 0], sizes = [2, 64], strides = [1, 1]} : vector<2x96xf32> to vector<2x64xf32>
    %32 = arith.addf %30, %31 : vector<2x64xf32>
    %33 = arith.negf %32 : vector<2x64xf32>
    %34 = math.exp %33 : vector<2x64xf32>
    %cst_28 = arith.constant 1.000000e+00 : f32
    %35 = vector.broadcast %cst_28 : f32 to vector<2x64xf32>
    %36 = arith.addf %35, %34 : vector<2x64xf32>
    %37 = arith.divf %35, %36 : vector<2x64xf32>
    %38 = vector.extract_strided_slice %37 {offsets = [0, 0], sizes = [2, 32], strides = [1, 1]} : vector<2x64xf32> to vector<2x32xf32>
    %39 = vector.extract_strided_slice %37 {offsets = [0, 32], sizes = [2, 32], strides = [1, 1]} : vector<2x64xf32> to vector<2x32xf32>
    %40 = vector.extract_strided_slice %29 {offsets = [0, 64], sizes = [2, 32], strides = [1, 1]} : vector<2x96xf32> to vector<2x32xf32>
    %41 = vector.extract_strided_slice %20 {offsets = [0, 64], sizes = [2, 32], strides = [1, 1]} : vector<2x96xf32> to vector<2x32xf32>
    %42 = arith.addf %41, %3 : vector<2x32xf32>
    %43 = arith.mulf %38, %42 : vector<2x32xf32>
    %44 = arith.addf %40, %43 : vector<2x32xf32>
    %45 = math.tanh %44 : vector<2x32xf32>
    %cst_29 = arith.constant 1.000000e+00 : f32
    %46 = vector.broadcast %cst_29 : f32 to vector<2x32xf32>
    %47 = arith.subf %46, %39 : vector<2x32xf32>
    %48 = arith.mulf %47, %45 : vector<2x32xf32>
    %49 = arith.mulf %39, %13 : vector<2x32xf32>
    %50 = arith.addf %48, %49 : vector<2x32xf32>
    %51 = arith.index_cast %c0_i32 : i32 to index
    %c0_30 = arith.constant 0 : index
    %c0_31 = arith.constant 0 : index
    %52 = vector.load %arg1[%51, %c0_30, %c0_31] : memref<8x2x96xf32, #tpu.memory_space<vmem>>, vector<1x2x96xf32>
    %53 = vector.shape_cast %52 : vector<1x2x96xf32> to vector<2x96xf32>
    %c0_32 = arith.constant 0 : index
    %c0_33 = arith.constant 0 : index
    %c0_34 = arith.constant 0 : index
    %54 = vector.load %arg5[%c0_32, %c0_33, %c0_34] : memref<2x32x96xf32, #tpu.memory_space<vmem>>, vector<1x32x96xf32>
    %55 = vector.shape_cast %54 : vector<1x32x96xf32> to vector<32x96xf32>
    %cst_35 = arith.constant dense<0.000000e+00> : vector<2x96xf32>
    %56 = tpu.matmul %50, %55, %cst_35 {dimension_numbers = #tpu.dot_dimension_numbers<[1], [0], [0], [1], [0, 0, 1, 1], [], []>} : vector<2x32xf32>, vector<32x96xf32>, vector<2x96xf32> -> vector<2x96xf32>
    %57 = arith.addf %53, %56 : vector<2x96xf32>
    %58 = vector.extract_strided_slice %57 {offsets = [0, 0], sizes = [2, 64], strides = [1, 1]} : vector<2x96xf32> to vector<2x64xf32>
    %59 = vector.extract_strided_slice %23 {offsets = [0, 0], sizes = [2, 64], strides = [1, 1]} : vector<2x96xf32> to vector<2x64xf32>
    %60 = arith.addf %58, %59 : vector<2x64xf32>
    %61 = arith.negf %60 : vector<2x64xf32>
    %62 = math.exp %61 : vector<2x64xf32>
    %cst_36 = arith.constant 1.000000e+00 : f32
    %63 = vector.broadcast %cst_36 : f32 to vector<2x64xf32>
    %64 = arith.addf %63, %62 : vector<2x64xf32>
    %65 = arith.divf %63, %64 : vector<2x64xf32>
    %66 = vector.extract_strided_slice %65 {offsets = [0, 0], sizes = [2, 32], strides = [1, 1]} : vector<2x64xf32> to vector<2x32xf32>
    %67 = vector.extract_strided_slice %65 {offsets = [0, 32], sizes = [2, 32], strides = [1, 1]} : vector<2x64xf32> to vector<2x32xf32>
    %68 = vector.extract_strided_slice %57 {offsets = [0, 64], sizes = [2, 32], strides = [1, 1]} : vector<2x96xf32> to vector<2x32xf32>
    %69 = vector.extract_strided_slice %23 {offsets = [0, 64], sizes = [2, 32], strides = [1, 1]} : vector<2x96xf32> to vector<2x32xf32>
    %70 = arith.addf %69, %7 : vector<2x32xf32>
    %71 = arith.mulf %66, %70 : vector<2x32xf32>
    %72 = arith.addf %68, %71 : vector<2x32xf32>
    %73 = math.tanh %72 : vector<2x32xf32>
    %cst_37 = arith.constant 1.000000e+00 : f32
    %74 = vector.broadcast %cst_37 : f32 to vector<2x32xf32>
    %75 = arith.subf %74, %67 : vector<2x32xf32>
    %76 = arith.mulf %75, %73 : vector<2x32xf32>
    %77 = arith.mulf %67, %15 : vector<2x32xf32>
    %78 = arith.addf %76, %77 : vector<2x32xf32>
    %79 = arith.index_cast %c0_i32 : i32 to index
    %c0_38 = arith.constant 0 : index
    %c0_39 = arith.constant 0 : index
    %80 = vector.load %arg2[%79, %c0_38, %c0_39] : memref<8x2x96xf32, #tpu.memory_space<vmem>>, vector<1x2x96xf32>
    %81 = vector.shape_cast %80 : vector<1x2x96xf32> to vector<2x96xf32>
    %c1_40 = arith.constant 1 : index
    %c0_41 = arith.constant 0 : index
    %c0_42 = arith.constant 0 : index
    %82 = vector.load %arg5[%c1_40, %c0_41, %c0_42] : memref<2x32x96xf32, #tpu.memory_space<vmem>>, vector<1x32x96xf32>
    %83 = vector.shape_cast %82 : vector<1x32x96xf32> to vector<32x96xf32>
    %cst_43 = arith.constant dense<0.000000e+00> : vector<2x96xf32>
    %84 = tpu.matmul %78, %83, %cst_43 {dimension_numbers = #tpu.dot_dimension_numbers<[1], [0], [0], [1], [0, 0, 1, 1], [], []>} : vector<2x32xf32>, vector<32x96xf32>, vector<2x96xf32> -> vector<2x96xf32>
    %85 = arith.addf %81, %84 : vector<2x96xf32>
    %86 = vector.extract_strided_slice %85 {offsets = [0, 0], sizes = [2, 64], strides = [1, 1]} : vector<2x96xf32> to vector<2x64xf32>
    %87 = vector.extract_strided_slice %26 {offsets = [0, 0], sizes = [2, 64], strides = [1, 1]} : vector<2x96xf32> to vector<2x64xf32>
    %88 = arith.addf %86, %87 : vector<2x64xf32>
    %89 = arith.negf %88 : vector<2x64xf32>
    %90 = math.exp %89 : vector<2x64xf32>
    %cst_44 = arith.constant 1.000000e+00 : f32
    %91 = vector.broadcast %cst_44 : f32 to vector<2x64xf32>
    %92 = arith.addf %91, %90 : vector<2x64xf32>
    %93 = arith.divf %91, %92 : vector<2x64xf32>
    %94 = vector.extract_strided_slice %93 {offsets = [0, 0], sizes = [2, 32], strides = [1, 1]} : vector<2x64xf32> to vector<2x32xf32>
    %95 = vector.extract_strided_slice %93 {offsets = [0, 32], sizes = [2, 32], strides = [1, 1]} : vector<2x64xf32> to vector<2x32xf32>
    %96 = vector.extract_strided_slice %85 {offsets = [0, 64], sizes = [2, 32], strides = [1, 1]} : vector<2x96xf32> to vector<2x32xf32>
    %97 = vector.extract_strided_slice %26 {offsets = [0, 64], sizes = [2, 32], strides = [1, 1]} : vector<2x96xf32> to vector<2x32xf32>
    %98 = arith.addf %97, %11 : vector<2x32xf32>
    %99 = arith.mulf %94, %98 : vector<2x32xf32>
    %100 = arith.addf %96, %99 : vector<2x32xf32>
    %101 = math.tanh %100 : vector<2x32xf32>
    %cst_45 = arith.constant 1.000000e+00 : f32
    %102 = vector.broadcast %cst_45 : f32 to vector<2x32xf32>
    %103 = arith.subf %102, %95 : vector<2x32xf32>
    %104 = arith.mulf %103, %101 : vector<2x32xf32>
    %105 = arith.mulf %95, %17 : vector<2x32xf32>
    %106 = arith.addf %104, %105 : vector<2x32xf32>
    %107 = arith.index_cast %c0_i32 : i32 to index
    %c0_46 = arith.constant 0 : index
    %c0_47 = arith.constant 0 : index
    %108 = vector.load %arg7[%107, %c0_46, %c0_47] : memref<8x2x32xf32, #tpu.memory_space<vmem>>, vector<1x2x32xf32>
    %109 = vector.shape_cast %108 : vector<1x2x32xf32> to vector<2x32xf32>
    %110 = vector.shape_cast %106 : vector<2x32xf32> to vector<1x2x32xf32>
    tpu.vector_store %arg7[%107, %c0_46, %c0_47], %110 {strides = array<i32>} : memref<8x2x32xf32, #tpu.memory_space<vmem>>, vector<1x2x32xf32>,
    %c1_i32 = arith.constant 1 : i32
    %c0_48 = arith.constant 0 : index
    %c0_49 = arith.constant 0 : index
    %c0_50 = arith.constant 0 : index
    %111 = vector.load %arg4[%c0_48, %c0_49, %c0_50] : memref<3x32x96xf32, #tpu.memory_space<vmem>>, vector<1x32x96xf32>
    %112 = vector.shape_cast %111 : vector<1x32x96xf32> to vector<32x96xf32>
    %cst_51 = arith.constant dense<0.000000e+00> : vector<2x96xf32>
    %113 = tpu.matmul %50, %112, %cst_51 {dimension_numbers = #tpu.dot_dimension_numbers<[1], [0], [0], [1], [0, 0, 1, 1], [], []>} : vector<2x32xf32>, vector<32x96xf32>, vector<2x96xf32> -> vector<2x96xf32>
    %c1_52 = arith.constant 1 : index
    %c0_53 = arith.constant 0 : index
    %c0_54 = arith.constant 0 : index
    %114 = vector.load %arg4[%c1_52, %c0_53, %c0_54] : memref<3x32x96xf32, #tpu.memory_space<vmem>>, vector<1x32x96xf32>
    %115 = vector.shape_cast %114 : vector<1x32x96xf32> to vector<32x96xf32>
    %cst_55 = arith.constant dense<0.000000e+00> : vector<2x96xf32>
    %116 = tpu.matmul %78, %115, %cst_55 {dimension_numbers = #tpu.dot_dimension_numbers<[1], [0], [0], [1], [0, 0, 1, 1], [], []>} : vector<2x32xf32>, vector<32x96xf32>, vector<2x96xf32> -> vector<2x96xf32>
    %c2_56 = arith.constant 2 : index
    %c0_57 = arith.constant 0 : index
    %c0_58 = arith.constant 0 : index
    %117 = vector.load %arg4[%c2_56, %c0_57, %c0_58] : memref<3x32x96xf32, #tpu.memory_space<vmem>>, vector<1x32x96xf32>
    %118 = vector.shape_cast %117 : vector<1x32x96xf32> to vector<32x96xf32>
    %cst_59 = arith.constant dense<0.000000e+00> : vector<2x96xf32>
    %119 = tpu.matmul %106, %118, %cst_59 {dimension_numbers = #tpu.dot_dimension_numbers<[1], [0], [0], [1], [0, 0, 1, 1], [], []>} : vector<2x32xf32>, vector<32x96xf32>, vector<2x96xf32> -> vector<2x96xf32>
    %120 = arith.index_cast %c1_i32 : i32 to index
    %c0_60 = arith.constant 0 : index
    %c0_61 = arith.constant 0 : index
    %121 = vector.load %arg0[%120, %c0_60, %c0_61] : memref<8x2x96xf32, #tpu.memory_space<vmem>>, vector<1x2x96xf32>
    %122 = vector.shape_cast %121 : vector<1x2x96xf32> to vector<2x96xf32>
    %123 = vector.extract_strided_slice %122 {offsets = [0, 0], sizes = [2, 64], strides = [1, 1]} : vector<2x96xf32> to vector<2x64xf32>
    %124 = vector.extract_strided_slice %113 {offsets = [0, 0], sizes = [2, 64], strides = [1, 1]} : vector<2x96xf32> to vector<2x64xf32>
    %125 = arith.addf %123, %124 : vector<2x64xf32>
    %126 = arith.negf %125 : vector<2x64xf32>
    %127 = math.exp %126 : vector<2x64xf32>
    %cst_62 = arith.constant 1.000000e+00 : f32
    %128 = vector.broadcast %cst_62 : f32 to vector<2x64xf32>
    %129 = arith.addf %128, %127 : vector<2x64xf32>
    %130 = arith.divf %128, %129 : vector<2x64xf32>
    %131 = vector.extract_strided_slice %130 {offsets = [0, 0], sizes = [2, 32], strides = [1, 1]} : vector<2x64xf32> to vector<2x32xf32>
    %132 = vector.extract_strided_slice %130 {offsets = [0, 32], sizes = [2, 32], strides = [1, 1]} : vector<2x64xf32> to vector<2x32xf32>
    %133 = vector.extract_strided_slice %122 {offsets = [0, 64], sizes = [2, 32], strides = [1, 1]} : vector<2x96xf32> to vector<2x32xf32>
    %134 = vector.extract_strided_slice %113 {offsets = [0, 64], sizes = [2, 32], strides = [1, 1]} : vector<2x96xf32> to vector<2x32xf32>
    %135 = arith.addf %134, %3 : vector<2x32xf32>
    %136 = arith.mulf %131, %135 : vector<2x32xf32>
    %137 = arith.addf %133, %136 : vector<2x32xf32>
    %138 = math.tanh %137 : vector<2x32xf32>
    %cst_63 = arith.constant 1.000000e+00 : f32
    %139 = vector.broadcast %cst_63 : f32 to vector<2x32xf32>
    %140 = arith.subf %139, %132 : vector<2x32xf32>
    %141 = arith.mulf %140, %138 : vector<2x32xf32>
    %142 = arith.mulf %132, %50 : vector<2x32xf32>
    %143 = arith.addf %141, %142 : vector<2x32xf32>
    %144 = arith.index_cast %c1_i32 : i32 to index
    %c0_64 = arith.constant 0 : index
    %c0_65 = arith.constant 0 : index
    %145 = vector.load %arg1[%144, %c0_64, %c0_65] : memref<8x2x96xf32, #tpu.memory_space<vmem>>, vector<1x2x96xf32>
    %146 = vector.shape_cast %145 : vector<1x2x96xf32> to vector<2x96xf32>
    %c0_66 = arith.constant 0 : index
    %c0_67 = arith.constant 0 : index
    %c0_68 = arith.constant 0 : index
    %147 = vector.load %arg5[%c0_66, %c0_67, %c0_68] : memref<2x32x96xf32, #tpu.memory_space<vmem>>, vector<1x32x96xf32>
    %148 = vector.shape_cast %147 : vector<1x32x96xf32> to vector<32x96xf32>
    %cst_69 = arith.constant dense<0.000000e+00> : vector<2x96xf32>
    %149 = tpu.matmul %143, %148, %cst_69 {dimension_numbers = #tpu.dot_dimension_numbers<[1], [0], [0], [1], [0, 0, 1, 1], [], []>} : vector<2x32xf32>, vector<32x96xf32>, vector<2x96xf32> -> vector<2x96xf32>
    %150 = arith.addf %146, %149 : vector<2x96xf32>
    %151 = vector.extract_strided_slice %150 {offsets = [0, 0], sizes = [2, 64], strides = [1, 1]} : vector<2x96xf32> to vector<2x64xf32>
    %152 = vector.extract_strided_slice %116 {offsets = [0, 0], sizes = [2, 64], strides = [1, 1]} : vector<2x96xf32> to vector<2x64xf32>
    %153 = arith.addf %151, %152 : vector<2x64xf32>
    %154 = arith.negf %153 : vector<2x64xf32>
    %155 = math.exp %154 : vector<2x64xf32>
    %cst_70 = arith.constant 1.000000e+00 : f32
    %156 = vector.broadcast %cst_70 : f32 to vector<2x64xf32>
    %157 = arith.addf %156, %155 : vector<2x64xf32>
    %158 = arith.divf %156, %157 : vector<2x64xf32>
    %159 = vector.extract_strided_slice %158 {offsets = [0, 0], sizes = [2, 32], strides = [1, 1]} : vector<2x64xf32> to vector<2x32xf32>
    %160 = vector.extract_strided_slice %158 {offsets = [0, 32], sizes = [2, 32], strides = [1, 1]} : vector<2x64xf32> to vector<2x32xf32>
    %161 = vector.extract_strided_slice %150 {offsets = [0, 64], sizes = [2, 32], strides = [1, 1]} : vector<2x96xf32> to vector<2x32xf32>
    %162 = vector.extract_strided_slice %116 {offsets = [0, 64], sizes = [2, 32], strides = [1, 1]} : vector<2x96xf32> to vector<2x32xf32>
    %163 = arith.addf %162, %7 : vector<2x32xf32>
    %164 = arith.mulf %159, %163 : vector<2x32xf32>
    %165 = arith.addf %161, %164 : vector<2x32xf32>
    %166 = math.tanh %165 : vector<2x32xf32>
    %cst_71 = arith.constant 1.000000e+00 : f32
    %167 = vector.broadcast %cst_71 : f32 to vector<2x32xf32>
    %168 = arith.subf %167, %160 : vector<2x32xf32>
    %169 = arith.mulf %168, %166 : vector<2x32xf32>
    %170 = arith.mulf %160, %78 : vector<2x32xf32>
    %171 = arith.addf %169, %170 : vector<2x32xf32>
    %172 = arith.index_cast %c1_i32 : i32 to index
    %c0_72 = arith.constant 0 : index
    %c0_73 = arith.constant 0 : index
    %173 = vector.load %arg2[%172, %c0_72, %c0_73] : memref<8x2x96xf32, #tpu.memory_space<vmem>>, vector<1x2x96xf32>
    %174 = vector.shape_cast %173 : vector<1x2x96xf32> to vector<2x96xf32>
    %c1_74 = arith.constant 1 : index
    %c0_75 = arith.constant 0 : index
    %c0_76 = arith.constant 0 : index
    %175 = vector.load %arg5[%c1_74, %c0_75, %c0_76] : memref<2x32x96xf32, #tpu.memory_space<vmem>>, vector<1x32x96xf32>
    %176 = vector.shape_cast %175 : vector<1x32x96xf32> to vector<32x96xf32>
    %cst_77 = arith.constant dense<0.000000e+00> : vector<2x96xf32>
    %177 = tpu.matmul %171, %176, %cst_77 {dimension_numbers = #tpu.dot_dimension_numbers<[1], [0], [0], [1], [0, 0, 1, 1], [], []>} : vector<2x32xf32>, vector<32x96xf32>, vector<2x96xf32> -> vector<2x96xf32>
    %178 = arith.addf %174, %177 : vector<2x96xf32>
    %179 = vector.extract_strided_slice %178 {offsets = [0, 0], sizes = [2, 64], strides = [1, 1]} : vector<2x96xf32> to vector<2x64xf32>
    %180 = vector.extract_strided_slice %119 {offsets = [0, 0], sizes = [2, 64], strides = [1, 1]} : vector<2x96xf32> to vector<2x64xf32>
    %181 = arith.addf %179, %180 : vector<2x64xf32>
    %182 = arith.negf %181 : vector<2x64xf32>
    %183 = math.exp %182 : vector<2x64xf32>
    %cst_78 = arith.constant 1.000000e+00 : f32
    %184 = vector.broadcast %cst_78 : f32 to vector<2x64xf32>
    %185 = arith.addf %184, %183 : vector<2x64xf32>
    %186 = arith.divf %184, %185 : vector<2x64xf32>
    %187 = vector.extract_strided_slice %186 {offsets = [0, 0], sizes = [2, 32], strides = [1, 1]} : vector<2x64xf32> to vector<2x32xf32>
    %188 = vector.extract_strided_slice %186 {offsets = [0, 32], sizes = [2, 32], strides = [1, 1]} : vector<2x64xf32> to vector<2x32xf32>
    %189 = vector.extract_strided_slice %178 {offsets = [0, 64], sizes = [2, 32], strides = [1, 1]} : vector<2x96xf32> to vector<2x32xf32>
    %190 = vector.extract_strided_slice %119 {offsets = [0, 64], sizes = [2, 32], strides = [1, 1]} : vector<2x96xf32> to vector<2x32xf32>
    %191 = arith.addf %190, %11 : vector<2x32xf32>
    %192 = arith.mulf %187, %191 : vector<2x32xf32>
    %193 = arith.addf %189, %192 : vector<2x32xf32>
    %194 = math.tanh %193 : vector<2x32xf32>
    %cst_79 = arith.constant 1.000000e+00 : f32
    %195 = vector.broadcast %cst_79 : f32 to vector<2x32xf32>
    %196 = arith.subf %195, %188 : vector<2x32xf32>
    %197 = arith.mulf %196, %194 : vector<2x32xf32>
    %198 = arith.mulf %188, %106 : vector<2x32xf32>
    %199 = arith.addf %197, %198 : vector<2x32xf32>
    %200 = arith.index_cast %c1_i32 : i32 to index
    %c0_80 = arith.constant 0 : index
    %c0_81 = arith.constant 0 : index
    %201 = vector.load %arg7[%200, %c0_80, %c0_81] : memref<8x2x32xf32, #tpu.memory_space<vmem>>, vector<1x2x32xf32>
    %202 = vector.shape_cast %201 : vector<1x2x32xf32> to vector<2x32xf32>
    %203 = vector.shape_cast %199 : vector<2x32xf32> to vector<1x2x32xf32>
    tpu.vector_store %arg7[%200, %c0_80, %c0_81], %203 {strides = array<i32>} : memref<8x2x32xf32, #tpu.memory_space<vmem>>, vector<1x2x32xf32>,
    %c2_i32 = arith.constant 2 : i32
    %c0_82 = arith.constant 0 : index
    %c0_83 = arith.constant 0 : index
    %c0_84 = arith.constant 0 : index
    %204 = vector.load %arg4[%c0_82, %c0_83, %c0_84] : memref<3x32x96xf32, #tpu.memory_space<vmem>>, vector<1x32x96xf32>
    %205 = vector.shape_cast %204 : vector<1x32x96xf32> to vector<32x96xf32>
    %cst_85 = arith.constant dense<0.000000e+00> : vector<2x96xf32>
    %206 = tpu.matmul %143, %205, %cst_85 {dimension_numbers = #tpu.dot_dimension_numbers<[1], [0], [0], [1], [0, 0, 1, 1], [], []>} : vector<2x32xf32>, vector<32x96xf32>, vector<2x96xf32> -> vector<2x96xf32>
    %c1_86 = arith.constant 1 : index
    %c0_87 = arith.constant 0 : index
    %c0_88 = arith.constant 0 : index
    %207 = vector.load %arg4[%c1_86, %c0_87, %c0_88] : memref<3x32x96xf32, #tpu.memory_space<vmem>>, vector<1x32x96xf32>
    %208 = vector.shape_cast %207 : vector<1x32x96xf32> to vector<32x96xf32>
    %cst_89 = arith.constant dense<0.000000e+00> : vector<2x96xf32>
    %209 = tpu.matmul %171, %208, %cst_89 {dimension_numbers = #tpu.dot_dimension_numbers<[1], [0], [0], [1], [0, 0, 1, 1], [], []>} : vector<2x32xf32>, vector<32x96xf32>, vector<2x96xf32> -> vector<2x96xf32>
    %c2_90 = arith.constant 2 : index
    %c0_91 = arith.constant 0 : index
    %c0_92 = arith.constant 0 : index
    %210 = vector.load %arg4[%c2_90, %c0_91, %c0_92] : memref<3x32x96xf32, #tpu.memory_space<vmem>>, vector<1x32x96xf32>
    %211 = vector.shape_cast %210 : vector<1x32x96xf32> to vector<32x96xf32>
    %cst_93 = arith.constant dense<0.000000e+00> : vector<2x96xf32>
    %212 = tpu.matmul %199, %211, %cst_93 {dimension_numbers = #tpu.dot_dimension_numbers<[1], [0], [0], [1], [0, 0, 1, 1], [], []>} : vector<2x32xf32>, vector<32x96xf32>, vector<2x96xf32> -> vector<2x96xf32>
    %213 = arith.index_cast %c2_i32 : i32 to index
    %c0_94 = arith.constant 0 : index
    %c0_95 = arith.constant 0 : index
    %214 = vector.load %arg0[%213, %c0_94, %c0_95] : memref<8x2x96xf32, #tpu.memory_space<vmem>>, vector<1x2x96xf32>
    %215 = vector.shape_cast %214 : vector<1x2x96xf32> to vector<2x96xf32>
    %216 = vector.extract_strided_slice %215 {offsets = [0, 0], sizes = [2, 64], strides = [1, 1]} : vector<2x96xf32> to vector<2x64xf32>
    %217 = vector.extract_strided_slice %206 {offsets = [0, 0], sizes = [2, 64], strides = [1, 1]} : vector<2x96xf32> to vector<2x64xf32>
    %218 = arith.addf %216, %217 : vector<2x64xf32>
    %219 = arith.negf %218 : vector<2x64xf32>
    %220 = math.exp %219 : vector<2x64xf32>
    %cst_96 = arith.constant 1.000000e+00 : f32
    %221 = vector.broadcast %cst_96 : f32 to vector<2x64xf32>
    %222 = arith.addf %221, %220 : vector<2x64xf32>
    %223 = arith.divf %221, %222 : vector<2x64xf32>
    %224 = vector.extract_strided_slice %223 {offsets = [0, 0], sizes = [2, 32], strides = [1, 1]} : vector<2x64xf32> to vector<2x32xf32>
    %225 = vector.extract_strided_slice %223 {offsets = [0, 32], sizes = [2, 32], strides = [1, 1]} : vector<2x64xf32> to vector<2x32xf32>
    %226 = vector.extract_strided_slice %215 {offsets = [0, 64], sizes = [2, 32], strides = [1, 1]} : vector<2x96xf32> to vector<2x32xf32>
    %227 = vector.extract_strided_slice %206 {offsets = [0, 64], sizes = [2, 32], strides = [1, 1]} : vector<2x96xf32> to vector<2x32xf32>
    %228 = arith.addf %227, %3 : vector<2x32xf32>
    %229 = arith.mulf %224, %228 : vector<2x32xf32>
    %230 = arith.addf %226, %229 : vector<2x32xf32>
    %231 = math.tanh %230 : vector<2x32xf32>
    %cst_97 = arith.constant 1.000000e+00 : f32
    %232 = vector.broadcast %cst_97 : f32 to vector<2x32xf32>
    %233 = arith.subf %232, %225 : vector<2x32xf32>
    %234 = arith.mulf %233, %231 : vector<2x32xf32>
    %235 = arith.mulf %225, %143 : vector<2x32xf32>
    %236 = arith.addf %234, %235 : vector<2x32xf32>
    %237 = arith.index_cast %c2_i32 : i32 to index
    %c0_98 = arith.constant 0 : index
    %c0_99 = arith.constant 0 : index
    %238 = vector.load %arg1[%237, %c0_98, %c0_99] : memref<8x2x96xf32, #tpu.memory_space<vmem>>, vector<1x2x96xf32>
    %239 = vector.shape_cast %238 : vector<1x2x96xf32> to vector<2x96xf32>
    %c0_100 = arith.constant 0 : index
    %c0_101 = arith.constant 0 : index
    %c0_102 = arith.constant 0 : index
    %240 = vector.load %arg5[%c0_100, %c0_101, %c0_102] : memref<2x32x96xf32, #tpu.memory_space<vmem>>, vector<1x32x96xf32>
    %241 = vector.shape_cast %240 : vector<1x32x96xf32> to vector<32x96xf32>
    %cst_103 = arith.constant dense<0.000000e+00> : vector<2x96xf32>
    %242 = tpu.matmul %236, %241, %cst_103 {dimension_numbers = #tpu.dot_dimension_numbers<[1], [0], [0], [1], [0, 0, 1, 1], [], []>} : vector<2x32xf32>, vector<32x96xf32>, vector<2x96xf32> -> vector<2x96xf32>
    %243 = arith.addf %239, %242 : vector<2x96xf32>
    %244 = vector.extract_strided_slice %243 {offsets = [0, 0], sizes = [2, 64], strides = [1, 1]} : vector<2x96xf32> to vector<2x64xf32>
    %245 = vector.extract_strided_slice %209 {offsets = [0, 0], sizes = [2, 64], strides = [1, 1]} : vector<2x96xf32> to vector<2x64xf32>
    %246 = arith.addf %244, %245 : vector<2x64xf32>
    %247 = arith.negf %246 : vector<2x64xf32>
    %248 = math.exp %247 : vector<2x64xf32>
    %cst_104 = arith.constant 1.000000e+00 : f32
    %249 = vector.broadcast %cst_104 : f32 to vector<2x64xf32>
    %250 = arith.addf %249, %248 : vector<2x64xf32>
    %251 = arith.divf %249, %250 : vector<2x64xf32>
    %252 = vector.extract_strided_slice %251 {offsets = [0, 0], sizes = [2, 32], strides = [1, 1]} : vector<2x64xf32> to vector<2x32xf32>
    %253 = vector.extract_strided_slice %251 {offsets = [0, 32], sizes = [2, 32], strides = [1, 1]} : vector<2x64xf32> to vector<2x32xf32>
    %254 = vector.extract_strided_slice %243 {offsets = [0, 64], sizes = [2, 32], strides = [1, 1]} : vector<2x96xf32> to vector<2x32xf32>
    %255 = vector.extract_strided_slice %209 {offsets = [0, 64], sizes = [2, 32], strides = [1, 1]} : vector<2x96xf32> to vector<2x32xf32>
    %256 = arith.addf %255, %7 : vector<2x32xf32>
    %257 = arith.mulf %252, %256 : vector<2x32xf32>
    %258 = arith.addf %254, %257 : vector<2x32xf32>
    %259 = math.tanh %258 : vector<2x32xf32>
    %cst_105 = arith.constant 1.000000e+00 : f32
    %260 = vector.broadcast %cst_105 : f32 to vector<2x32xf32>
    %261 = arith.subf %260, %253 : vector<2x32xf32>
    %262 = arith.mulf %261, %259 : vector<2x32xf32>
    %263 = arith.mulf %253, %171 : vector<2x32xf32>
    %264 = arith.addf %262, %263 : vector<2x32xf32>
    %265 = arith.index_cast %c2_i32 : i32 to index
    %c0_106 = arith.constant 0 : index
    %c0_107 = arith.constant 0 : index
    %266 = vector.load %arg2[%265, %c0_106, %c0_107] : memref<8x2x96xf32, #tpu.memory_space<vmem>>, vector<1x2x96xf32>
    %267 = vector.shape_cast %266 : vector<1x2x96xf32> to vector<2x96xf32>
    %c1_108 = arith.constant 1 : index
    %c0_109 = arith.constant 0 : index
    %c0_110 = arith.constant 0 : index
    %268 = vector.load %arg5[%c1_108, %c0_109, %c0_110] : memref<2x32x96xf32, #tpu.memory_space<vmem>>, vector<1x32x96xf32>
    %269 = vector.shape_cast %268 : vector<1x32x96xf32> to vector<32x96xf32>
    %cst_111 = arith.constant dense<0.000000e+00> : vector<2x96xf32>
    %270 = tpu.matmul %264, %269, %cst_111 {dimension_numbers = #tpu.dot_dimension_numbers<[1], [0], [0], [1], [0, 0, 1, 1], [], []>} : vector<2x32xf32>, vector<32x96xf32>, vector<2x96xf32> -> vector<2x96xf32>
    %271 = arith.addf %267, %270 : vector<2x96xf32>
    %272 = vector.extract_strided_slice %271 {offsets = [0, 0], sizes = [2, 64], strides = [1, 1]} : vector<2x96xf32> to vector<2x64xf32>
    %273 = vector.extract_strided_slice %212 {offsets = [0, 0], sizes = [2, 64], strides = [1, 1]} : vector<2x96xf32> to vector<2x64xf32>
    %274 = arith.addf %272, %273 : vector<2x64xf32>
    %275 = arith.negf %274 : vector<2x64xf32>
    %276 = math.exp %275 : vector<2x64xf32>
    %cst_112 = arith.constant 1.000000e+00 : f32
    %277 = vector.broadcast %cst_112 : f32 to vector<2x64xf32>
    %278 = arith.addf %277, %276 : vector<2x64xf32>
    %279 = arith.divf %277, %278 : vector<2x64xf32>
    %280 = vector.extract_strided_slice %279 {offsets = [0, 0], sizes = [2, 32], strides = [1, 1]} : vector<2x64xf32> to vector<2x32xf32>
    %281 = vector.extract_strided_slice %279 {offsets = [0, 32], sizes = [2, 32], strides = [1, 1]} : vector<2x64xf32> to vector<2x32xf32>
    %282 = vector.extract_strided_slice %271 {offsets = [0, 64], sizes = [2, 32], strides = [1, 1]} : vector<2x96xf32> to vector<2x32xf32>
    %283 = vector.extract_strided_slice %212 {offsets = [0, 64], sizes = [2, 32], strides = [1, 1]} : vector<2x96xf32> to vector<2x32xf32>
    %284 = arith.addf %283, %11 : vector<2x32xf32>
    %285 = arith.mulf %280, %284 : vector<2x32xf32>
    %286 = arith.addf %282, %285 : vector<2x32xf32>
    %287 = math.tanh %286 : vector<2x32xf32>
    %cst_113 = arith.constant 1.000000e+00 : f32
    %288 = vector.broadcast %cst_113 : f32 to vector<2x32xf32>
    %289 = arith.subf %288, %281 : vector<2x32xf32>
    %290 = arith.mulf %289, %287 : vector<2x32xf32>
    %291 = arith.mulf %281, %199 : vector<2x32xf32>
    %292 = arith.addf %290, %291 : vector<2x32xf32>
    %293 = arith.index_cast %c2_i32 : i32 to index
    %c0_114 = arith.constant 0 : index
    %c0_115 = arith.constant 0 : index
    %294 = vector.load %arg7[%293, %c0_114, %c0_115] : memref<8x2x32xf32, #tpu.memory_space<vmem>>, vector<1x2x32xf32>
    %295 = vector.shape_cast %294 : vector<1x2x32xf32> to vector<2x32xf32>
    %296 = vector.shape_cast %292 : vector<2x32xf32> to vector<1x2x32xf32>
    tpu.vector_store %arg7[%293, %c0_114, %c0_115], %296 {strides = array<i32>} : memref<8x2x32xf32, #tpu.memory_space<vmem>>, vector<1x2x32xf32>,
    %c3_i32 = arith.constant 3 : i32
    %c0_116 = arith.constant 0 : index
    %c0_117 = arith.constant 0 : index
    %c0_118 = arith.constant 0 : index
    %297 = vector.load %arg4[%c0_116, %c0_117, %c0_118] : memref<3x32x96xf32, #tpu.memory_space<vmem>>, vector<1x32x96xf32>
    %298 = vector.shape_cast %297 : vector<1x32x96xf32> to vector<32x96xf32>
    %cst_119 = arith.constant dense<0.000000e+00> : vector<2x96xf32>
    %299 = tpu.matmul %236, %298, %cst_119 {dimension_numbers = #tpu.dot_dimension_numbers<[1], [0], [0], [1], [0, 0, 1, 1], [], []>} : vector<2x32xf32>, vector<32x96xf32>, vector<2x96xf32> -> vector<2x96xf32>
    %c1_120 = arith.constant 1 : index
    %c0_121 = arith.constant 0 : index
    %c0_122 = arith.constant 0 : index
    %300 = vector.load %arg4[%c1_120, %c0_121, %c0_122] : memref<3x32x96xf32, #tpu.memory_space<vmem>>, vector<1x32x96xf32>
    %301 = vector.shape_cast %300 : vector<1x32x96xf32> to vector<32x96xf32>
    %cst_123 = arith.constant dense<0.000000e+00> : vector<2x96xf32>
    %302 = tpu.matmul %264, %301, %cst_123 {dimension_numbers = #tpu.dot_dimension_numbers<[1], [0], [0], [1], [0, 0, 1, 1], [], []>} : vector<2x32xf32>, vector<32x96xf32>, vector<2x96xf32> -> vector<2x96xf32>
    %c2_124 = arith.constant 2 : index
    %c0_125 = arith.constant 0 : index
    %c0_126 = arith.constant 0 : index
    %303 = vector.load %arg4[%c2_124, %c0_125, %c0_126] : memref<3x32x96xf32, #tpu.memory_space<vmem>>, vector<1x32x96xf32>
    %304 = vector.shape_cast %303 : vector<1x32x96xf32> to vector<32x96xf32>
    %cst_127 = arith.constant dense<0.000000e+00> : vector<2x96xf32>
    %305 = tpu.matmul %292, %304, %cst_127 {dimension_numbers = #tpu.dot_dimension_numbers<[1], [0], [0], [1], [0, 0, 1, 1], [], []>} : vector<2x32xf32>, vector<32x96xf32>, vector<2x96xf32> -> vector<2x96xf32>
    %306 = arith.index_cast %c3_i32 : i32 to index
    %c0_128 = arith.constant 0 : index
    %c0_129 = arith.constant 0 : index
    %307 = vector.load %arg0[%306, %c0_128, %c0_129] : memref<8x2x96xf32, #tpu.memory_space<vmem>>, vector<1x2x96xf32>
    %308 = vector.shape_cast %307 : vector<1x2x96xf32> to vector<2x96xf32>
    %309 = vector.extract_strided_slice %308 {offsets = [0, 0], sizes = [2, 64], strides = [1, 1]} : vector<2x96xf32> to vector<2x64xf32>
    %310 = vector.extract_strided_slice %299 {offsets = [0, 0], sizes = [2, 64], strides = [1, 1]} : vector<2x96xf32> to vector<2x64xf32>
    %311 = arith.addf %309, %310 : vector<2x64xf32>
    %312 = arith.negf %311 : vector<2x64xf32>
    %313 = math.exp %312 : vector<2x64xf32>
    %cst_130 = arith.constant 1.000000e+00 : f32
    %314 = vector.broadcast %cst_130 : f32 to vector<2x64xf32>
    %315 = arith.addf %314, %313 : vector<2x64xf32>
    %316 = arith.divf %314, %315 : vector<2x64xf32>
    %317 = vector.extract_strided_slice %316 {offsets = [0, 0], sizes = [2, 32], strides = [1, 1]} : vector<2x64xf32> to vector<2x32xf32>
    %318 = vector.extract_strided_slice %316 {offsets = [0, 32], sizes = [2, 32], strides = [1, 1]} : vector<2x64xf32> to vector<2x32xf32>
    %319 = vector.extract_strided_slice %308 {offsets = [0, 64], sizes = [2, 32], strides = [1, 1]} : vector<2x96xf32> to vector<2x32xf32>
    %320 = vector.extract_strided_slice %299 {offsets = [0, 64], sizes = [2, 32], strides = [1, 1]} : vector<2x96xf32> to vector<2x32xf32>
    %321 = arith.addf %320, %3 : vector<2x32xf32>
    %322 = arith.mulf %317, %321 : vector<2x32xf32>
    %323 = arith.addf %319, %322 : vector<2x32xf32>
    %324 = math.tanh %323 : vector<2x32xf32>
    %cst_131 = arith.constant 1.000000e+00 : f32
    %325 = vector.broadcast %cst_131 : f32 to vector<2x32xf32>
    %326 = arith.subf %325, %318 : vector<2x32xf32>
    %327 = arith.mulf %326, %324 : vector<2x32xf32>
    %328 = arith.mulf %318, %236 : vector<2x32xf32>
    %329 = arith.addf %327, %328 : vector<2x32xf32>
    %330 = arith.index_cast %c3_i32 : i32 to index
    %c0_132 = arith.constant 0 : index
    %c0_133 = arith.constant 0 : index
    %331 = vector.load %arg1[%330, %c0_132, %c0_133] : memref<8x2x96xf32, #tpu.memory_space<vmem>>, vector<1x2x96xf32>
    %332 = vector.shape_cast %331 : vector<1x2x96xf32> to vector<2x96xf32>
    %c0_134 = arith.constant 0 : index
    %c0_135 = arith.constant 0 : index
    %c0_136 = arith.constant 0 : index
    %333 = vector.load %arg5[%c0_134, %c0_135, %c0_136] : memref<2x32x96xf32, #tpu.memory_space<vmem>>, vector<1x32x96xf32>
    %334 = vector.shape_cast %333 : vector<1x32x96xf32> to vector<32x96xf32>
    %cst_137 = arith.constant dense<0.000000e+00> : vector<2x96xf32>
    %335 = tpu.matmul %329, %334, %cst_137 {dimension_numbers = #tpu.dot_dimension_numbers<[1], [0], [0], [1], [0, 0, 1, 1], [], []>} : vector<2x32xf32>, vector<32x96xf32>, vector<2x96xf32> -> vector<2x96xf32>
    %336 = arith.addf %332, %335 : vector<2x96xf32>
    %337 = vector.extract_strided_slice %336 {offsets = [0, 0], sizes = [2, 64], strides = [1, 1]} : vector<2x96xf32> to vector<2x64xf32>
    %338 = vector.extract_strided_slice %302 {offsets = [0, 0], sizes = [2, 64], strides = [1, 1]} : vector<2x96xf32> to vector<2x64xf32>
    %339 = arith.addf %337, %338 : vector<2x64xf32>
    %340 = arith.negf %339 : vector<2x64xf32>
    %341 = math.exp %340 : vector<2x64xf32>
    %cst_138 = arith.constant 1.000000e+00 : f32
    %342 = vector.broadcast %cst_138 : f32 to vector<2x64xf32>
    %343 = arith.addf %342, %341 : vector<2x64xf32>
    %344 = arith.divf %342, %343 : vector<2x64xf32>
    %345 = vector.extract_strided_slice %344 {offsets = [0, 0], sizes = [2, 32], strides = [1, 1]} : vector<2x64xf32> to vector<2x32xf32>
    %346 = vector.extract_strided_slice %344 {offsets = [0, 32], sizes = [2, 32], strides = [1, 1]} : vector<2x64xf32> to vector<2x32xf32>
    %347 = vector.extract_strided_slice %336 {offsets = [0, 64], sizes = [2, 32], strides = [1, 1]} : vector<2x96xf32> to vector<2x32xf32>
    %348 = vector.extract_strided_slice %302 {offsets = [0, 64], sizes = [2, 32], strides = [1, 1]} : vector<2x96xf32> to vector<2x32xf32>
    %349 = arith.addf %348, %7 : vector<2x32xf32>
    %350 = arith.mulf %345, %349 : vector<2x32xf32>
    %351 = arith.addf %347, %350 : vector<2x32xf32>
    %352 = math.tanh %351 : vector<2x32xf32>
    %cst_139 = arith.constant 1.000000e+00 : f32
    %353 = vector.broadcast %cst_139 : f32 to vector<2x32xf32>
    %354 = arith.subf %353, %346 : vector<2x32xf32>
    %355 = arith.mulf %354, %352 : vector<2x32xf32>
    %356 = arith.mulf %346, %264 : vector<2x32xf32>
    %357 = arith.addf %355, %356 : vector<2x32xf32>
    %358 = arith.index_cast %c3_i32 : i32 to index
    %c0_140 = arith.constant 0 : index
    %c0_141 = arith.constant 0 : index
    %359 = vector.load %arg2[%358, %c0_140, %c0_141] : memref<8x2x96xf32, #tpu.memory_space<vmem>>, vector<1x2x96xf32>
    %360 = vector.shape_cast %359 : vector<1x2x96xf32> to vector<2x96xf32>
    %c1_142 = arith.constant 1 : index
    %c0_143 = arith.constant 0 : index
    %c0_144 = arith.constant 0 : index
    %361 = vector.load %arg5[%c1_142, %c0_143, %c0_144] : memref<2x32x96xf32, #tpu.memory_space<vmem>>, vector<1x32x96xf32>
    %362 = vector.shape_cast %361 : vector<1x32x96xf32> to vector<32x96xf32>
    %cst_145 = arith.constant dense<0.000000e+00> : vector<2x96xf32>
    %363 = tpu.matmul %357, %362, %cst_145 {dimension_numbers = #tpu.dot_dimension_numbers<[1], [0], [0], [1], [0, 0, 1, 1], [], []>} : vector<2x32xf32>, vector<32x96xf32>, vector<2x96xf32> -> vector<2x96xf32>
    %364 = arith.addf %360, %363 : vector<2x96xf32>
    %365 = vector.extract_strided_slice %364 {offsets = [0, 0], sizes = [2, 64], strides = [1, 1]} : vector<2x96xf32> to vector<2x64xf32>
    %366 = vector.extract_strided_slice %305 {offsets = [0, 0], sizes = [2, 64], strides = [1, 1]} : vector<2x96xf32> to vector<2x64xf32>
    %367 = arith.addf %365, %366 : vector<2x64xf32>
    %368 = arith.negf %367 : vector<2x64xf32>
    %369 = math.exp %368 : vector<2x64xf32>
    %cst_146 = arith.constant 1.000000e+00 : f32
    %370 = vector.broadcast %cst_146 : f32 to vector<2x64xf32>
    %371 = arith.addf %370, %369 : vector<2x64xf32>
    %372 = arith.divf %370, %371 : vector<2x64xf32>
    %373 = vector.extract_strided_slice %372 {offsets = [0, 0], sizes = [2, 32], strides = [1, 1]} : vector<2x64xf32> to vector<2x32xf32>
    %374 = vector.extract_strided_slice %372 {offsets = [0, 32], sizes = [2, 32], strides = [1, 1]} : vector<2x64xf32> to vector<2x32xf32>
    %375 = vector.extract_strided_slice %364 {offsets = [0, 64], sizes = [2, 32], strides = [1, 1]} : vector<2x96xf32> to vector<2x32xf32>
    %376 = vector.extract_strided_slice %305 {offsets = [0, 64], sizes = [2, 32], strides = [1, 1]} : vector<2x96xf32> to vector<2x32xf32>
    %377 = arith.addf %376, %11 : vector<2x32xf32>
    %378 = arith.mulf %373, %377 : vector<2x32xf32>
    %379 = arith.addf %375, %378 : vector<2x32xf32>
    %380 = math.tanh %379 : vector<2x32xf32>
    %cst_147 = arith.constant 1.000000e+00 : f32
    %381 = vector.broadcast %cst_147 : f32 to vector<2x32xf32>
    %382 = arith.subf %381, %374 : vector<2x32xf32>
    %383 = arith.mulf %382, %380 : vector<2x32xf32>
    %384 = arith.mulf %374, %292 : vector<2x32xf32>
    %385 = arith.addf %383, %384 : vector<2x32xf32>
    %386 = arith.index_cast %c3_i32 : i32 to index
    %c0_148 = arith.constant 0 : index
    %c0_149 = arith.constant 0 : index
    %387 = vector.load %arg7[%386, %c0_148, %c0_149] : memref<8x2x32xf32, #tpu.memory_space<vmem>>, vector<1x2x32xf32>
    %388 = vector.shape_cast %387 : vector<1x2x32xf32> to vector<2x32xf32>
    %389 = vector.shape_cast %385 : vector<2x32xf32> to vector<1x2x32xf32>
    tpu.vector_store %arg7[%386, %c0_148, %c0_149], %389 {strides = array<i32>} : memref<8x2x32xf32, #tpu.memory_space<vmem>>, vector<1x2x32xf32>,
    %c4_i32 = arith.constant 4 : i32
    %c0_150 = arith.constant 0 : index
    %c0_151 = arith.constant 0 : index
    %c0_152 = arith.constant 0 : index
    %390 = vector.load %arg4[%c0_150, %c0_151, %c0_152] : memref<3x32x96xf32, #tpu.memory_space<vmem>>, vector<1x32x96xf32>
    %391 = vector.shape_cast %390 : vector<1x32x96xf32> to vector<32x96xf32>
    %cst_153 = arith.constant dense<0.000000e+00> : vector<2x96xf32>
    %392 = tpu.matmul %329, %391, %cst_153 {dimension_numbers = #tpu.dot_dimension_numbers<[1], [0], [0], [1], [0, 0, 1, 1], [], []>} : vector<2x32xf32>, vector<32x96xf32>, vector<2x96xf32> -> vector<2x96xf32>
    %c1_154 = arith.constant 1 : index
    %c0_155 = arith.constant 0 : index
    %c0_156 = arith.constant 0 : index
    %393 = vector.load %arg4[%c1_154, %c0_155, %c0_156] : memref<3x32x96xf32, #tpu.memory_space<vmem>>, vector<1x32x96xf32>
    %394 = vector.shape_cast %393 : vector<1x32x96xf32> to vector<32x96xf32>
    %cst_157 = arith.constant dense<0.000000e+00> : vector<2x96xf32>
    %395 = tpu.matmul %357, %394, %cst_157 {dimension_numbers = #tpu.dot_dimension_numbers<[1], [0], [0], [1], [0, 0, 1, 1], [], []>} : vector<2x32xf32>, vector<32x96xf32>, vector<2x96xf32> -> vector<2x96xf32>
    %c2_158 = arith.constant 2 : index
    %c0_159 = arith.constant 0 : index
    %c0_160 = arith.constant 0 : index
    %396 = vector.load %arg4[%c2_158, %c0_159, %c0_160] : memref<3x32x96xf32, #tpu.memory_space<vmem>>, vector<1x32x96xf32>
    %397 = vector.shape_cast %396 : vector<1x32x96xf32> to vector<32x96xf32>
    %cst_161 = arith.constant dense<0.000000e+00> : vector<2x96xf32>
    %398 = tpu.matmul %385, %397, %cst_161 {dimension_numbers = #tpu.dot_dimension_numbers<[1], [0], [0], [1], [0, 0, 1, 1], [], []>} : vector<2x32xf32>, vector<32x96xf32>, vector<2x96xf32> -> vector<2x96xf32>
    %399 = arith.index_cast %c4_i32 : i32 to index
    %c0_162 = arith.constant 0 : index
    %c0_163 = arith.constant 0 : index
    %400 = vector.load %arg0[%399, %c0_162, %c0_163] : memref<8x2x96xf32, #tpu.memory_space<vmem>>, vector<1x2x96xf32>
    %401 = vector.shape_cast %400 : vector<1x2x96xf32> to vector<2x96xf32>
    %402 = vector.extract_strided_slice %401 {offsets = [0, 0], sizes = [2, 64], strides = [1, 1]} : vector<2x96xf32> to vector<2x64xf32>
    %403 = vector.extract_strided_slice %392 {offsets = [0, 0], sizes = [2, 64], strides = [1, 1]} : vector<2x96xf32> to vector<2x64xf32>
    %404 = arith.addf %402, %403 : vector<2x64xf32>
    %405 = arith.negf %404 : vector<2x64xf32>
    %406 = math.exp %405 : vector<2x64xf32>
    %cst_164 = arith.constant 1.000000e+00 : f32
    %407 = vector.broadcast %cst_164 : f32 to vector<2x64xf32>
    %408 = arith.addf %407, %406 : vector<2x64xf32>
    %409 = arith.divf %407, %408 : vector<2x64xf32>
    %410 = vector.extract_strided_slice %409 {offsets = [0, 0], sizes = [2, 32], strides = [1, 1]} : vector<2x64xf32> to vector<2x32xf32>
    %411 = vector.extract_strided_slice %409 {offsets = [0, 32], sizes = [2, 32], strides = [1, 1]} : vector<2x64xf32> to vector<2x32xf32>
    %412 = vector.extract_strided_slice %401 {offsets = [0, 64], sizes = [2, 32], strides = [1, 1]} : vector<2x96xf32> to vector<2x32xf32>
    %413 = vector.extract_strided_slice %392 {offsets = [0, 64], sizes = [2, 32], strides = [1, 1]} : vector<2x96xf32> to vector<2x32xf32>
    %414 = arith.addf %413, %3 : vector<2x32xf32>
    %415 = arith.mulf %410, %414 : vector<2x32xf32>
    %416 = arith.addf %412, %415 : vector<2x32xf32>
    %417 = math.tanh %416 : vector<2x32xf32>
    %cst_165 = arith.constant 1.000000e+00 : f32
    %418 = vector.broadcast %cst_165 : f32 to vector<2x32xf32>
    %419 = arith.subf %418, %411 : vector<2x32xf32>
    %420 = arith.mulf %419, %417 : vector<2x32xf32>
    %421 = arith.mulf %411, %329 : vector<2x32xf32>
    %422 = arith.addf %420, %421 : vector<2x32xf32>
    %423 = arith.index_cast %c4_i32 : i32 to index
    %c0_166 = arith.constant 0 : index
    %c0_167 = arith.constant 0 : index
    %424 = vector.load %arg1[%423, %c0_166, %c0_167] : memref<8x2x96xf32, #tpu.memory_space<vmem>>, vector<1x2x96xf32>
    %425 = vector.shape_cast %424 : vector<1x2x96xf32> to vector<2x96xf32>
    %c0_168 = arith.constant 0 : index
    %c0_169 = arith.constant 0 : index
    %c0_170 = arith.constant 0 : index
    %426 = vector.load %arg5[%c0_168, %c0_169, %c0_170] : memref<2x32x96xf32, #tpu.memory_space<vmem>>, vector<1x32x96xf32>
    %427 = vector.shape_cast %426 : vector<1x32x96xf32> to vector<32x96xf32>
    %cst_171 = arith.constant dense<0.000000e+00> : vector<2x96xf32>
    %428 = tpu.matmul %422, %427, %cst_171 {dimension_numbers = #tpu.dot_dimension_numbers<[1], [0], [0], [1], [0, 0, 1, 1], [], []>} : vector<2x32xf32>, vector<32x96xf32>, vector<2x96xf32> -> vector<2x96xf32>
    %429 = arith.addf %425, %428 : vector<2x96xf32>
    %430 = vector.extract_strided_slice %429 {offsets = [0, 0], sizes = [2, 64], strides = [1, 1]} : vector<2x96xf32> to vector<2x64xf32>
    %431 = vector.extract_strided_slice %395 {offsets = [0, 0], sizes = [2, 64], strides = [1, 1]} : vector<2x96xf32> to vector<2x64xf32>
    %432 = arith.addf %430, %431 : vector<2x64xf32>
    %433 = arith.negf %432 : vector<2x64xf32>
    %434 = math.exp %433 : vector<2x64xf32>
    %cst_172 = arith.constant 1.000000e+00 : f32
    %435 = vector.broadcast %cst_172 : f32 to vector<2x64xf32>
    %436 = arith.addf %435, %434 : vector<2x64xf32>
    %437 = arith.divf %435, %436 : vector<2x64xf32>
    %438 = vector.extract_strided_slice %437 {offsets = [0, 0], sizes = [2, 32], strides = [1, 1]} : vector<2x64xf32> to vector<2x32xf32>
    %439 = vector.extract_strided_slice %437 {offsets = [0, 32], sizes = [2, 32], strides = [1, 1]} : vector<2x64xf32> to vector<2x32xf32>
    %440 = vector.extract_strided_slice %429 {offsets = [0, 64], sizes = [2, 32], strides = [1, 1]} : vector<2x96xf32> to vector<2x32xf32>
    %441 = vector.extract_strided_slice %395 {offsets = [0, 64], sizes = [2, 32], strides = [1, 1]} : vector<2x96xf32> to vector<2x32xf32>
    %442 = arith.addf %441, %7 : vector<2x32xf32>
    %443 = arith.mulf %438, %442 : vector<2x32xf32>
    %444 = arith.addf %440, %443 : vector<2x32xf32>
    %445 = math.tanh %444 : vector<2x32xf32>
    %cst_173 = arith.constant 1.000000e+00 : f32
    %446 = vector.broadcast %cst_173 : f32 to vector<2x32xf32>
    %447 = arith.subf %446, %439 : vector<2x32xf32>
    %448 = arith.mulf %447, %445 : vector<2x32xf32>
    %449 = arith.mulf %439, %357 : vector<2x32xf32>
    %450 = arith.addf %448, %449 : vector<2x32xf32>
    %451 = arith.index_cast %c4_i32 : i32 to index
    %c0_174 = arith.constant 0 : index
    %c0_175 = arith.constant 0 : index
    %452 = vector.load %arg2[%451, %c0_174, %c0_175] : memref<8x2x96xf32, #tpu.memory_space<vmem>>, vector<1x2x96xf32>
    %453 = vector.shape_cast %452 : vector<1x2x96xf32> to vector<2x96xf32>
    %c1_176 = arith.constant 1 : index
    %c0_177 = arith.constant 0 : index
    %c0_178 = arith.constant 0 : index
    %454 = vector.load %arg5[%c1_176, %c0_177, %c0_178] : memref<2x32x96xf32, #tpu.memory_space<vmem>>, vector<1x32x96xf32>
    %455 = vector.shape_cast %454 : vector<1x32x96xf32> to vector<32x96xf32>
    %cst_179 = arith.constant dense<0.000000e+00> : vector<2x96xf32>
    %456 = tpu.matmul %450, %455, %cst_179 {dimension_numbers = #tpu.dot_dimension_numbers<[1], [0], [0], [1], [0, 0, 1, 1], [], []>} : vector<2x32xf32>, vector<32x96xf32>, vector<2x96xf32> -> vector<2x96xf32>
    %457 = arith.addf %453, %456 : vector<2x96xf32>
    %458 = vector.extract_strided_slice %457 {offsets = [0, 0], sizes = [2, 64], strides = [1, 1]} : vector<2x96xf32> to vector<2x64xf32>
    %459 = vector.extract_strided_slice %398 {offsets = [0, 0], sizes = [2, 64], strides = [1, 1]} : vector<2x96xf32> to vector<2x64xf32>
    %460 = arith.addf %458, %459 : vector<2x64xf32>
    %461 = arith.negf %460 : vector<2x64xf32>
    %462 = math.exp %461 : vector<2x64xf32>
    %cst_180 = arith.constant 1.000000e+00 : f32
    %463 = vector.broadcast %cst_180 : f32 to vector<2x64xf32>
    %464 = arith.addf %463, %462 : vector<2x64xf32>
    %465 = arith.divf %463, %464 : vector<2x64xf32>
    %466 = vector.extract_strided_slice %465 {offsets = [0, 0], sizes = [2, 32], strides = [1, 1]} : vector<2x64xf32> to vector<2x32xf32>
    %467 = vector.extract_strided_slice %465 {offsets = [0, 32], sizes = [2, 32], strides = [1, 1]} : vector<2x64xf32> to vector<2x32xf32>
    %468 = vector.extract_strided_slice %457 {offsets = [0, 64], sizes = [2, 32], strides = [1, 1]} : vector<2x96xf32> to vector<2x32xf32>
    %469 = vector.extract_strided_slice %398 {offsets = [0, 64], sizes = [2, 32], strides = [1, 1]} : vector<2x96xf32> to vector<2x32xf32>
    %470 = arith.addf %469, %11 : vector<2x32xf32>
    %471 = arith.mulf %466, %470 : vector<2x32xf32>
    %472 = arith.addf %468, %471 : vector<2x32xf32>
    %473 = math.tanh %472 : vector<2x32xf32>
    %cst_181 = arith.constant 1.000000e+00 : f32
    %474 = vector.broadcast %cst_181 : f32 to vector<2x32xf32>
    %475 = arith.subf %474, %467 : vector<2x32xf32>
    %476 = arith.mulf %475, %473 : vector<2x32xf32>
    %477 = arith.mulf %467, %385 : vector<2x32xf32>
    %478 = arith.addf %476, %477 : vector<2x32xf32>
    %479 = arith.index_cast %c4_i32 : i32 to index
    %c0_182 = arith.constant 0 : index
    %c0_183 = arith.constant 0 : index
    %480 = vector.load %arg7[%479, %c0_182, %c0_183] : memref<8x2x32xf32, #tpu.memory_space<vmem>>, vector<1x2x32xf32>
    %481 = vector.shape_cast %480 : vector<1x2x32xf32> to vector<2x32xf32>
    %482 = vector.shape_cast %478 : vector<2x32xf32> to vector<1x2x32xf32>
    tpu.vector_store %arg7[%479, %c0_182, %c0_183], %482 {strides = array<i32>} : memref<8x2x32xf32, #tpu.memory_space<vmem>>, vector<1x2x32xf32>,
    %c5_i32 = arith.constant 5 : i32
    %c0_184 = arith.constant 0 : index
    %c0_185 = arith.constant 0 : index
    %c0_186 = arith.constant 0 : index
    %483 = vector.load %arg4[%c0_184, %c0_185, %c0_186] : memref<3x32x96xf32, #tpu.memory_space<vmem>>, vector<1x32x96xf32>
    %484 = vector.shape_cast %483 : vector<1x32x96xf32> to vector<32x96xf32>
    %cst_187 = arith.constant dense<0.000000e+00> : vector<2x96xf32>
    %485 = tpu.matmul %422, %484, %cst_187 {dimension_numbers = #tpu.dot_dimension_numbers<[1], [0], [0], [1], [0, 0, 1, 1], [], []>} : vector<2x32xf32>, vector<32x96xf32>, vector<2x96xf32> -> vector<2x96xf32>
    %c1_188 = arith.constant 1 : index
    %c0_189 = arith.constant 0 : index
    %c0_190 = arith.constant 0 : index
    %486 = vector.load %arg4[%c1_188, %c0_189, %c0_190] : memref<3x32x96xf32, #tpu.memory_space<vmem>>, vector<1x32x96xf32>
    %487 = vector.shape_cast %486 : vector<1x32x96xf32> to vector<32x96xf32>
    %cst_191 = arith.constant dense<0.000000e+00> : vector<2x96xf32>
    %488 = tpu.matmul %450, %487, %cst_191 {dimension_numbers = #tpu.dot_dimension_numbers<[1], [0], [0], [1], [0, 0, 1, 1], [], []>} : vector<2x32xf32>, vector<32x96xf32>, vector<2x96xf32> -> vector<2x96xf32>
    %c2_192 = arith.constant 2 : index
    %c0_193 = arith.constant 0 : index
    %c0_194 = arith.constant 0 : index
    %489 = vector.load %arg4[%c2_192, %c0_193, %c0_194] : memref<3x32x96xf32, #tpu.memory_space<vmem>>, vector<1x32x96xf32>
    %490 = vector.shape_cast %489 : vector<1x32x96xf32> to vector<32x96xf32>
    %cst_195 = arith.constant dense<0.000000e+00> : vector<2x96xf32>
    %491 = tpu.matmul %478, %490, %cst_195 {dimension_numbers = #tpu.dot_dimension_numbers<[1], [0], [0], [1], [0, 0, 1, 1], [], []>} : vector<2x32xf32>, vector<32x96xf32>, vector<2x96xf32> -> vector<2x96xf32>
    %492 = arith.index_cast %c5_i32 : i32 to index
    %c0_196 = arith.constant 0 : index
    %c0_197 = arith.constant 0 : index
    %493 = vector.load %arg0[%492, %c0_196, %c0_197] : memref<8x2x96xf32, #tpu.memory_space<vmem>>, vector<1x2x96xf32>
    %494 = vector.shape_cast %493 : vector<1x2x96xf32> to vector<2x96xf32>
    %495 = vector.extract_strided_slice %494 {offsets = [0, 0], sizes = [2, 64], strides = [1, 1]} : vector<2x96xf32> to vector<2x64xf32>
    %496 = vector.extract_strided_slice %485 {offsets = [0, 0], sizes = [2, 64], strides = [1, 1]} : vector<2x96xf32> to vector<2x64xf32>
    %497 = arith.addf %495, %496 : vector<2x64xf32>
    %498 = arith.negf %497 : vector<2x64xf32>
    %499 = math.exp %498 : vector<2x64xf32>
    %cst_198 = arith.constant 1.000000e+00 : f32
    %500 = vector.broadcast %cst_198 : f32 to vector<2x64xf32>
    %501 = arith.addf %500, %499 : vector<2x64xf32>
    %502 = arith.divf %500, %501 : vector<2x64xf32>
    %503 = vector.extract_strided_slice %502 {offsets = [0, 0], sizes = [2, 32], strides = [1, 1]} : vector<2x64xf32> to vector<2x32xf32>
    %504 = vector.extract_strided_slice %502 {offsets = [0, 32], sizes = [2, 32], strides = [1, 1]} : vector<2x64xf32> to vector<2x32xf32>
    %505 = vector.extract_strided_slice %494 {offsets = [0, 64], sizes = [2, 32], strides = [1, 1]} : vector<2x96xf32> to vector<2x32xf32>
    %506 = vector.extract_strided_slice %485 {offsets = [0, 64], sizes = [2, 32], strides = [1, 1]} : vector<2x96xf32> to vector<2x32xf32>
    %507 = arith.addf %506, %3 : vector<2x32xf32>
    %508 = arith.mulf %503, %507 : vector<2x32xf32>
    %509 = arith.addf %505, %508 : vector<2x32xf32>
    %510 = math.tanh %509 : vector<2x32xf32>
    %cst_199 = arith.constant 1.000000e+00 : f32
    %511 = vector.broadcast %cst_199 : f32 to vector<2x32xf32>
    %512 = arith.subf %511, %504 : vector<2x32xf32>
    %513 = arith.mulf %512, %510 : vector<2x32xf32>
    %514 = arith.mulf %504, %422 : vector<2x32xf32>
    %515 = arith.addf %513, %514 : vector<2x32xf32>
    %516 = arith.index_cast %c5_i32 : i32 to index
    %c0_200 = arith.constant 0 : index
    %c0_201 = arith.constant 0 : index
    %517 = vector.load %arg1[%516, %c0_200, %c0_201] : memref<8x2x96xf32, #tpu.memory_space<vmem>>, vector<1x2x96xf32>
    %518 = vector.shape_cast %517 : vector<1x2x96xf32> to vector<2x96xf32>
    %c0_202 = arith.constant 0 : index
    %c0_203 = arith.constant 0 : index
    %c0_204 = arith.constant 0 : index
    %519 = vector.load %arg5[%c0_202, %c0_203, %c0_204] : memref<2x32x96xf32, #tpu.memory_space<vmem>>, vector<1x32x96xf32>
    %520 = vector.shape_cast %519 : vector<1x32x96xf32> to vector<32x96xf32>
    %cst_205 = arith.constant dense<0.000000e+00> : vector<2x96xf32>
    %521 = tpu.matmul %515, %520, %cst_205 {dimension_numbers = #tpu.dot_dimension_numbers<[1], [0], [0], [1], [0, 0, 1, 1], [], []>} : vector<2x32xf32>, vector<32x96xf32>, vector<2x96xf32> -> vector<2x96xf32>
    %522 = arith.addf %518, %521 : vector<2x96xf32>
    %523 = vector.extract_strided_slice %522 {offsets = [0, 0], sizes = [2, 64], strides = [1, 1]} : vector<2x96xf32> to vector<2x64xf32>
    %524 = vector.extract_strided_slice %488 {offsets = [0, 0], sizes = [2, 64], strides = [1, 1]} : vector<2x96xf32> to vector<2x64xf32>
    %525 = arith.addf %523, %524 : vector<2x64xf32>
    %526 = arith.negf %525 : vector<2x64xf32>
    %527 = math.exp %526 : vector<2x64xf32>
    %cst_206 = arith.constant 1.000000e+00 : f32
    %528 = vector.broadcast %cst_206 : f32 to vector<2x64xf32>
    %529 = arith.addf %528, %527 : vector<2x64xf32>
    %530 = arith.divf %528, %529 : vector<2x64xf32>
    %531 = vector.extract_strided_slice %530 {offsets = [0, 0], sizes = [2, 32], strides = [1, 1]} : vector<2x64xf32> to vector<2x32xf32>
    %532 = vector.extract_strided_slice %530 {offsets = [0, 32], sizes = [2, 32], strides = [1, 1]} : vector<2x64xf32> to vector<2x32xf32>
    %533 = vector.extract_strided_slice %522 {offsets = [0, 64], sizes = [2, 32], strides = [1, 1]} : vector<2x96xf32> to vector<2x32xf32>
    %534 = vector.extract_strided_slice %488 {offsets = [0, 64], sizes = [2, 32], strides = [1, 1]} : vector<2x96xf32> to vector<2x32xf32>
    %535 = arith.addf %534, %7 : vector<2x32xf32>
    %536 = arith.mulf %531, %535 : vector<2x32xf32>
    %537 = arith.addf %533, %536 : vector<2x32xf32>
    %538 = math.tanh %537 : vector<2x32xf32>
    %cst_207 = arith.constant 1.000000e+00 : f32
    %539 = vector.broadcast %cst_207 : f32 to vector<2x32xf32>
    %540 = arith.subf %539, %532 : vector<2x32xf32>
    %541 = arith.mulf %540, %538 : vector<2x32xf32>
    %542 = arith.mulf %532, %450 : vector<2x32xf32>
    %543 = arith.addf %541, %542 : vector<2x32xf32>
    %544 = arith.index_cast %c5_i32 : i32 to index
    %c0_208 = arith.constant 0 : index
    %c0_209 = arith.constant 0 : index
    %545 = vector.load %arg2[%544, %c0_208, %c0_209] : memref<8x2x96xf32, #tpu.memory_space<vmem>>, vector<1x2x96xf32>
    %546 = vector.shape_cast %545 : vector<1x2x96xf32> to vector<2x96xf32>
    %c1_210 = arith.constant 1 : index
    %c0_211 = arith.constant 0 : index
    %c0_212 = arith.constant 0 : index
    %547 = vector.load %arg5[%c1_210, %c0_211, %c0_212] : memref<2x32x96xf32, #tpu.memory_space<vmem>>, vector<1x32x96xf32>
    %548 = vector.shape_cast %547 : vector<1x32x96xf32> to vector<32x96xf32>
    %cst_213 = arith.constant dense<0.000000e+00> : vector<2x96xf32>
    %549 = tpu.matmul %543, %548, %cst_213 {dimension_numbers = #tpu.dot_dimension_numbers<[1], [0], [0], [1], [0, 0, 1, 1], [], []>} : vector<2x32xf32>, vector<32x96xf32>, vector<2x96xf32> -> vector<2x96xf32>
    %550 = arith.addf %546, %549 : vector<2x96xf32>
    %551 = vector.extract_strided_slice %550 {offsets = [0, 0], sizes = [2, 64], strides = [1, 1]} : vector<2x96xf32> to vector<2x64xf32>
    %552 = vector.extract_strided_slice %491 {offsets = [0, 0], sizes = [2, 64], strides = [1, 1]} : vector<2x96xf32> to vector<2x64xf32>
    %553 = arith.addf %551, %552 : vector<2x64xf32>
    %554 = arith.negf %553 : vector<2x64xf32>
    %555 = math.exp %554 : vector<2x64xf32>
    %cst_214 = arith.constant 1.000000e+00 : f32
    %556 = vector.broadcast %cst_214 : f32 to vector<2x64xf32>
    %557 = arith.addf %556, %555 : vector<2x64xf32>
    %558 = arith.divf %556, %557 : vector<2x64xf32>
    %559 = vector.extract_strided_slice %558 {offsets = [0, 0], sizes = [2, 32], strides = [1, 1]} : vector<2x64xf32> to vector<2x32xf32>
    %560 = vector.extract_strided_slice %558 {offsets = [0, 32], sizes = [2, 32], strides = [1, 1]} : vector<2x64xf32> to vector<2x32xf32>
    %561 = vector.extract_strided_slice %550 {offsets = [0, 64], sizes = [2, 32], strides = [1, 1]} : vector<2x96xf32> to vector<2x32xf32>
    %562 = vector.extract_strided_slice %491 {offsets = [0, 64], sizes = [2, 32], strides = [1, 1]} : vector<2x96xf32> to vector<2x32xf32>
    %563 = arith.addf %562, %11 : vector<2x32xf32>
    %564 = arith.mulf %559, %563 : vector<2x32xf32>
    %565 = arith.addf %561, %564 : vector<2x32xf32>
    %566 = math.tanh %565 : vector<2x32xf32>
    %cst_215 = arith.constant 1.000000e+00 : f32
    %567 = vector.broadcast %cst_215 : f32 to vector<2x32xf32>
    %568 = arith.subf %567, %560 : vector<2x32xf32>
    %569 = arith.mulf %568, %566 : vector<2x32xf32>
    %570 = arith.mulf %560, %478 : vector<2x32xf32>
    %571 = arith.addf %569, %570 : vector<2x32xf32>
    %572 = arith.index_cast %c5_i32 : i32 to index
    %c0_216 = arith.constant 0 : index
    %c0_217 = arith.constant 0 : index
    %573 = vector.load %arg7[%572, %c0_216, %c0_217] : memref<8x2x32xf32, #tpu.memory_space<vmem>>, vector<1x2x32xf32>
    %574 = vector.shape_cast %573 : vector<1x2x32xf32> to vector<2x32xf32>
    %575 = vector.shape_cast %571 : vector<2x32xf32> to vector<1x2x32xf32>
    tpu.vector_store %arg7[%572, %c0_216, %c0_217], %575 {strides = array<i32>} : memref<8x2x32xf32, #tpu.memory_space<vmem>>, vector<1x2x32xf32>,
    %c6_i32 = arith.constant 6 : i32
    %c0_218 = arith.constant 0 : index
    %c0_219 = arith.constant 0 : index
    %c0_220 = arith.constant 0 : index
    %576 = vector.load %arg4[%c0_218, %c0_219, %c0_220] : memref<3x32x96xf32, #tpu.memory_space<vmem>>, vector<1x32x96xf32>
    %577 = vector.shape_cast %576 : vector<1x32x96xf32> to vector<32x96xf32>
    %cst_221 = arith.constant dense<0.000000e+00> : vector<2x96xf32>
    %578 = tpu.matmul %515, %577, %cst_221 {dimension_numbers = #tpu.dot_dimension_numbers<[1], [0], [0], [1], [0, 0, 1, 1], [], []>} : vector<2x32xf32>, vector<32x96xf32>, vector<2x96xf32> -> vector<2x96xf32>
    %c1_222 = arith.constant 1 : index
    %c0_223 = arith.constant 0 : index
    %c0_224 = arith.constant 0 : index
    %579 = vector.load %arg4[%c1_222, %c0_223, %c0_224] : memref<3x32x96xf32, #tpu.memory_space<vmem>>, vector<1x32x96xf32>
    %580 = vector.shape_cast %579 : vector<1x32x96xf32> to vector<32x96xf32>
    %cst_225 = arith.constant dense<0.000000e+00> : vector<2x96xf32>
    %581 = tpu.matmul %543, %580, %cst_225 {dimension_numbers = #tpu.dot_dimension_numbers<[1], [0], [0], [1], [0, 0, 1, 1], [], []>} : vector<2x32xf32>, vector<32x96xf32>, vector<2x96xf32> -> vector<2x96xf32>
    %c2_226 = arith.constant 2 : index
    %c0_227 = arith.constant 0 : index
    %c0_228 = arith.constant 0 : index
    %582 = vector.load %arg4[%c2_226, %c0_227, %c0_228] : memref<3x32x96xf32, #tpu.memory_space<vmem>>, vector<1x32x96xf32>
    %583 = vector.shape_cast %582 : vector<1x32x96xf32> to vector<32x96xf32>
    %cst_229 = arith.constant dense<0.000000e+00> : vector<2x96xf32>
    %584 = tpu.matmul %571, %583, %cst_229 {dimension_numbers = #tpu.dot_dimension_numbers<[1], [0], [0], [1], [0, 0, 1, 1], [], []>} : vector<2x32xf32>, vector<32x96xf32>, vector<2x96xf32> -> vector<2x96xf32>
    %585 = arith.index_cast %c6_i32 : i32 to index
    %c0_230 = arith.constant 0 : index
    %c0_231 = arith.constant 0 : index
    %586 = vector.load %arg0[%585, %c0_230, %c0_231] : memref<8x2x96xf32, #tpu.memory_space<vmem>>, vector<1x2x96xf32>
    %587 = vector.shape_cast %586 : vector<1x2x96xf32> to vector<2x96xf32>
    %588 = vector.extract_strided_slice %587 {offsets = [0, 0], sizes = [2, 64], strides = [1, 1]} : vector<2x96xf32> to vector<2x64xf32>
    %589 = vector.extract_strided_slice %578 {offsets = [0, 0], sizes = [2, 64], strides = [1, 1]} : vector<2x96xf32> to vector<2x64xf32>
    %590 = arith.addf %588, %589 : vector<2x64xf32>
    %591 = arith.negf %590 : vector<2x64xf32>
    %592 = math.exp %591 : vector<2x64xf32>
    %cst_232 = arith.constant 1.000000e+00 : f32
    %593 = vector.broadcast %cst_232 : f32 to vector<2x64xf32>
    %594 = arith.addf %593, %592 : vector<2x64xf32>
    %595 = arith.divf %593, %594 : vector<2x64xf32>
    %596 = vector.extract_strided_slice %595 {offsets = [0, 0], sizes = [2, 32], strides = [1, 1]} : vector<2x64xf32> to vector<2x32xf32>
    %597 = vector.extract_strided_slice %595 {offsets = [0, 32], sizes = [2, 32], strides = [1, 1]} : vector<2x64xf32> to vector<2x32xf32>
    %598 = vector.extract_strided_slice %587 {offsets = [0, 64], sizes = [2, 32], strides = [1, 1]} : vector<2x96xf32> to vector<2x32xf32>
    %599 = vector.extract_strided_slice %578 {offsets = [0, 64], sizes = [2, 32], strides = [1, 1]} : vector<2x96xf32> to vector<2x32xf32>
    %600 = arith.addf %599, %3 : vector<2x32xf32>
    %601 = arith.mulf %596, %600 : vector<2x32xf32>
    %602 = arith.addf %598, %601 : vector<2x32xf32>
    %603 = math.tanh %602 : vector<2x32xf32>
    %cst_233 = arith.constant 1.000000e+00 : f32
    %604 = vector.broadcast %cst_233 : f32 to vector<2x32xf32>
    %605 = arith.subf %604, %597 : vector<2x32xf32>
    %606 = arith.mulf %605, %603 : vector<2x32xf32>
    %607 = arith.mulf %597, %515 : vector<2x32xf32>
    %608 = arith.addf %606, %607 : vector<2x32xf32>
    %609 = arith.index_cast %c6_i32 : i32 to index
    %c0_234 = arith.constant 0 : index
    %c0_235 = arith.constant 0 : index
    %610 = vector.load %arg1[%609, %c0_234, %c0_235] : memref<8x2x96xf32, #tpu.memory_space<vmem>>, vector<1x2x96xf32>
    %611 = vector.shape_cast %610 : vector<1x2x96xf32> to vector<2x96xf32>
    %c0_236 = arith.constant 0 : index
    %c0_237 = arith.constant 0 : index
    %c0_238 = arith.constant 0 : index
    %612 = vector.load %arg5[%c0_236, %c0_237, %c0_238] : memref<2x32x96xf32, #tpu.memory_space<vmem>>, vector<1x32x96xf32>
    %613 = vector.shape_cast %612 : vector<1x32x96xf32> to vector<32x96xf32>
    %cst_239 = arith.constant dense<0.000000e+00> : vector<2x96xf32>
    %614 = tpu.matmul %608, %613, %cst_239 {dimension_numbers = #tpu.dot_dimension_numbers<[1], [0], [0], [1], [0, 0, 1, 1], [], []>} : vector<2x32xf32>, vector<32x96xf32>, vector<2x96xf32> -> vector<2x96xf32>
    %615 = arith.addf %611, %614 : vector<2x96xf32>
    %616 = vector.extract_strided_slice %615 {offsets = [0, 0], sizes = [2, 64], strides = [1, 1]} : vector<2x96xf32> to vector<2x64xf32>
    %617 = vector.extract_strided_slice %581 {offsets = [0, 0], sizes = [2, 64], strides = [1, 1]} : vector<2x96xf32> to vector<2x64xf32>
    %618 = arith.addf %616, %617 : vector<2x64xf32>
    %619 = arith.negf %618 : vector<2x64xf32>
    %620 = math.exp %619 : vector<2x64xf32>
    %cst_240 = arith.constant 1.000000e+00 : f32
    %621 = vector.broadcast %cst_240 : f32 to vector<2x64xf32>
    %622 = arith.addf %621, %620 : vector<2x64xf32>
    %623 = arith.divf %621, %622 : vector<2x64xf32>
    %624 = vector.extract_strided_slice %623 {offsets = [0, 0], sizes = [2, 32], strides = [1, 1]} : vector<2x64xf32> to vector<2x32xf32>
    %625 = vector.extract_strided_slice %623 {offsets = [0, 32], sizes = [2, 32], strides = [1, 1]} : vector<2x64xf32> to vector<2x32xf32>
    %626 = vector.extract_strided_slice %615 {offsets = [0, 64], sizes = [2, 32], strides = [1, 1]} : vector<2x96xf32> to vector<2x32xf32>
    %627 = vector.extract_strided_slice %581 {offsets = [0, 64], sizes = [2, 32], strides = [1, 1]} : vector<2x96xf32> to vector<2x32xf32>
    %628 = arith.addf %627, %7 : vector<2x32xf32>
    %629 = arith.mulf %624, %628 : vector<2x32xf32>
    %630 = arith.addf %626, %629 : vector<2x32xf32>
    %631 = math.tanh %630 : vector<2x32xf32>
    %cst_241 = arith.constant 1.000000e+00 : f32
    %632 = vector.broadcast %cst_241 : f32 to vector<2x32xf32>
    %633 = arith.subf %632, %625 : vector<2x32xf32>
    %634 = arith.mulf %633, %631 : vector<2x32xf32>
    %635 = arith.mulf %625, %543 : vector<2x32xf32>
    %636 = arith.addf %634, %635 : vector<2x32xf32>
    %637 = arith.index_cast %c6_i32 : i32 to index
    %c0_242 = arith.constant 0 : index
    %c0_243 = arith.constant 0 : index
    %638 = vector.load %arg2[%637, %c0_242, %c0_243] : memref<8x2x96xf32, #tpu.memory_space<vmem>>, vector<1x2x96xf32>
    %639 = vector.shape_cast %638 : vector<1x2x96xf32> to vector<2x96xf32>
    %c1_244 = arith.constant 1 : index
    %c0_245 = arith.constant 0 : index
    %c0_246 = arith.constant 0 : index
    %640 = vector.load %arg5[%c1_244, %c0_245, %c0_246] : memref<2x32x96xf32, #tpu.memory_space<vmem>>, vector<1x32x96xf32>
    %641 = vector.shape_cast %640 : vector<1x32x96xf32> to vector<32x96xf32>
    %cst_247 = arith.constant dense<0.000000e+00> : vector<2x96xf32>
    %642 = tpu.matmul %636, %641, %cst_247 {dimension_numbers = #tpu.dot_dimension_numbers<[1], [0], [0], [1], [0, 0, 1, 1], [], []>} : vector<2x32xf32>, vector<32x96xf32>, vector<2x96xf32> -> vector<2x96xf32>
    %643 = arith.addf %639, %642 : vector<2x96xf32>
    %644 = vector.extract_strided_slice %643 {offsets = [0, 0], sizes = [2, 64], strides = [1, 1]} : vector<2x96xf32> to vector<2x64xf32>
    %645 = vector.extract_strided_slice %584 {offsets = [0, 0], sizes = [2, 64], strides = [1, 1]} : vector<2x96xf32> to vector<2x64xf32>
    %646 = arith.addf %644, %645 : vector<2x64xf32>
    %647 = arith.negf %646 : vector<2x64xf32>
    %648 = math.exp %647 : vector<2x64xf32>
    %cst_248 = arith.constant 1.000000e+00 : f32
    %649 = vector.broadcast %cst_248 : f32 to vector<2x64xf32>
    %650 = arith.addf %649, %648 : vector<2x64xf32>
    %651 = arith.divf %649, %650 : vector<2x64xf32>
    %652 = vector.extract_strided_slice %651 {offsets = [0, 0], sizes = [2, 32], strides = [1, 1]} : vector<2x64xf32> to vector<2x32xf32>
    %653 = vector.extract_strided_slice %651 {offsets = [0, 32], sizes = [2, 32], strides = [1, 1]} : vector<2x64xf32> to vector<2x32xf32>
    %654 = vector.extract_strided_slice %643 {offsets = [0, 64], sizes = [2, 32], strides = [1, 1]} : vector<2x96xf32> to vector<2x32xf32>
    %655 = vector.extract_strided_slice %584 {offsets = [0, 64], sizes = [2, 32], strides = [1, 1]} : vector<2x96xf32> to vector<2x32xf32>
    %656 = arith.addf %655, %11 : vector<2x32xf32>
    %657 = arith.mulf %652, %656 : vector<2x32xf32>
    %658 = arith.addf %654, %657 : vector<2x32xf32>
    %659 = math.tanh %658 : vector<2x32xf32>
    %cst_249 = arith.constant 1.000000e+00 : f32
    %660 = vector.broadcast %cst_249 : f32 to vector<2x32xf32>
    %661 = arith.subf %660, %653 : vector<2x32xf32>
    %662 = arith.mulf %661, %659 : vector<2x32xf32>
    %663 = arith.mulf %653, %571 : vector<2x32xf32>
    %664 = arith.addf %662, %663 : vector<2x32xf32>
    %665 = arith.index_cast %c6_i32 : i32 to index
    %c0_250 = arith.constant 0 : index
    %c0_251 = arith.constant 0 : index
    %666 = vector.load %arg7[%665, %c0_250, %c0_251] : memref<8x2x32xf32, #tpu.memory_space<vmem>>, vector<1x2x32xf32>
    %667 = vector.shape_cast %666 : vector<1x2x32xf32> to vector<2x32xf32>
    %668 = vector.shape_cast %664 : vector<2x32xf32> to vector<1x2x32xf32>
    tpu.vector_store %arg7[%665, %c0_250, %c0_251], %668 {strides = array<i32>} : memref<8x2x32xf32, #tpu.memory_space<vmem>>, vector<1x2x32xf32>,
    %c7_i32 = arith.constant 7 : i32
    %c0_252 = arith.constant 0 : index
    %c0_253 = arith.constant 0 : index
    %c0_254 = arith.constant 0 : index
    %669 = vector.load %arg4[%c0_252, %c0_253, %c0_254] : memref<3x32x96xf32, #tpu.memory_space<vmem>>, vector<1x32x96xf32>
    %670 = vector.shape_cast %669 : vector<1x32x96xf32> to vector<32x96xf32>
    %cst_255 = arith.constant dense<0.000000e+00> : vector<2x96xf32>
    %671 = tpu.matmul %608, %670, %cst_255 {dimension_numbers = #tpu.dot_dimension_numbers<[1], [0], [0], [1], [0, 0, 1, 1], [], []>} : vector<2x32xf32>, vector<32x96xf32>, vector<2x96xf32> -> vector<2x96xf32>
    %c1_256 = arith.constant 1 : index
    %c0_257 = arith.constant 0 : index
    %c0_258 = arith.constant 0 : index
    %672 = vector.load %arg4[%c1_256, %c0_257, %c0_258] : memref<3x32x96xf32, #tpu.memory_space<vmem>>, vector<1x32x96xf32>
    %673 = vector.shape_cast %672 : vector<1x32x96xf32> to vector<32x96xf32>
    %cst_259 = arith.constant dense<0.000000e+00> : vector<2x96xf32>
    %674 = tpu.matmul %636, %673, %cst_259 {dimension_numbers = #tpu.dot_dimension_numbers<[1], [0], [0], [1], [0, 0, 1, 1], [], []>} : vector<2x32xf32>, vector<32x96xf32>, vector<2x96xf32> -> vector<2x96xf32>
    %c2_260 = arith.constant 2 : index
    %c0_261 = arith.constant 0 : index
    %c0_262 = arith.constant 0 : index
    %675 = vector.load %arg4[%c2_260, %c0_261, %c0_262] : memref<3x32x96xf32, #tpu.memory_space<vmem>>, vector<1x32x96xf32>
    %676 = vector.shape_cast %675 : vector<1x32x96xf32> to vector<32x96xf32>
    %cst_263 = arith.constant dense<0.000000e+00> : vector<2x96xf32>
    %677 = tpu.matmul %664, %676, %cst_263 {dimension_numbers = #tpu.dot_dimension_numbers<[1], [0], [0], [1], [0, 0, 1, 1], [], []>} : vector<2x32xf32>, vector<32x96xf32>, vector<2x96xf32> -> vector<2x96xf32>
    %678 = arith.index_cast %c7_i32 : i32 to index
    %c0_264 = arith.constant 0 : index
    %c0_265 = arith.constant 0 : index
    %679 = vector.load %arg0[%678, %c0_264, %c0_265] : memref<8x2x96xf32, #tpu.memory_space<vmem>>, vector<1x2x96xf32>
    %680 = vector.shape_cast %679 : vector<1x2x96xf32> to vector<2x96xf32>
    %681 = vector.extract_strided_slice %680 {offsets = [0, 0], sizes = [2, 64], strides = [1, 1]} : vector<2x96xf32> to vector<2x64xf32>
    %682 = vector.extract_strided_slice %671 {offsets = [0, 0], sizes = [2, 64], strides = [1, 1]} : vector<2x96xf32> to vector<2x64xf32>
    %683 = arith.addf %681, %682 : vector<2x64xf32>
    %684 = arith.negf %683 : vector<2x64xf32>
    %685 = math.exp %684 : vector<2x64xf32>
    %cst_266 = arith.constant 1.000000e+00 : f32
    %686 = vector.broadcast %cst_266 : f32 to vector<2x64xf32>
    %687 = arith.addf %686, %685 : vector<2x64xf32>
    %688 = arith.divf %686, %687 : vector<2x64xf32>
    %689 = vector.extract_strided_slice %688 {offsets = [0, 0], sizes = [2, 32], strides = [1, 1]} : vector<2x64xf32> to vector<2x32xf32>
    %690 = vector.extract_strided_slice %688 {offsets = [0, 32], sizes = [2, 32], strides = [1, 1]} : vector<2x64xf32> to vector<2x32xf32>
    %691 = vector.extract_strided_slice %680 {offsets = [0, 64], sizes = [2, 32], strides = [1, 1]} : vector<2x96xf32> to vector<2x32xf32>
    %692 = vector.extract_strided_slice %671 {offsets = [0, 64], sizes = [2, 32], strides = [1, 1]} : vector<2x96xf32> to vector<2x32xf32>
    %693 = arith.addf %692, %3 : vector<2x32xf32>
    %694 = arith.mulf %689, %693 : vector<2x32xf32>
    %695 = arith.addf %691, %694 : vector<2x32xf32>
    %696 = math.tanh %695 : vector<2x32xf32>
    %cst_267 = arith.constant 1.000000e+00 : f32
    %697 = vector.broadcast %cst_267 : f32 to vector<2x32xf32>
    %698 = arith.subf %697, %690 : vector<2x32xf32>
    %699 = arith.mulf %698, %696 : vector<2x32xf32>
    %700 = arith.mulf %690, %608 : vector<2x32xf32>
    %701 = arith.addf %699, %700 : vector<2x32xf32>
    %702 = arith.index_cast %c7_i32 : i32 to index
    %c0_268 = arith.constant 0 : index
    %c0_269 = arith.constant 0 : index
    %703 = vector.load %arg1[%702, %c0_268, %c0_269] : memref<8x2x96xf32, #tpu.memory_space<vmem>>, vector<1x2x96xf32>
    %704 = vector.shape_cast %703 : vector<1x2x96xf32> to vector<2x96xf32>
    %c0_270 = arith.constant 0 : index
    %c0_271 = arith.constant 0 : index
    %c0_272 = arith.constant 0 : index
    %705 = vector.load %arg5[%c0_270, %c0_271, %c0_272] : memref<2x32x96xf32, #tpu.memory_space<vmem>>, vector<1x32x96xf32>
    %706 = vector.shape_cast %705 : vector<1x32x96xf32> to vector<32x96xf32>
    %cst_273 = arith.constant dense<0.000000e+00> : vector<2x96xf32>
    %707 = tpu.matmul %701, %706, %cst_273 {dimension_numbers = #tpu.dot_dimension_numbers<[1], [0], [0], [1], [0, 0, 1, 1], [], []>} : vector<2x32xf32>, vector<32x96xf32>, vector<2x96xf32> -> vector<2x96xf32>
    %708 = arith.addf %704, %707 : vector<2x96xf32>
    %709 = vector.extract_strided_slice %708 {offsets = [0, 0], sizes = [2, 64], strides = [1, 1]} : vector<2x96xf32> to vector<2x64xf32>
    %710 = vector.extract_strided_slice %674 {offsets = [0, 0], sizes = [2, 64], strides = [1, 1]} : vector<2x96xf32> to vector<2x64xf32>
    %711 = arith.addf %709, %710 : vector<2x64xf32>
    %712 = arith.negf %711 : vector<2x64xf32>
    %713 = math.exp %712 : vector<2x64xf32>
    %cst_274 = arith.constant 1.000000e+00 : f32
    %714 = vector.broadcast %cst_274 : f32 to vector<2x64xf32>
    %715 = arith.addf %714, %713 : vector<2x64xf32>
    %716 = arith.divf %714, %715 : vector<2x64xf32>
    %717 = vector.extract_strided_slice %716 {offsets = [0, 0], sizes = [2, 32], strides = [1, 1]} : vector<2x64xf32> to vector<2x32xf32>
    %718 = vector.extract_strided_slice %716 {offsets = [0, 32], sizes = [2, 32], strides = [1, 1]} : vector<2x64xf32> to vector<2x32xf32>
    %719 = vector.extract_strided_slice %708 {offsets = [0, 64], sizes = [2, 32], strides = [1, 1]} : vector<2x96xf32> to vector<2x32xf32>
    %720 = vector.extract_strided_slice %674 {offsets = [0, 64], sizes = [2, 32], strides = [1, 1]} : vector<2x96xf32> to vector<2x32xf32>
    %721 = arith.addf %720, %7 : vector<2x32xf32>
    %722 = arith.mulf %717, %721 : vector<2x32xf32>
    %723 = arith.addf %719, %722 : vector<2x32xf32>
    %724 = math.tanh %723 : vector<2x32xf32>
    %cst_275 = arith.constant 1.000000e+00 : f32
    %725 = vector.broadcast %cst_275 : f32 to vector<2x32xf32>
    %726 = arith.subf %725, %718 : vector<2x32xf32>
    %727 = arith.mulf %726, %724 : vector<2x32xf32>
    %728 = arith.mulf %718, %636 : vector<2x32xf32>
    %729 = arith.addf %727, %728 : vector<2x32xf32>
    %730 = arith.index_cast %c7_i32 : i32 to index
    %c0_276 = arith.constant 0 : index
    %c0_277 = arith.constant 0 : index
    %731 = vector.load %arg2[%730, %c0_276, %c0_277] : memref<8x2x96xf32, #tpu.memory_space<vmem>>, vector<1x2x96xf32>
    %732 = vector.shape_cast %731 : vector<1x2x96xf32> to vector<2x96xf32>
    %c1_278 = arith.constant 1 : index
    %c0_279 = arith.constant 0 : index
    %c0_280 = arith.constant 0 : index
    %733 = vector.load %arg5[%c1_278, %c0_279, %c0_280] : memref<2x32x96xf32, #tpu.memory_space<vmem>>, vector<1x32x96xf32>
    %734 = vector.shape_cast %733 : vector<1x32x96xf32> to vector<32x96xf32>
    %cst_281 = arith.constant dense<0.000000e+00> : vector<2x96xf32>
    %735 = tpu.matmul %729, %734, %cst_281 {dimension_numbers = #tpu.dot_dimension_numbers<[1], [0], [0], [1], [0, 0, 1, 1], [], []>} : vector<2x32xf32>, vector<32x96xf32>, vector<2x96xf32> -> vector<2x96xf32>
    %736 = arith.addf %732, %735 : vector<2x96xf32>
    %737 = vector.extract_strided_slice %736 {offsets = [0, 0], sizes = [2, 64], strides = [1, 1]} : vector<2x96xf32> to vector<2x64xf32>
    %738 = vector.extract_strided_slice %677 {offsets = [0, 0], sizes = [2, 64], strides = [1, 1]} : vector<2x96xf32> to vector<2x64xf32>
    %739 = arith.addf %737, %738 : vector<2x64xf32>
    %740 = arith.negf %739 : vector<2x64xf32>
    %741 = math.exp %740 : vector<2x64xf32>
    %cst_282 = arith.constant 1.000000e+00 : f32
    %742 = vector.broadcast %cst_282 : f32 to vector<2x64xf32>
    %743 = arith.addf %742, %741 : vector<2x64xf32>
    %744 = arith.divf %742, %743 : vector<2x64xf32>
    %745 = vector.extract_strided_slice %744 {offsets = [0, 0], sizes = [2, 32], strides = [1, 1]} : vector<2x64xf32> to vector<2x32xf32>
    %746 = vector.extract_strided_slice %744 {offsets = [0, 32], sizes = [2, 32], strides = [1, 1]} : vector<2x64xf32> to vector<2x32xf32>
    %747 = vector.extract_strided_slice %736 {offsets = [0, 64], sizes = [2, 32], strides = [1, 1]} : vector<2x96xf32> to vector<2x32xf32>
    %748 = vector.extract_strided_slice %677 {offsets = [0, 64], sizes = [2, 32], strides = [1, 1]} : vector<2x96xf32> to vector<2x32xf32>
    %749 = arith.addf %748, %11 : vector<2x32xf32>
    %750 = arith.mulf %745, %749 : vector<2x32xf32>
    %751 = arith.addf %747, %750 : vector<2x32xf32>
    %752 = math.tanh %751 : vector<2x32xf32>
    %cst_283 = arith.constant 1.000000e+00 : f32
    %753 = vector.broadcast %cst_283 : f32 to vector<2x32xf32>
    %754 = arith.subf %753, %746 : vector<2x32xf32>
    %755 = arith.mulf %754, %752 : vector<2x32xf32>
    %756 = arith.mulf %746, %664 : vector<2x32xf32>
    %757 = arith.addf %755, %756 : vector<2x32xf32>
    %758 = arith.index_cast %c7_i32 : i32 to index
    %c0_284 = arith.constant 0 : index
    %c0_285 = arith.constant 0 : index
    %759 = vector.load %arg7[%758, %c0_284, %c0_285] : memref<8x2x32xf32, #tpu.memory_space<vmem>>, vector<1x2x32xf32>
    %760 = vector.shape_cast %759 : vector<1x2x32xf32> to vector<2x32xf32>
    %761 = vector.shape_cast %757 : vector<2x32xf32> to vector<1x2x32xf32>
    tpu.vector_store %arg7[%758, %c0_284, %c0_285], %761 {strides = array<i32>} : memref<8x2x32xf32, #tpu.memory_space<vmem>>, vector<1x2x32xf32>,
    %c8_i32 = arith.constant 8 : i32
    %c0_286 = arith.constant 0 : index
    %c0_287 = arith.constant 0 : index
    %c0_288 = arith.constant 0 : index
    %762 = vector.load %arg8[%c0_286, %c0_287, %c0_288] : memref<3x2x32xf32, #tpu.memory_space<vmem>>, vector<1x2x32xf32>
    %763 = vector.shape_cast %762 : vector<1x2x32xf32> to vector<2x32xf32>
    %764 = vector.shape_cast %701 : vector<2x32xf32> to vector<1x2x32xf32>
    tpu.vector_store %arg8[%c0_286, %c0_287, %c0_288], %764 {strides = array<i32>} : memref<3x2x32xf32, #tpu.memory_space<vmem>>, vector<1x2x32xf32>,
    %c1_289 = arith.constant 1 : index
    %c0_290 = arith.constant 0 : index
    %c0_291 = arith.constant 0 : index
    %765 = vector.load %arg8[%c1_289, %c0_290, %c0_291] : memref<3x2x32xf32, #tpu.memory_space<vmem>>, vector<1x2x32xf32>
    %766 = vector.shape_cast %765 : vector<1x2x32xf32> to vector<2x32xf32>
    %767 = vector.shape_cast %729 : vector<2x32xf32> to vector<1x2x32xf32>
    tpu.vector_store %arg8[%c1_289, %c0_290, %c0_291], %767 {strides = array<i32>} : memref<3x2x32xf32, #tpu.memory_space<vmem>>, vector<1x2x32xf32>,
    %c2_292 = arith.constant 2 : index
    %c0_293 = arith.constant 0 : index
    %c0_294 = arith.constant 0 : index
    %768 = vector.load %arg8[%c2_292, %c0_293, %c0_294] : memref<3x2x32xf32, #tpu.memory_space<vmem>>, vector<1x2x32xf32>
    %769 = vector.shape_cast %768 : vector<1x2x32xf32> to vector<2x32xf32>
    %770 = vector.shape_cast %757 : vector<2x32xf32> to vector<1x2x32xf32>
    tpu.vector_store %arg8[%c2_292, %c0_293, %c0_294], %770 {strides = array<i32>} : memref<3x2x32xf32, #tpu.memory_space<vmem>>, vector<1x2x32xf32>,
    return
  }
}

</mosaic_0001>

<llo_original>
// kernel: gru_with_cells_forward.1
$region0: #{gru_with_cells_forward.1}
  #allocation0 [shape = 'u32[]', space=smem, size = 0x4, offset = 0x4, fixed_abs, tag = 'smem constant byte address 0x4 - core index']
  #allocation1 [shape = 'u32[72,128]{1,0:T(1,128)}', space=vmem, size = 0x9000, scoped, tag = 'internal scratch']
  %s0 = inlined_call_operand.vmem [shape: f32[8,2,96], index: 0, kind: input, shape index: {}]
  %s1 = inlined_call_operand.vmem [shape: f32[8,2,96], index: 1, kind: input, shape index: {}]
  %s2 = inlined_call_operand.vmem [shape: f32[8,2,96], index: 2, kind: input, shape index: {}]
  %s3 = inlined_call_operand.vmem [shape: f32[3,2,32], index: 3, kind: input, shape index: {}]
  %s4 = inlined_call_operand.vmem [shape: f32[3,32,96], index: 4, kind: input, shape index: {}]
  %s5 = inlined_call_operand.vmem [shape: f32[2,32,96], index: 5, kind: input, shape index: {}]
  %s6 = inlined_call_operand.vmem [shape: f32[3,1,32], index: 6, kind: input, shape index: {}]
  %s7 = inlined_call_operand.vmem [shape: f32[8,2,32], index: 7, kind: output, shape index: {0}]
  %s8 = inlined_call_operand.vmem [shape: f32[3,2,32], index: 8, kind: output, shape index: {1}]
  %9 = xla_tuple %s7, %s8
  %s10 = sld [smem:[#allocation0]]
  $region46: #{gru_with_cells_forward.1} parent=0
    _
  %s12 = ssub.s32 1, %s10
  %s13 = scalar_select 0, %s12, %s10
  // Predicated region
  $region2: #{gru_with_cells_forward.1} parent=0 // pred_check
    _
  $region3: #{gru_with_cells_forward.1} parent=0 // pred_check_branch
    %15 = sbr.rel (0) target = $region5
  $region4: #{gru_with_cells_forward.1} parent=0 // pred_region
    _
  $region5: #{gru_with_cells_forward.1} parent=0 // pred_fallthru
    _
  // Predicated region
  $region6: #{gru_with_cells_forward.1} parent=0 // pred_check
    _
  $region7: #{gru_with_cells_forward.1} parent=0 // pred_check_branch
    %17 = sbr.rel (0) target = $region9
  $region8: #{gru_with_cells_forward.1} parent=0 // pred_region
    _
  $region9: #{gru_with_cells_forward.1} parent=0 // pred_fallthru
    _
  // Predicated region
  $region10: #{gru_with_cells_forward.1} parent=0 // pred_check
    _
  $region11: #{gru_with_cells_forward.1} parent=0 // pred_check_branch
    %19 = sbr.rel (0) target = $region13
  $region12: #{gru_with_cells_forward.1} parent=0 // pred_region
    _
  $region13: #{gru_with_cells_forward.1} parent=0 // pred_fallthru
    _
  // Predicated region
  $region14: #{gru_with_cells_forward.1} parent=0 // pred_check
    _
  $region15: #{gru_with_cells_forward.1} parent=0 // pred_check_branch
    %21 = sbr.rel (0) target = $region17
  $region16: #{gru_with_cells_forward.1} parent=0 // pred_region
    _
  $region17: #{gru_with_cells_forward.1} parent=0 // pred_fallthru
    _
  // Predicated region
  $region18: #{gru_with_cells_forward.1} parent=0 // pred_check
    _
  $region19: #{gru_with_cells_forward.1} parent=0 // pred_check_branch
    %23 = sbr.rel (0) target = $region21
  $region20: #{gru_with_cells_forward.1} parent=0 // pred_region
    _
  $region21: #{gru_with_cells_forward.1} parent=0 // pred_fallthru
    _
  // Predicated region
  $region22: #{gru_with_cells_forward.1} parent=0 // pred_check
    _
  $region23: #{gru_with_cells_forward.1} parent=0 // pred_check_branch
    %25 = sbr.rel (0) target = $region25
  $region24: #{gru_with_cells_forward.1} parent=0 // pred_region
    _
  $region25: #{gru_with_cells_forward.1} parent=0 // pred_fallthru
    _
  // Predicated region
  $region26: #{gru_with_cells_forward.1} parent=0 // pred_check
    _
  $region27: #{gru_with_cells_forward.1} parent=0 // pred_check_branch
    %27 = sbr.rel (0) target = $region29
  $region28: #{gru_with_cells_forward.1} parent=0 // pred_region
    _
  $region29: #{gru_with_cells_forward.1} parent=0 // pred_fallthru
    _
  %v28 = vld [vmem:[%s6] sm:$0x1]
  %v30 = vperm.slane %v28, 0
  %s31 = scalar_lea.vmem %s6, 1
  %v32 = vld [vmem:[%s31] sm:$0x1]
  %v34 = vperm.slane %v32, 0
  %s35 = scalar_lea.vmem %s6, 2
  %v36 = vld [vmem:[%s35] sm:$0x1]
  %v38 = vperm.slane %v36, 0
  %v39 = vld [vmem:[%s3] sm:$0x3]
  %s40 = scalar_lea.vmem %s3, 2
  %v41 = vld [vmem:[%s40] sm:$0x3]
  %s42 = scalar_lea.vmem %s3, 4
  %v43 = vld [vmem:[%s42] sm:$0x3]
  %v44 = vld [vmem:[%s4] sm:$0xff]
  %v45 = vld [vmem:[%s4 + $0x8] sm:$0xff]
  %v46 = vld [vmem:[%s4 + $0x10] sm:$0xff]
  %v47 = vld [vmem:[%s4 + $0x18] sm:$0xff]
  %vm48 = vcmask 261120
  %v50 = vsel %vm48, %v39, 0
  %52 = vmatpush.msra.mxu0 0.0
  %53 = vmatpush.msra.mxu0 0.0
  %54 = vmatpush.msra.mxu0 0.0
  %55 = vmatpush.msra.mxu0 0.0
  %56 = vmatpush.msra.mxu0 0.0
  %57 = vmatpush.msra.mxu0 0.0
  %58 = vmatpush.msra.mxu0 0.0
  %59 = vmatpush.msra.mxu0 0.0
  %60 = vmatpush.msra.mxu0 0.0
  %61 = vmatpush.msra.mxu0 0.0
  %62 = vmatpush.msra.mxu0 0.0
  %63 = vmatpush.msra.mxu0 0.0
  %64 = vmatpush.msra.mxu0 %v47
  %65 = vmatpush.msra.mxu0 %v46
  %66 = vmatpush.msra.mxu0 %v45
  %67 = vmatpush.msra.mxu0 %v44
  %68 = vmatmul.f32.gmra.mxu0 %v50
  %v69 = vpop.f32.mrf.mxu0
  %v70 = vadd.f32 0.0, %v69
  %71 = vdwg.mxu0
  %s72 = scalar_lea.vmem %s4, 32
  %v73 = vld [vmem:[%s72] sm:$0xff]
  %v74 = vld [vmem:[%s72 + $0x8] sm:$0xff]
  %v75 = vld [vmem:[%s72 + $0x10] sm:$0xff]
  %v76 = vld [vmem:[%s72 + $0x18] sm:$0xff]
  %v78 = vsel %vm48, %v41, 0
  %80 = vmatpush.msra.mxu0 0.0
  %81 = vmatpush.msra.mxu0 0.0
  %82 = vmatpush.msra.mxu0 0.0
  %83 = vmatpush.msra.mxu0 0.0
  %84 = vmatpush.msra.mxu0 0.0
  %85 = vmatpush.msra.mxu0 0.0
  %86 = vmatpush.msra.mxu0 0.0
  %87 = vmatpush.msra.mxu0 0.0
  %88 = vmatpush.msra.mxu0 0.0
  %89 = vmatpush.msra.mxu0 0.0
  %90 = vmatpush.msra.mxu0 0.0
  %91 = vmatpush.msra.mxu0 0.0
  %92 = vmatpush.msra.mxu0 %v76
  %93 = vmatpush.msra.mxu0 %v75
  %94 = vmatpush.msra.mxu0 %v74
  %95 = vmatpush.msra.mxu0 %v73
  %96 = vmatmul.f32.gmra.mxu0 %v78
  %v97 = vpop.f32.mrf.mxu0
  %v98 = vadd.f32 0.0, %v97
  %99 = vdwg.mxu0
  %s100 = scalar_lea.vmem %s4, 64
  %v101 = vld [vmem:[%s100] sm:$0xff]
  %v102 = vld [vmem:[%s100 + $0x8] sm:$0xff]
  %v103 = vld [vmem:[%s100 + $0x10] sm:$0xff]
  %v104 = vld [vmem:[%s100 + $0x18] sm:$0xff]
  %v106 = vsel %vm48, %v43, 0
  %108 = vmatpush.msra.mxu0 0.0
  %109 = vmatpush.msra.mxu0 0.0
  %110 = vmatpush.msra.mxu0 0.0
  %111 = vmatpush.msra.mxu0 0.0
  %112 = vmatpush.msra.mxu0 0.0
  %113 = vmatpush.msra.mxu0 0.0
  %114 = vmatpush.msra.mxu0 0.0
  %115 = vmatpush.msra.mxu0 0.0
  %116 = vmatpush.msra.mxu0 0.0
  %117 = vmatpush.msra.mxu0 0.0
  %118 = vmatpush.msra.mxu0 0.0
  %119 = vmatpush.msra.mxu0 0.0
  %120 = vmatpush.msra.mxu0 %v104
  %121 = vmatpush.msra.mxu0 %v103
  %122 = vmatpush.msra.mxu0 %v102
  %123 = vmatpush.msra.mxu0 %v101
  %124 = vmatmul.f32.gmra.mxu0 %v106
  %v125 = vpop.f32.mrf.mxu0
  %v126 = vadd.f32 0.0, %v125
  %127 = vdwg.mxu0
  %v128 = vld [vmem:[%s0] sm:$0x3]
  %v129 = vadd.f32 %v128, %v70
  %v130 = vxor.u32 %v129, 2147483648
  %v131 = vmul.f32 %v130, 1.442695
  %v132 = vpow.pop %v131
  %v133 = vadd.f32 %v132, 1.0
  %v134 = vrcp.pop %v133
  %v135 = vmul.f32 %v133, %v134
  %v136 = vsub.f32 1.0, %v135
  %v137 = vmul.f32 %v134, %v136
  %v138 = vadd.f32 %v134, %v137
  %vm139 = vweird.f32 %v133
  %vm140 = vweird.f32 %v134
  %vm141 = vmor %vm139, %vm140
  %v142 = vsel %vm141, %v134, %v138
  %v143 = vand.u32 2147483647, %v133
  %vm144 = vcmp.eq.f32.partialorder %v143, 8.507059e+37
  %v145 = vand.u32 %v133, 2147483648
  %v146 = vor.u32 1.1754944e-38, %v145
  %v147 = vsel %vm144, %v146, %v142
  %v148 = vmul.f32 1.0, %v147
  %149 = vrot.lane.b32.xlu0 %v30, 64
  %v150 = vpop.permute.xlu0 %149
  %v152 = vadd.f32 %v70, %v150
  %154 = vrot.lane.b32.xlu0 %v152, 64
  %v155 = vpop.permute.xlu0 %154
  %v157 = vmul.f32 %v148, %v155
  %159 = vrot.lane.b32.xlu0 %v157, 64
  %v160 = vpop.permute.xlu0 %159
  %v162 = vadd.f32 %v128, %v160
  %v163 = vtanh.pop %v162
  %v164 = vsub.f32 1.0, %v148
  %166 = vrot.lane.b32.xlu0 %v163, 96
  %v167 = vpop.permute.xlu0 %166
  %v169 = vmul.f32 %v164, %v167
  %170 = vrot.lane.b32.xlu0 %v39, 32
  %v171 = vpop.permute.xlu0 %170
  %v173 = vmul.f32 %v148, %v171
  %v174 = vadd.f32 %v169, %v173
  %v175 = vld [vmem:[%s1] sm:$0x3]
  %v176 = vld [vmem:[%s5] sm:$0xff]
  %v177 = vld [vmem:[%s5 + $0x8] sm:$0xff]
  %v178 = vld [vmem:[%s5 + $0x10] sm:$0xff]
  %v179 = vld [vmem:[%s5 + $0x18] sm:$0xff]
  %181 = vrot.lane.b32.xlu0 %v174, 96
  %v182 = vpop.permute.xlu0 %181
  %v183 = vsel %vm48, %v182, 0
  %185 = vmatpush.msra.mxu0 0.0
  %186 = vmatpush.msra.mxu0 0.0
  %187 = vmatpush.msra.mxu0 0.0
  %188 = vmatpush.msra.mxu0 0.0
  %189 = vmatpush.msra.mxu0 0.0
  %190 = vmatpush.msra.mxu0 0.0
  %191 = vmatpush.msra.mxu0 0.0
  %192 = vmatpush.msra.mxu0 0.0
  %193 = vmatpush.msra.mxu0 0.0
  %194 = vmatpush.msra.mxu0 0.0
  %195 = vmatpush.msra.mxu0 0.0
  %196 = vmatpush.msra.mxu0 0.0
  %197 = vmatpush.msra.mxu0 %v179
  %198 = vmatpush.msra.mxu0 %v178
  %199 = vmatpush.msra.mxu0 %v177
  %200 = vmatpush.msra.mxu0 %v176
  %201 = vmatmul.f32.gmra.mxu0 %v183
  %v202 = vpop.f32.mrf.mxu0
  %v203 = vadd.f32 0.0, %v202
  %204 = vdwg.mxu0
  %v205 = vadd.f32 %v175, %v203
  %v206 = vadd.f32 %v205, %v98
  %v207 = vxor.u32 %v206, 2147483648
  %v208 = vmul.f32 %v207, 1.442695
  %v209 = vpow.pop %v208
  %v210 = vadd.f32 %v209, 1.0
  %v211 = vrcp.pop %v210
  %v212 = vmul.f32 %v210, %v211
  %v213 = vsub.f32 1.0, %v212
  %v214 = vmul.f32 %v211, %v213
  %v215 = vadd.f32 %v211, %v214
  %vm216 = vweird.f32 %v210
  %vm217 = vweird.f32 %v211
  %vm218 = vmor %vm216, %vm217
  %v219 = vsel %vm218, %v211, %v215
  %v220 = vand.u32 2147483647, %v210
  %vm221 = vcmp.eq.f32.partialorder %v220, 8.507059e+37
  %v222 = vand.u32 %v210, 2147483648
  %v223 = vor.u32 1.1754944e-38, %v222
  %v224 = vsel %vm221, %v223, %v219
  %v225 = vmul.f32 1.0, %v224
  %226 = vrot.lane.b32.xlu0 %v34, 64
  %v227 = vpop.permute.xlu0 %226
  %v229 = vadd.f32 %v98, %v227
  %231 = vrot.lane.b32.xlu0 %v229, 64
  %v232 = vpop.permute.xlu0 %231
  %v234 = vmul.f32 %v225, %v232
  %236 = vrot.lane.b32.xlu0 %v234, 64
  %v237 = vpop.permute.xlu0 %236
  %v239 = vadd.f32 %v205, %v237
  %v240 = vtanh.pop %v239
  %v241 = vsub.f32 1.0, %v225
  %243 = vrot.lane.b32.xlu0 %v240, 96
  %v244 = vpop.permute.xlu0 %243
  %v246 = vmul.f32 %v241, %v244
  %247 = vrot.lane.b32.xlu0 %v41, 32
  %v248 = vpop.permute.xlu0 %247
  %v250 = vmul.f32 %v225, %v248
  %v251 = vadd.f32 %v246, %v250
  %v252 = vld [vmem:[%s2] sm:$0x3]
  %s253 = scalar_lea.vmem %s5, 32
  %v254 = vld [vmem:[%s253] sm:$0xff]
  %v255 = vld [vmem:[%s253 + $0x8] sm:$0xff]
  %v256 = vld [vmem:[%s253 + $0x10] sm:$0xff]
  %v257 = vld [vmem:[%s253 + $0x18] sm:$0xff]
  %259 = vrot.lane.b32.xlu0 %v251, 96
  %v260 = vpop.permute.xlu0 %259
  %v261 = vsel %vm48, %v260, 0
  %263 = vmatpush.msra.mxu0 0.0
  %264 = vmatpush.msra.mxu0 0.0
  %265 = vmatpush.msra.mxu0 0.0
  %266 = vmatpush.msra.mxu0 0.0
  %267 = vmatpush.msra.mxu0 0.0
  %268 = vmatpush.msra.mxu0 0.0
  %269 = vmatpush.msra.mxu0 0.0
  %270 = vmatpush.msra.mxu0 0.0
  %271 = vmatpush.msra.mxu0 0.0
  %272 = vmatpush.msra.mxu0 0.0
  %273 = vmatpush.msra.mxu0 0.0
  %274 = vmatpush.msra.mxu0 0.0
  %275 = vmatpush.msra.mxu0 %v257
  %276 = vmatpush.msra.mxu0 %v256
  %277 = vmatpush.msra.mxu0 %v255
  %278 = vmatpush.msra.mxu0 %v254
  %279 = vmatmul.f32.gmra.mxu0 %v261
  %v280 = vpop.f32.mrf.mxu0
  %v281 = vadd.f32 0.0, %v280
  %282 = vdwg.mxu0
  %v283 = vadd.f32 %v252, %v281
  %v284 = vadd.f32 %v283, %v126
  %v285 = vxor.u32 %v284, 2147483648
  %v286 = vmul.f32 %v285, 1.442695
  %v287 = vpow.pop %v286
  %v288 = vadd.f32 %v287, 1.0
  %v289 = vrcp.pop %v288
  %v290 = vmul.f32 %v288, %v289
  %v291 = vsub.f32 1.0, %v290
  %v292 = vmul.f32 %v289, %v291
  %v293 = vadd.f32 %v289, %v292
  %vm294 = vweird.f32 %v288
  %vm295 = vweird.f32 %v289
  %vm296 = vmor %vm294, %vm295
  %v297 = vsel %vm296, %v289, %v293
  %v298 = vand.u32 2147483647, %v288
  %vm299 = vcmp.eq.f32.partialorder %v298, 8.507059e+37
  %v300 = vand.u32 %v288, 2147483648
  %v301 = vor.u32 1.1754944e-38, %v300
  %v302 = vsel %vm299, %v301, %v297
  %v303 = vmul.f32 1.0, %v302
  %304 = vrot.lane.b32.xlu0 %v38, 64
  %v305 = vpop.permute.xlu0 %304
  %v307 = vadd.f32 %v126, %v305
  %309 = vrot.lane.b32.xlu0 %v307, 64
  %v310 = vpop.permute.xlu0 %309
  %v312 = vmul.f32 %v303, %v310
  %314 = vrot.lane.b32.xlu0 %v312, 64
  %v315 = vpop.permute.xlu0 %314
  %v317 = vadd.f32 %v283, %v315
  %v318 = vtanh.pop %v317
  %v319 = vsub.f32 1.0, %v303
  %321 = vrot.lane.b32.xlu0 %v318, 96
  %v322 = vpop.permute.xlu0 %321
  %v324 = vmul.f32 %v319, %v322
  %325 = vrot.lane.b32.xlu0 %v43, 32
  %v326 = vpop.permute.xlu0 %325
  %v328 = vmul.f32 %v303, %v326
  %v329 = vadd.f32 %v324, %v328
  %331 = vrot.lane.b32.xlu0 %v329, 96
  %v332 = vpop.permute.xlu0 %331
  %vm334 = vcmask 254976
  %335 = vst.msk [vmem:[%s7] sm:$0x3] %vm334, %v332
  %v336 = vld [vmem:[%s4] sm:$0xff]
  %v337 = vld [vmem:[%s4 + $0x8] sm:$0xff]
  %v338 = vld [vmem:[%s4 + $0x10] sm:$0xff]
  %v339 = vld [vmem:[%s4 + $0x18] sm:$0xff]
  %340 = vmatpush.msra.mxu0 0.0
  %341 = vmatpush.msra.mxu0 0.0
  %342 = vmatpush.msra.mxu0 0.0
  %343 = vmatpush.msra.mxu0 0.0
  %344 = vmatpush.msra.mxu0 0.0
  %345 = vmatpush.msra.mxu0 0.0
  %346 = vmatpush.msra.mxu0 0.0
  %347 = vmatpush.msra.mxu0 0.0
  %348 = vmatpush.msra.mxu0 0.0
  %349 = vmatpush.msra.mxu0 0.0
  %350 = vmatpush.msra.mxu0 0.0
  %351 = vmatpush.msra.mxu0 0.0
  %352 = vmatpush.msra.mxu0 %v339
  %353 = vmatpush.msra.mxu0 %v338
  %354 = vmatpush.msra.mxu0 %v337
  %355 = vmatpush.msra.mxu0 %v336
  %356 = vmatmul.f32.gmra.mxu0 %v183
  %v357 = vpop.f32.mrf.mxu0
  %v358 = vadd.f32 0.0, %v357
  %359 = vdwg.mxu0
  %v360 = vld [vmem:[%s72] sm:$0xff]
  %v361 = vld [vmem:[%s72 + $0x8] sm:$0xff]
  %v362 = vld [vmem:[%s72 + $0x10] sm:$0xff]
  %v363 = vld [vmem:[%s72 + $0x18] sm:$0xff]
  %364 = vmatpush.msra.mxu0 0.0
  %365 = vmatpush.msra.mxu0 0.0
  %366 = vmatpush.msra.mxu0 0.0
  %367 = vmatpush.msra.mxu0 0.0
  %368 = vmatpush.msra.mxu0 0.0
  %369 = vmatpush.msra.mxu0 0.0
  %370 = vmatpush.msra.mxu0 0.0
  %371 = vmatpush.msra.mxu0 0.0
  %372 = vmatpush.msra.mxu0 0.0
  %373 = vmatpush.msra.mxu0 0.0
  %374 = vmatpush.msra.mxu0 0.0
  %375 = vmatpush.msra.mxu0 0.0
  %376 = vmatpush.msra.mxu0 %v363
  %377 = vmatpush.msra.mxu0 %v362
  %378 = vmatpush.msra.mxu0 %v361
  %379 = vmatpush.msra.mxu0 %v360
  %380 = vmatmul.f32.gmra.mxu0 %v261
  %v381 = vpop.f32.mrf.mxu0
  %v382 = vadd.f32 0.0, %v381
  %383 = vdwg.mxu0
  %v384 = vld [vmem:[%s100] sm:$0xff]
  %v385 = vld [vmem:[%s100 + $0x8] sm:$0xff]
  %v386 = vld [vmem:[%s100 + $0x10] sm:$0xff]
  %v387 = vld [vmem:[%s100 + $0x18] sm:$0xff]
  %v388 = vsel %vm48, %v332, 0
  %390 = vmatpush.msra.mxu0 0.0
  %391 = vmatpush.msra.mxu0 0.0
  %392 = vmatpush.msra.mxu0 0.0
  %393 = vmatpush.msra.mxu0 0.0
  %394 = vmatpush.msra.mxu0 0.0
  %395 = vmatpush.msra.mxu0 0.0
  %396 = vmatpush.msra.mxu0 0.0
  %397 = vmatpush.msra.mxu0 0.0
  %398 = vmatpush.msra.mxu0 0.0
  %399 = vmatpush.msra.mxu0 0.0
  %400 = vmatpush.msra.mxu0 0.0
  %401 = vmatpush.msra.mxu0 0.0
  %402 = vmatpush.msra.mxu0 %v387
  %403 = vmatpush.msra.mxu0 %v386
  %404 = vmatpush.msra.mxu0 %v385
  %405 = vmatpush.msra.mxu0 %v384
  %406 = vmatmul.f32.gmra.mxu0 %v388
  %v407 = vpop.f32.mrf.mxu0
  %v408 = vadd.f32 0.0, %v407
  %409 = vdwg.mxu0
  %s410 = scalar_lea.vmem %s0, 2
  %v411 = vld [vmem:[%s410] sm:$0x3]
  %v412 = vadd.f32 %v411, %v358
  %v413 = vxor.u32 %v412, 2147483648
  %v414 = vmul.f32 %v413, 1.442695
  %v415 = vpow.pop %v414
  %v416 = vadd.f32 %v415, 1.0
  %v417 = vrcp.pop %v416
  %v418 = vmul.f32 %v416, %v417
  %v419 = vsub.f32 1.0, %v418
  %v420 = vmul.f32 %v417, %v419
  %v421 = vadd.f32 %v417, %v420
  %vm422 = vweird.f32 %v416
  %vm423 = vweird.f32 %v417
  %vm424 = vmor %vm422, %vm423
  %v425 = vsel %vm424, %v417, %v421
  %v426 = vand.u32 2147483647, %v416
  %vm427 = vcmp.eq.f32.partialorder %v426, 8.507059e+37
  %v428 = vand.u32 %v416, 2147483648
  %v429 = vor.u32 1.1754944e-38, %v428
  %v430 = vsel %vm427, %v429, %v425
  %v431 = vmul.f32 1.0, %v430
  %v432 = vadd.f32 %v358, %v150
  %434 = vrot.lane.b32.xlu0 %v432, 64
  %v435 = vpop.permute.xlu0 %434
  %v437 = vmul.f32 %v431, %v435
  %439 = vrot.lane.b32.xlu0 %v437, 64
  %v440 = vpop.permute.xlu0 %439
  %v442 = vadd.f32 %v411, %v440
  %v443 = vtanh.pop %v442
  %v444 = vsub.f32 1.0, %v431
  %446 = vrot.lane.b32.xlu0 %v443, 96
  %v447 = vpop.permute.xlu0 %446
  %v449 = vmul.f32 %v444, %v447
  %v450 = vmul.f32 %v431, %v174
  %v451 = vadd.f32 %v449, %v450
  %s452 = scalar_lea.vmem %s1, 2
  %v453 = vld [vmem:[%s452] sm:$0x3]
  %v454 = vld [vmem:[%s5] sm:$0xff]
  %v455 = vld [vmem:[%s5 + $0x8] sm:$0xff]
  %v456 = vld [vmem:[%s5 + $0x10] sm:$0xff]
  %v457 = vld [vmem:[%s5 + $0x18] sm:$0xff]
  %459 = vrot.lane.b32.xlu0 %v451, 96
  %v460 = vpop.permute.xlu0 %459
  %v461 = vsel %vm48, %v460, 0
  %463 = vmatpush.msra.mxu0 0.0
  %464 = vmatpush.msra.mxu0 0.0
  %465 = vmatpush.msra.mxu0 0.0
  %466 = vmatpush.msra.mxu0 0.0
  %467 = vmatpush.msra.mxu0 0.0
  %468 = vmatpush.msra.mxu0 0.0
  %469 = vmatpush.msra.mxu0 0.0
  %470 = vmatpush.msra.mxu0 0.0
  %471 = vmatpush.msra.mxu0 0.0
  %472 = vmatpush.msra.mxu0 0.0
  %473 = vmatpush.msra.mxu0 0.0
  %474 = vmatpush.msra.mxu0 0.0
  %475 = vmatpush.msra.mxu0 %v457
  %476 = vmatpush.msra.mxu0 %v456
  %477 = vmatpush.msra.mxu0 %v455
  %478 = vmatpush.msra.mxu0 %v454
  %479 = vmatmul.f32.gmra.mxu0 %v461
  %v480 = vpop.f32.mrf.mxu0
  %v481 = vadd.f32 0.0, %v480
  %482 = vdwg.mxu0
  %v483 = vadd.f32 %v453, %v481
  %v484 = vadd.f32 %v483, %v382
  %v485 = vxor.u32 %v484, 2147483648
  %v486 = vmul.f32 %v485, 1.442695
  %v487 = vpow.pop %v486
  %v488 = vadd.f32 %v487, 1.0
  %v489 = vrcp.pop %v488
  %v490 = vmul.f32 %v488, %v489
  %v491 = vsub.f32 1.0, %v490
  %v492 = vmul.f32 %v489, %v491
  %v493 = vadd.f32 %v489, %v492
  %vm494 = vweird.f32 %v488
  %vm495 = vweird.f32 %v489
  %vm496 = vmor %vm494, %vm495
  %v497 = vsel %vm496, %v489, %v493
  %v498 = vand.u32 2147483647, %v488
  %vm499 = vcmp.eq.f32.partialorder %v498, 8.507059e+37
  %v500 = vand.u32 %v488, 2147483648
  %v501 = vor.u32 1.1754944e-38, %v500
  %v502 = vsel %vm499, %v501, %v497
  %v503 = vmul.f32 1.0, %v502
  %v504 = vadd.f32 %v382, %v227
  %506 = vrot.lane.b32.xlu0 %v504, 64
  %v507 = vpop.permute.xlu0 %506
  %v509 = vmul.f32 %v503, %v507
  %511 = vrot.lane.b32.xlu0 %v509, 64
  %v512 = vpop.permute.xlu0 %511
  %v514 = vadd.f32 %v483, %v512
  %v515 = vtanh.pop %v514
  %v516 = vsub.f32 1.0, %v503
  %518 = vrot.lane.b32.xlu0 %v515, 96
  %v519 = vpop.permute.xlu0 %518
  %v521 = vmul.f32 %v516, %v519
  %v522 = vmul.f32 %v503, %v251
  %v523 = vadd.f32 %v521, %v522
  %s524 = scalar_lea.vmem %s2, 2
  %v525 = vld [vmem:[%s524] sm:$0x3]
  %v526 = vld [vmem:[%s253] sm:$0xff]
  %v527 = vld [vmem:[%s253 + $0x8] sm:$0xff]
  %v528 = vld [vmem:[%s253 + $0x10] sm:$0xff]
  %v529 = vld [vmem:[%s253 + $0x18] sm:$0xff]
  %531 = vrot.lane.b32.xlu0 %v523, 96
  %v532 = vpop.permute.xlu0 %531
  %v533 = vsel %vm48, %v532, 0
  %535 = vmatpush.msra.mxu0 0.0
  %536 = vmatpush.msra.mxu0 0.0
  %537 = vmatpush.msra.mxu0 0.0
  %538 = vmatpush.msra.mxu0 0.0
  %539 = vmatpush.msra.mxu0 0.0
  %540 = vmatpush.msra.mxu0 0.0
  %541 = vmatpush.msra.mxu0 0.0
  %542 = vmatpush.msra.mxu0 0.0
  %543 = vmatpush.msra.mxu0 0.0
  %544 = vmatpush.msra.mxu0 0.0
  %545 = vmatpush.msra.mxu0 0.0
  %546 = vmatpush.msra.mxu0 0.0
  %547 = vmatpush.msra.mxu0 %v529
  %548 = vmatpush.msra.mxu0 %v528
  %549 = vmatpush.msra.mxu0 %v527
  %550 = vmatpush.msra.mxu0 %v526
  %551 = vmatmul.f32.gmra.mxu0 %v533
  %v552 = vpop.f32.mrf.mxu0
  %v553 = vadd.f32 0.0, %v552
  %554 = vdwg.mxu0
  %v555 = vadd.f32 %v525, %v553
  %v556 = vadd.f32 %v555, %v408
  %v557 = vxor.u32 %v556, 2147483648
  %v558 = vmul.f32 %v557, 1.442695
  %v559 = vpow.pop %v558
  %v560 = vadd.f32 %v559, 1.0
  %v561 = vrcp.pop %v560
  %v562 = vmul.f32 %v560, %v561
  %v563 = vsub.f32 1.0, %v562
  %v564 = vmul.f32 %v561, %v563
  %v565 = vadd.f32 %v561, %v564
  %vm566 = vweird.f32 %v560
  %vm567 = vweird.f32 %v561
  %vm568 = vmor %vm566, %vm567
  %v569 = vsel %vm568, %v561, %v565
  %v570 = vand.u32 2147483647, %v560
  %vm571 = vcmp.eq.f32.partialorder %v570, 8.507059e+37
  %v572 = vand.u32 %v560, 2147483648
  %v573 = vor.u32 1.1754944e-38, %v572
  %v574 = vsel %vm571, %v573, %v569
  %v575 = vmul.f32 1.0, %v574
  %v576 = vadd.f32 %v408, %v305
  %578 = vrot.lane.b32.xlu0 %v576, 64
  %v579 = vpop.permute.xlu0 %578
  %v581 = vmul.f32 %v575, %v579
  %583 = vrot.lane.b32.xlu0 %v581, 64
  %v584 = vpop.permute.xlu0 %583
  %v586 = vadd.f32 %v555, %v584
  %v587 = vtanh.pop %v586
  %v588 = vsub.f32 1.0, %v575
  %590 = vrot.lane.b32.xlu0 %v587, 96
  %v591 = vpop.permute.xlu0 %590
  %v593 = vmul.f32 %v588, %v591
  %v594 = vmul.f32 %v575, %v329
  %v595 = vadd.f32 %v593, %v594
  %597 = vrot.lane.b32.xlu0 %v595, 96
  %v598 = vpop.permute.xlu0 %597
  %s600 = scalar_lea.vmem %s7, 2
  %601 = vst.msk [vmem:[%s600] sm:$0x3] %vm334, %v598
  %v602 = vld [vmem:[%s4] sm:$0xff]
  %v603 = vld [vmem:[%s4 + $0x8] sm:$0xff]
  %v604 = vld [vmem:[%s4 + $0x10] sm:$0xff]
  %v605 = vld [vmem:[%s4 + $0x18] sm:$0xff]
  %606 = vmatpush.msra.mxu0 0.0
  %607 = vmatpush.msra.mxu0 0.0
  %608 = vmatpush.msra.mxu0 0.0
  %609 = vmatpush.msra.mxu0 0.0
  %610 = vmatpush.msra.mxu0 0.0
  %611 = vmatpush.msra.mxu0 0.0
  %612 = vmatpush.msra.mxu0 0.0
  %613 = vmatpush.msra.mxu0 0.0
  %614 = vmatpush.msra.mxu0 0.0
  %615 = vmatpush.msra.mxu0 0.0
  %616 = vmatpush.msra.mxu0 0.0
  %617 = vmatpush.msra.mxu0 0.0
  %618 = vmatpush.msra.mxu0 %v605
  %619 = vmatpush.msra.mxu0 %v604
  %620 = vmatpush.msra.mxu0 %v603
  %621 = vmatpush.msra.mxu0 %v602
  %622 = vmatmul.f32.gmra.mxu0 %v461
  %v623 = vpop.f32.mrf.mxu0
  %v624 = vadd.f32 0.0, %v623
  %625 = vdwg.mxu0
  %v626 = vld [vmem:[%s72] sm:$0xff]
  %v627 = vld [vmem:[%s72 + $0x8] sm:$0xff]
  %v628 = vld [vmem:[%s72 + $0x10] sm:$0xff]
  %v629 = vld [vmem:[%s72 + $0x18] sm:$0xff]
  %630 = vmatpush.msra.mxu0 0.0
  %631 = vmatpush.msra.mxu0 0.0
  %632 = vmatpush.msra.mxu0 0.0
  %633 = vmatpush.msra.mxu0 0.0
  %634 = vmatpush.msra.mxu0 0.0
  %635 = vmatpush.msra.mxu0 0.0
  %636 = vmatpush.msra.mxu0 0.0
  %637 = vmatpush.msra.mxu0 0.0
  %638 = vmatpush.msra.mxu0 0.0
  %639 = vmatpush.msra.mxu0 0.0
  %640 = vmatpush.msra.mxu0 0.0
  %641 = vmatpush.msra.mxu0 0.0
  %642 = vmatpush.msra.mxu0 %v629
  %643 = vmatpush.msra.mxu0 %v628
  %644 = vmatpush.msra.mxu0 %v627
  %645 = vmatpush.msra.mxu0 %v626
  %646 = vmatmul.f32.gmra.mxu0 %v533
  %v647 = vpop.f32.mrf.mxu0
  %v648 = vadd.f32 0.0, %v647
  %649 = vdwg.mxu0
  %v650 = vld [vmem:[%s100] sm:$0xff]
  %v651 = vld [vmem:[%s100 + $0x8] sm:$0xff]
  %v652 = vld [vmem:[%s100 + $0x10] sm:$0xff]
  %v653 = vld [vmem:[%s100 + $0x18] sm:$0xff]
  %v654 = vsel %vm48, %v598, 0
  %656 = vmatpush.msra.mxu0 0.0
  %657 = vmatpush.msra.mxu0 0.0
  %658 = vmatpush.msra.mxu0 0.0
  %659 = vmatpush.msra.mxu0 0.0
  %660 = vmatpush.msra.mxu0 0.0
  %661 = vmatpush.msra.mxu0 0.0
  %662 = vmatpush.msra.mxu0 0.0
  %663 = vmatpush.msra.mxu0 0.0
  %664 = vmatpush.msra.mxu0 0.0
  %665 = vmatpush.msra.mxu0 0.0
  %666 = vmatpush.msra.mxu0 0.0
  %667 = vmatpush.msra.mxu0 0.0
  %668 = vmatpush.msra.mxu0 %v653
  %669 = vmatpush.msra.mxu0 %v652
  %670 = vmatpush.msra.mxu0 %v651
  %671 = vmatpush.msra.mxu0 %v650
  %672 = vmatmul.f32.gmra.mxu0 %v654
  %v673 = vpop.f32.mrf.mxu0
  %v674 = vadd.f32 0.0, %v673
  %675 = vdwg.mxu0
  %s676 = scalar_lea.vmem %s0, 4
  %v677 = vld [vmem:[%s676] sm:$0x3]
  %v678 = vadd.f32 %v677, %v624
  %v679 = vxor.u32 %v678, 2147483648
  %v680 = vmul.f32 %v679, 1.442695
  %v681 = vpow.pop %v680
  %v682 = vadd.f32 %v681, 1.0
  %v683 = vrcp.pop %v682
  %v684 = vmul.f32 %v682, %v683
  %v685 = vsub.f32 1.0, %v684
  %v686 = vmul.f32 %v683, %v685
  %v687 = vadd.f32 %v683, %v686
  %vm688 = vweird.f32 %v682
  %vm689 = vweird.f32 %v683
  %vm690 = vmor %vm688, %vm689
  %v691 = vsel %vm690, %v683, %v687
  %v692 = vand.u32 2147483647, %v682
  %vm693 = vcmp.eq.f32.partialorder %v692, 8.507059e+37
  %v694 = vand.u32 %v682, 2147483648
  %v695 = vor.u32 1.1754944e-38, %v694
  %v696 = vsel %vm693, %v695, %v691
  %v697 = vmul.f32 1.0, %v696
  %v698 = vadd.f32 %v624, %v150
  %700 = vrot.lane.b32.xlu0 %v698, 64
  %v701 = vpop.permute.xlu0 %700
  %v703 = vmul.f32 %v697, %v701
  %705 = vrot.lane.b32.xlu0 %v703, 64
  %v706 = vpop.permute.xlu0 %705
  %v708 = vadd.f32 %v677, %v706
  %v709 = vtanh.pop %v708
  %v710 = vsub.f32 1.0, %v697
  %712 = vrot.lane.b32.xlu0 %v709, 96
  %v713 = vpop.permute.xlu0 %712
  %v715 = vmul.f32 %v710, %v713
  %v716 = vmul.f32 %v697, %v451
  %v717 = vadd.f32 %v715, %v716
  %s718 = scalar_lea.vmem %s1, 4
  %v719 = vld [vmem:[%s718] sm:$0x3]
  %v720 = vld [vmem:[%s5] sm:$0xff]
  %v721 = vld [vmem:[%s5 + $0x8] sm:$0xff]
  %v722 = vld [vmem:[%s5 + $0x10] sm:$0xff]
  %v723 = vld [vmem:[%s5 + $0x18] sm:$0xff]
  %725 = vrot.lane.b32.xlu0 %v717, 96
  %v726 = vpop.permute.xlu0 %725
  %v727 = vsel %vm48, %v726, 0
  %729 = vmatpush.msra.mxu0 0.0
  %730 = vmatpush.msra.mxu0 0.0
  %731 = vmatpush.msra.mxu0 0.0
  %732 = vmatpush.msra.mxu0 0.0
  %733 = vmatpush.msra.mxu0 0.0
  %734 = vmatpush.msra.mxu0 0.0
  %735 = vmatpush.msra.mxu0 0.0
  %736 = vmatpush.msra.mxu0 0.0
  %737 = vmatpush.msra.mxu0 0.0
  %738 = vmatpush.msra.mxu0 0.0
  %739 = vmatpush.msra.mxu0 0.0
  %740 = vmatpush.msra.mxu0 0.0
  %741 = vmatpush.msra.mxu0 %v723
  %742 = vmatpush.msra.mxu0 %v722
  %743 = vmatpush.msra.mxu0 %v721
  %744 = vmatpush.msra.mxu0 %v720
  %745 = vmatmul.f32.gmra.mxu0 %v727
  %v746 = vpop.f32.mrf.mxu0
  %v747 = vadd.f32 0.0, %v746
  %748 = vdwg.mxu0
  %v749 = vadd.f32 %v719, %v747
  %v750 = vadd.f32 %v749, %v648
  %v751 = vxor.u32 %v750, 2147483648
  %v752 = vmul.f32 %v751, 1.442695
  %v753 = vpow.pop %v752
  %v754 = vadd.f32 %v753, 1.0
  %v755 = vrcp.pop %v754
  %v756 = vmul.f32 %v754, %v755
  %v757 = vsub.f32 1.0, %v756
  %v758 = vmul.f32 %v755, %v757
  %v759 = vadd.f32 %v755, %v758
  %vm760 = vweird.f32 %v754
  %vm761 = vweird.f32 %v755
  %vm762 = vmor %vm760, %vm761
  %v763 = vsel %vm762, %v755, %v759
  %v764 = vand.u32 2147483647, %v754
  %vm765 = vcmp.eq.f32.partialorder %v764, 8.507059e+37
  %v766 = vand.u32 %v754, 2147483648
  %v767 = vor.u32 1.1754944e-38, %v766
  %v768 = vsel %vm765, %v767, %v763
  %v769 = vmul.f32 1.0, %v768
  %v770 = vadd.f32 %v648, %v227
  %772 = vrot.lane.b32.xlu0 %v770, 64
  %v773 = vpop.permute.xlu0 %772
  %v775 = vmul.f32 %v769, %v773
  %777 = vrot.lane.b32.xlu0 %v775, 64
  %v778 = vpop.permute.xlu0 %777
  %v780 = vadd.f32 %v749, %v778
  %v781 = vtanh.pop %v780
  %v782 = vsub.f32 1.0, %v769
  %784 = vrot.lane.b32.xlu0 %v781, 96
  %v785 = vpop.permute.xlu0 %784
  %v787 = vmul.f32 %v782, %v785
  %v788 = vmul.f32 %v769, %v523
  %v789 = vadd.f32 %v787, %v788
  %s790 = scalar_lea.vmem %s2, 4
  %v791 = vld [vmem:[%s790] sm:$0x3]
  %v792 = vld [vmem:[%s253] sm:$0xff]
  %v793 = vld [vmem:[%s253 + $0x8] sm:$0xff]
  %v794 = vld [vmem:[%s253 + $0x10] sm:$0xff]
  %v795 = vld [vmem:[%s253 + $0x18] sm:$0xff]
  %797 = vrot.lane.b32.xlu0 %v789, 96
  %v798 = vpop.permute.xlu0 %797
  %v799 = vsel %vm48, %v798, 0
  %801 = vmatpush.msra.mxu0 0.0
  %802 = vmatpush.msra.mxu0 0.0
  %803 = vmatpush.msra.mxu0 0.0
  %804 = vmatpush.msra.mxu0 0.0
  %805 = vmatpush.msra.mxu0 0.0
  %806 = vmatpush.msra.mxu0 0.0
  %807 = vmatpush.msra.mxu0 0.0
  %808 = vmatpush.msra.mxu0 0.0
  %809 = vmatpush.msra.mxu0 0.0
  %810 = vmatpush.msra.mxu0 0.0
  %811 = vmatpush.msra.mxu0 0.0
  %812 = vmatpush.msra.mxu0 0.0
  %813 = vmatpush.msra.mxu0 %v795
  %814 = vmatpush.msra.mxu0 %v794
  %815 = vmatpush.msra.mxu0 %v793
  %816 = vmatpush.msra.mxu0 %v792
  %817 = vmatmul.f32.gmra.mxu0 %v799
  %v818 = vpop.f32.mrf.mxu0
  %v819 = vadd.f32 0.0, %v818
  %820 = vdwg.mxu0
  %v821 = vadd.f32 %v791, %v819
  %v822 = vadd.f32 %v821, %v674
  %v823 = vxor.u32 %v822, 2147483648
  %v824 = vmul.f32 %v823, 1.442695
  %v825 = vpow.pop %v824
  %v826 = vadd.f32 %v825, 1.0
  %v827 = vrcp.pop %v826
  %v828 = vmul.f32 %v826, %v827
  %v829 = vsub.f32 1.0, %v828
  %v830 = vmul.f32 %v827, %v829
  %v831 = vadd.f32 %v827, %v830
  %vm832 = vweird.f32 %v826
  %vm833 = vweird.f32 %v827
  %vm834 = vmor %vm832, %vm833
  %v835 = vsel %vm834, %v827, %v831
  %v836 = vand.u32 2147483647, %v826
  %vm837 = vcmp.eq.f32.partialorder %v836, 8.507059e+37
  %v838 = vand.u32 %v826, 2147483648
  %v839 = vor.u32 1.1754944e-38, %v838
  %v840 = vsel %vm837, %v839, %v835
  %v841 = vmul.f32 1.0, %v840
  %v842 = vadd.f32 %v674, %v305
  %844 = vrot.lane.b32.xlu0 %v842, 64
  %v845 = vpop.permute.xlu0 %844
  %v847 = vmul.f32 %v841, %v845
  %849 = vrot.lane.b32.xlu0 %v847, 64
  %v850 = vpop.permute.xlu0 %849
  %v852 = vadd.f32 %v821, %v850
  %v853 = vtanh.pop %v852
  %v854 = vsub.f32 1.0, %v841
  %856 = vrot.lane.b32.xlu0 %v853, 96
  %v857 = vpop.permute.xlu0 %856
  %v859 = vmul.f32 %v854, %v857
  %v860 = vmul.f32 %v841, %v595
  %v861 = vadd.f32 %v859, %v860
  %863 = vrot.lane.b32.xlu0 %v861, 96
  %v864 = vpop.permute.xlu0 %863
  %s866 = scalar_lea.vmem %s7, 4
  %867 = vst.msk [vmem:[%s866] sm:$0x3] %vm334, %v864
  %v868 = vld [vmem:[%s4] sm:$0xff]
  %v869 = vld [vmem:[%s4 + $0x8] sm:$0xff]
  %v870 = vld [vmem:[%s4 + $0x10] sm:$0xff]
  %v871 = vld [vmem:[%s4 + $0x18] sm:$0xff]
  %872 = vmatpush.msra.mxu0 0.0
  %873 = vmatpush.msra.mxu0 0.0
  %874 = vmatpush.msra.mxu0 0.0
  %875 = vmatpush.msra.mxu0 0.0
  %876 = vmatpush.msra.mxu0 0.0
  %877 = vmatpush.msra.mxu0 0.0
  %878 = vmatpush.msra.mxu0 0.0
  %879 = vmatpush.msra.mxu0 0.0
  %880 = vmatpush.msra.mxu0 0.0
  %881 = vmatpush.msra.mxu0 0.0
  %882 = vmatpush.msra.mxu0 0.0
  %883 = vmatpush.msra.mxu0 0.0
  %884 = vmatpush.msra.mxu0 %v871
  %885 = vmatpush.msra.mxu0 %v870
  %886 = vmatpush.msra.mxu0 %v869
  %887 = vmatpush.msra.mxu0 %v868
  %888 = vmatmul.f32.gmra.mxu0 %v727
  %v889 = vpop.f32.mrf.mxu0
  %v890 = vadd.f32 0.0, %v889
  %891 = vdwg.mxu0
  %v892 = vld [vmem:[%s72] sm:$0xff]
  %v893 = vld [vmem:[%s72 + $0x8] sm:$0xff]
  %v894 = vld [vmem:[%s72 + $0x10] sm:$0xff]
  %v895 = vld [vmem:[%s72 + $0x18] sm:$0xff]
  %896 = vmatpush.msra.mxu0 0.0
  %897 = vmatpush.msra.mxu0 0.0
  %898 = vmatpush.msra.mxu0 0.0
  %899 = vmatpush.msra.mxu0 0.0
  %900 = vmatpush.msra.mxu0 0.0
  %901 = vmatpush.msra.mxu0 0.0
  %902 = vmatpush.msra.mxu0 0.0
  %903 = vmatpush.msra.mxu0 0.0
  %904 = vmatpush.msra.mxu0 0.0
  %905 = vmatpush.msra.mxu0 0.0
  %906 = vmatpush.msra.mxu0 0.0
  %907 = vmatpush.msra.mxu0 0.0
  %908 = vmatpush.msra.mxu0 %v895
  %909 = vmatpush.msra.mxu0 %v894
  %910 = vmatpush.msra.mxu0 %v893
  %911 = vmatpush.msra.mxu0 %v892
  %912 = vmatmul.f32.gmra.mxu0 %v799
  %v913 = vpop.f32.mrf.mxu0
  %v914 = vadd.f32 0.0, %v913
  %915 = vdwg.mxu0
  %v916 = vld [vmem:[%s100] sm:$0xff]
  %v917 = vld [vmem:[%s100 + $0x8] sm:$0xff]
  %v918 = vld [vmem:[%s100 + $0x10] sm:$0xff]
  %v919 = vld [vmem:[%s100 + $0x18] sm:$0xff]
  %v920 = vsel %vm48, %v864, 0
  %922 = vmatpush.msra.mxu0 0.0
  %923 = vmatpush.msra.mxu0 0.0
  %924 = vmatpush.msra.mxu0 0.0
  %925 = vmatpush.msra.mxu0 0.0
  %926 = vmatpush.msra.mxu0 0.0
  %927 = vmatpush.msra.mxu0 0.0
  %928 = vmatpush.msra.mxu0 0.0
  %929 = vmatpush.msra.mxu0 0.0
  %930 = vmatpush.msra.mxu0 0.0
  %931 = vmatpush.msra.mxu0 0.0
  %932 = vmatpush.msra.mxu0 0.0
  %933 = vmatpush.msra.mxu0 0.0
  %934 = vmatpush.msra.mxu0 %v919
  %935 = vmatpush.msra.mxu0 %v918
  %936 = vmatpush.msra.mxu0 %v917
  %937 = vmatpush.msra.mxu0 %v916
  %938 = vmatmul.f32.gmra.mxu0 %v920
  %v939 = vpop.f32.mrf.mxu0
  %v940 = vadd.f32 0.0, %v939
  %941 = vdwg.mxu0
  %s942 = scalar_lea.vmem %s0, 6
  %v943 = vld [vmem:[%s942] sm:$0x3]
  %v944 = vadd.f32 %v943, %v890
  %v945 = vxor.u32 %v944, 2147483648
  %v946 = vmul.f32 %v945, 1.442695
  %v947 = vpow.pop %v946
  %v948 = vadd.f32 %v947, 1.0
  %v949 = vrcp.pop %v948
  %v950 = vmul.f32 %v948, %v949
  %v951 = vsub.f32 1.0, %v950
  %v952 = vmul.f32 %v949, %v951
  %v953 = vadd.f32 %v949, %v952
  %vm954 = vweird.f32 %v948
  %vm955 = vweird.f32 %v949
  %vm956 = vmor %vm954, %vm955
  %v957 = vsel %vm956, %v949, %v953
  %v958 = vand.u32 2147483647, %v948
  %vm959 = vcmp.eq.f32.partialorder %v958, 8.507059e+37
  %v960 = vand.u32 %v948, 2147483648
  %v961 = vor.u32 1.1754944e-38, %v960
  %v962 = vsel %vm959, %v961, %v957
  %v963 = vmul.f32 1.0, %v962
  %v964 = vadd.f32 %v890, %v150
  %966 = vrot.lane.b32.xlu0 %v964, 64
  %v967 = vpop.permute.xlu0 %966
  %v969 = vmul.f32 %v963, %v967
  %971 = vrot.lane.b32.xlu0 %v969, 64
  %v972 = vpop.permute.xlu0 %971
  %v974 = vadd.f32 %v943, %v972
  %v975 = vtanh.pop %v974
  %v976 = vsub.f32 1.0, %v963
  %978 = vrot.lane.b32.xlu0 %v975, 96
  %v979 = vpop.permute.xlu0 %978
  %v981 = vmul.f32 %v976, %v979
  %v982 = vmul.f32 %v963, %v717
  %v983 = vadd.f32 %v981, %v982
  %s984 = scalar_lea.vmem %s1, 6
  %v985 = vld [vmem:[%s984] sm:$0x3]
  %v986 = vld [vmem:[%s5] sm:$0xff]
  %v987 = vld [vmem:[%s5 + $0x8] sm:$0xff]
  %v988 = vld [vmem:[%s5 + $0x10] sm:$0xff]
  %v989 = vld [vmem:[%s5 + $0x18] sm:$0xff]
  %991 = vrot.lane.b32.xlu0 %v983, 96
  %v992 = vpop.permute.xlu0 %991
  %v993 = vsel %vm48, %v992, 0
  %995 = vmatpush.msra.mxu0 0.0
  %996 = vmatpush.msra.mxu0 0.0
  %997 = vmatpush.msra.mxu0 0.0
  %998 = vmatpush.msra.mxu0 0.0
  %999 = vmatpush.msra.mxu0 0.0
  %1000 = vmatpush.msra.mxu0 0.0
  %1001 = vmatpush.msra.mxu0 0.0
  %1002 = vmatpush.msra.mxu0 0.0
  %1003 = vmatpush.msra.mxu0 0.0
  %1004 = vmatpush.msra.mxu0 0.0
  %1005 = vmatpush.msra.mxu0 0.0
  %1006 = vmatpush.msra.mxu0 0.0
  %1007 = vmatpush.msra.mxu0 %v989
  %1008 = vmatpush.msra.mxu0 %v988
  %1009 = vmatpush.msra.mxu0 %v987
  %1010 = vmatpush.msra.mxu0 %v986
  %1011 = vmatmul.f32.gmra.mxu0 %v993
  %v1012 = vpop.f32.mrf.mxu0
  %v1013 = vadd.f32 0.0, %v1012
  %1014 = vdwg.mxu0
  %v1015 = vadd.f32 %v985, %v1013
  %v1016 = vadd.f32 %v1015, %v914
  %v1017 = vxor.u32 %v1016, 2147483648
  %v1018 = vmul.f32 %v1017, 1.442695
  %v1019 = vpow.pop %v1018
  %v1020 = vadd.f32 %v1019, 1.0
  %v1021 = vrcp.pop %v1020
  %v1022 = vmul.f32 %v1020, %v1021
  %v1023 = vsub.f32 1.0, %v1022
  %v1024 = vmul.f32 %v1021, %v1023
  %v1025 = vadd.f32 %v1021, %v1024
  %vm1026 = vweird.f32 %v1020
  %vm1027 = vweird.f32 %v1021
  %vm1028 = vmor %vm1026, %vm1027
  %v1029 = vsel %vm1028, %v1021, %v1025
  %v1030 = vand.u32 2147483647, %v1020
  %vm1031 = vcmp.eq.f32.partialorder %v1030, 8.507059e+37
  %v1032 = vand.u32 %v1020, 2147483648
  %v1033 = vor.u32 1.1754944e-38, %v1032
  %v1034 = vsel %vm1031, %v1033, %v1029
  %v1035 = vmul.f32 1.0, %v1034
  %v1036 = vadd.f32 %v914, %v227
  %1038 = vrot.lane.b32.xlu0 %v1036, 64
  %v1039 = vpop.permute.xlu0 %1038
  %v1041 = vmul.f32 %v1035, %v1039
  %1043 = vrot.lane.b32.xlu0 %v1041, 64
  %v1044 = vpop.permute.xlu0 %1043
  %v1046 = vadd.f32 %v1015, %v1044
  %v1047 = vtanh.pop %v1046
  %v1048 = vsub.f32 1.0, %v1035
  %1050 = vrot.lane.b32.xlu0 %v1047, 96
  %v1051 = vpop.permute.xlu0 %1050
  %v1053 = vmul.f32 %v1048, %v1051
  %v1054 = vmul.f32 %v1035, %v789
  %v1055 = vadd.f32 %v1053, %v1054
  %s1056 = scalar_lea.vmem %s2, 6
  %v1057 = vld [vmem:[%s1056] sm:$0x3]
  %v1058 = vld [vmem:[%s253] sm:$0xff]
  %v1059 = vld [vmem:[%s253 + $0x8] sm:$0xff]
  %v1060 = vld [vmem:[%s253 + $0x10] sm:$0xff]
  %v1061 = vld [vmem:[%s253 + $0x18] sm:$0xff]
  %1063 = vrot.lane.b32.xlu0 %v1055, 96
  %v1064 = vpop.permute.xlu0 %1063
  %v1065 = vsel %vm48, %v1064, 0
  %1067 = vmatpush.msra.mxu0 0.0
  %1068 = vmatpush.msra.mxu0 0.0
  %1069 = vmatpush.msra.mxu0 0.0
  %1070 = vmatpush.msra.mxu0 0.0
  %1071 = vmatpush.msra.mxu0 0.0
  %1072 = vmatpush.msra.mxu0 0.0
  %1073 = vmatpush.msra.mxu0 0.0
  %1074 = vmatpush.msra.mxu0 0.0
  %1075 = vmatpush.msra.mxu0 0.0
  %1076 = vmatpush.msra.mxu0 0.0
  %1077 = vmatpush.msra.mxu0 0.0
  %1078 = vmatpush.msra.mxu0 0.0
  %1079 = vmatpush.msra.mxu0 %v1061
  %1080 = vmatpush.msra.mxu0 %v1060
  %1081 = vmatpush.msra.mxu0 %v1059
  %1082 = vmatpush.msra.mxu0 %v1058
  %1083 = vmatmul.f32.gmra.mxu0 %v1065
  %v1084 = vpop.f32.mrf.mxu0
  %v1085 = vadd.f32 0.0, %v1084
  %1086 = vdwg.mxu0
  %v1087 = vadd.f32 %v1057, %v1085
  %v1088 = vadd.f32 %v1087, %v940
  %v1089 = vxor.u32 %v1088, 2147483648
  %v1090 = vmul.f32 %v1089, 1.442695
  %v1091 = vpow.pop %v1090
  %v1092 = vadd.f32 %v1091, 1.0
  %v1093 = vrcp.pop %v1092
  %v1094 = vmul.f32 %v1092, %v1093
  %v1095 = vsub.f32 1.0, %v1094
  %v1096 = vmul.f32 %v1093, %v1095
  %v1097 = vadd.f32 %v1093, %v1096
  %vm1098 = vweird.f32 %v1092
  %vm1099 = vweird.f32 %v1093
  %vm1100 = vmor %vm1098, %vm1099
  %v1101 = vsel %vm1100, %v1093, %v1097
  %v1102 = vand.u32 2147483647, %v1092
  %vm1103 = vcmp.eq.f32.partialorder %v1102, 8.507059e+37
  %v1104 = vand.u32 %v1092, 2147483648
  %v1105 = vor.u32 1.1754944e-38, %v1104
  %v1106 = vsel %vm1103, %v1105, %v1101
  %v1107 = vmul.f32 1.0, %v1106
  %v1108 = vadd.f32 %v940, %v305
  %1110 = vrot.lane.b32.xlu0 %v1108, 64
  %v1111 = vpop.permute.xlu0 %1110
  %v1113 = vmul.f32 %v1107, %v1111
  %1115 = vrot.lane.b32.xlu0 %v1113, 64
  %v1116 = vpop.permute.xlu0 %1115
  %v1118 = vadd.f32 %v1087, %v1116
  %v1119 = vtanh.pop %v1118
  %v1120 = vsub.f32 1.0, %v1107
  %1122 = vrot.lane.b32.xlu0 %v1119, 96
  %v1123 = vpop.permute.xlu0 %1122
  %v1125 = vmul.f32 %v1120, %v1123
  %v1126 = vmul.f32 %v1107, %v861
  %v1127 = vadd.f32 %v1125, %v1126
  %1129 = vrot.lane.b32.xlu0 %v1127, 96
  %v1130 = vpop.permute.xlu0 %1129
  %s1132 = scalar_lea.vmem %s7, 6
  %1133 = vst.msk [vmem:[%s1132] sm:$0x3] %vm334, %v1130
  %v1134 = vld [vmem:[%s4] sm:$0xff]
  %v1135 = vld [vmem:[%s4 + $0x8] sm:$0xff]
  %v1136 = vld [vmem:[%s4 + $0x10] sm:$0xff]
  %v1137 = vld [vmem:[%s4 + $0x18] sm:$0xff]
  %1138 = vmatpush.msra.mxu0 0.0
  %1139 = vmatpush.msra.mxu0 0.0
  %1140 = vmatpush.msra.mxu0 0.0
  %1141 = vmatpush.msra.mxu0 0.0
  %1142 = vmatpush.msra.mxu0 0.0
  %1143 = vmatpush.msra.mxu0 0.0
  %1144 = vmatpush.msra.mxu0 0.0
  %1145 = vmatpush.msra.mxu0 0.0
  %1146 = vmatpush.msra.mxu0 0.0
  %1147 = vmatpush.msra.mxu0 0.0
  %1148 = vmatpush.msra.mxu0 0.0
  %1149 = vmatpush.msra.mxu0 0.0
  %1150 = vmatpush.msra.mxu0 %v1137
  %1151 = vmatpush.msra.mxu0 %v1136
  %1152 = vmatpush.msra.mxu0 %v1135
  %1153 = vmatpush.msra.mxu0 %v1134
  %1154 = vmatmul.f32.gmra.mxu0 %v993
  %v1155 = vpop.f32.mrf.mxu0
  %v1156 = vadd.f32 0.0, %v1155
  %1157 = vdwg.mxu0
  %v1158 = vld [vmem:[%s72] sm:$0xff]
  %v1159 = vld [vmem:[%s72 + $0x8] sm:$0xff]
  %v1160 = vld [vmem:[%s72 + $0x10] sm:$0xff]
  %v1161 = vld [vmem:[%s72 + $0x18] sm:$0xff]
  %1162 = vmatpush.msra.mxu0 0.0
  %1163 = vmatpush.msra.mxu0 0.0
  %1164 = vmatpush.msra.mxu0 0.0
  %1165 = vmatpush.msra.mxu0 0.0
  %1166 = vmatpush.msra.mxu0 0.0
  %1167 = vmatpush.msra.mxu0 0.0
  %1168 = vmatpush.msra.mxu0 0.0
  %1169 = vmatpush.msra.mxu0 0.0
  %1170 = vmatpush.msra.mxu0 0.0
  %1171 = vmatpush.msra.mxu0 0.0
  %1172 = vmatpush.msra.mxu0 0.0
  %1173 = vmatpush.msra.mxu0 0.0
  %1174 = vmatpush.msra.mxu0 %v1161
  %1175 = vmatpush.msra.mxu0 %v1160
  %1176 = vmatpush.msra.mxu0 %v1159
  %1177 = vmatpush.msra.mxu0 %v1158
  %1178 = vmatmul.f32.gmra.mxu0 %v1065
  %v1179 = vpop.f32.mrf.mxu0
  %v1180 = vadd.f32 0.0, %v1179
  %1181 = vdwg.mxu0
  %v1182 = vld [vmem:[%s100] sm:$0xff]
  %v1183 = vld [vmem:[%s100 + $0x8] sm:$0xff]
  %v1184 = vld [vmem:[%s100 + $0x10] sm:$0xff]
  %v1185 = vld [vmem:[%s100 + $0x18] sm:$0xff]
  %v1186 = vsel %vm48, %v1130, 0
  %1188 = vmatpush.msra.mxu0 0.0
  %1189 = vmatpush.msra.mxu0 0.0
  %1190 = vmatpush.msra.mxu0 0.0
  %1191 = vmatpush.msra.mxu0 0.0
  %1192 = vmatpush.msra.mxu0 0.0
  %1193 = vmatpush.msra.mxu0 0.0
  %1194 = vmatpush.msra.mxu0 0.0
  %1195 = vmatpush.msra.mxu0 0.0
  %1196 = vmatpush.msra.mxu0 0.0
  %1197 = vmatpush.msra.mxu0 0.0
  %1198 = vmatpush.msra.mxu0 0.0
  %1199 = vmatpush.msra.mxu0 0.0
  %1200 = vmatpush.msra.mxu0 %v1185
  %1201 = vmatpush.msra.mxu0 %v1184
  %1202 = vmatpush.msra.mxu0 %v1183
  %1203 = vmatpush.msra.mxu0 %v1182
  %1204 = vmatmul.f32.gmra.mxu0 %v1186
  %v1205 = vpop.f32.mrf.mxu0
  %v1206 = vadd.f32 0.0, %v1205
  %1207 = vdwg.mxu0
  %s1208 = scalar_lea.vmem %s0, 8
  %v1209 = vld [vmem:[%s1208] sm:$0x3]
  %v1210 = vadd.f32 %v1209, %v1156
  %v1211 = vxor.u32 %v1210, 2147483648
  %v1212 = vmul.f32 %v1211, 1.442695
  %v1213 = vpow.pop %v1212
  %v1214 = vadd.f32 %v1213, 1.0
  %v1215 = vrcp.pop %v1214
  %v1216 = vmul.f32 %v1214, %v1215
  %v1217 = vsub.f32 1.0, %v1216
  %v1218 = vmul.f32 %v1215, %v1217
  %v1219 = vadd.f32 %v1215, %v1218
  %vm1220 = vweird.f32 %v1214
  %vm1221 = vweird.f32 %v1215
  %vm1222 = vmor %vm1220, %vm1221
  %v1223 = vsel %vm1222, %v1215, %v1219
  %v1224 = vand.u32 2147483647, %v1214
  %vm1225 = vcmp.eq.f32.partialorder %v1224, 8.507059e+37
  %v1226 = vand.u32 %v1214, 2147483648
  %v1227 = vor.u32 1.1754944e-38, %v1226
  %v1228 = vsel %vm1225, %v1227, %v1223
  %v1229 = vmul.f32 1.0, %v1228
  %v1230 = vadd.f32 %v1156, %v150
  %1232 = vrot.lane.b32.xlu0 %v1230, 64
  %v1233 = vpop.permute.xlu0 %1232
  %v1235 = vmul.f32 %v1229, %v1233
  %1237 = vrot.lane.b32.xlu0 %v1235, 64
  %v1238 = vpop.permute.xlu0 %1237
  %v1240 = vadd.f32 %v1209, %v1238
  %v1241 = vtanh.pop %v1240
  %v1242 = vsub.f32 1.0, %v1229
  %1244 = vrot.lane.b32.xlu0 %v1241, 96
  %v1245 = vpop.permute.xlu0 %1244
  %v1247 = vmul.f32 %v1242, %v1245
  %v1248 = vmul.f32 %v1229, %v983
  %v1249 = vadd.f32 %v1247, %v1248
  %s1250 = scalar_lea.vmem %s1, 8
  %v1251 = vld [vmem:[%s1250] sm:$0x3]
  %v1252 = vld [vmem:[%s5] sm:$0xff]
  %v1253 = vld [vmem:[%s5 + $0x8] sm:$0xff]
  %v1254 = vld [vmem:[%s5 + $0x10] sm:$0xff]
  %v1255 = vld [vmem:[%s5 + $0x18] sm:$0xff]
  %1257 = vrot.lane.b32.xlu0 %v1249, 96
  %v1258 = vpop.permute.xlu0 %1257
  %v1259 = vsel %vm48, %v1258, 0
  %1261 = vmatpush.msra.mxu0 0.0
  %1262 = vmatpush.msra.mxu0 0.0
  %1263 = vmatpush.msra.mxu0 0.0
  %1264 = vmatpush.msra.mxu0 0.0
  %1265 = vmatpush.msra.mxu0 0.0
  %1266 = vmatpush.msra.mxu0 0.0
  %1267 = vmatpush.msra.mxu0 0.0
  %1268 = vmatpush.msra.mxu0 0.0
  %1269 = vmatpush.msra.mxu0 0.0
  %1270 = vmatpush.msra.mxu0 0.0
  %1271 = vmatpush.msra.mxu0 0.0
  %1272 = vmatpush.msra.mxu0 0.0
  %1273 = vmatpush.msra.mxu0 %v1255
  %1274 = vmatpush.msra.mxu0 %v1254
  %1275 = vmatpush.msra.mxu0 %v1253
  %1276 = vmatpush.msra.mxu0 %v1252
  %1277 = vmatmul.f32.gmra.mxu0 %v1259
  %v1278 = vpop.f32.mrf.mxu0
  %v1279 = vadd.f32 0.0, %v1278
  %1280 = vdwg.mxu0
  %v1281 = vadd.f32 %v1251, %v1279
  %v1282 = vadd.f32 %v1281, %v1180
  %v1283 = vxor.u32 %v1282, 2147483648
  %v1284 = vmul.f32 %v1283, 1.442695
  %v1285 = vpow.pop %v1284
  %v1286 = vadd.f32 %v1285, 1.0
  %v1287 = vrcp.pop %v1286
  %v1288 = vmul.f32 %v1286, %v1287
  %v1289 = vsub.f32 1.0, %v1288
  %v1290 = vmul.f32 %v1287, %v1289
  %v1291 = vadd.f32 %v1287, %v1290
  %vm1292 = vweird.f32 %v1286
  %vm1293 = vweird.f32 %v1287
  %vm1294 = vmor %vm1292, %vm1293
  %v1295 = vsel %vm1294, %v1287, %v1291
  %v1296 = vand.u32 2147483647, %v1286
  %vm1297 = vcmp.eq.f32.partialorder %v1296, 8.507059e+37
  %v1298 = vand.u32 %v1286, 2147483648
  %v1299 = vor.u32 1.1754944e-38, %v1298
  %v1300 = vsel %vm1297, %v1299, %v1295
  %v1301 = vmul.f32 1.0, %v1300
  %v1302 = vadd.f32 %v1180, %v227
  %1304 = vrot.lane.b32.xlu0 %v1302, 64
  %v1305 = vpop.permute.xlu0 %1304
  %v1307 = vmul.f32 %v1301, %v1305
  %1309 = vrot.lane.b32.xlu0 %v1307, 64
  %v1310 = vpop.permute.xlu0 %1309
  %v1312 = vadd.f32 %v1281, %v1310
  %v1313 = vtanh.pop %v1312
  %v1314 = vsub.f32 1.0, %v1301
  %1316 = vrot.lane.b32.xlu0 %v1313, 96
  %v1317 = vpop.permute.xlu0 %1316
  %v1319 = vmul.f32 %v1314, %v1317
  %v1320 = vmul.f32 %v1301, %v1055
  %v1321 = vadd.f32 %v1319, %v1320
  %s1322 = scalar_lea.vmem %s2, 8
  %v1323 = vld [vmem:[%s1322] sm:$0x3]
  %v1324 = vld [vmem:[%s253] sm:$0xff]
  %v1325 = vld [vmem:[%s253 + $0x8] sm:$0xff]
  %v1326 = vld [vmem:[%s253 + $0x10] sm:$0xff]
  %v1327 = vld [vmem:[%s253 + $0x18] sm:$0xff]
  %1329 = vrot.lane.b32.xlu0 %v1321, 96
  %v1330 = vpop.permute.xlu0 %1329
  %v1331 = vsel %vm48, %v1330, 0
  %1333 = vmatpush.msra.mxu0 0.0
  %1334 = vmatpush.msra.mxu0 0.0
  %1335 = vmatpush.msra.mxu0 0.0
  %1336 = vmatpush.msra.mxu0 0.0
  %1337 = vmatpush.msra.mxu0 0.0
  %1338 = vmatpush.msra.mxu0 0.0
  %1339 = vmatpush.msra.mxu0 0.0
  %1340 = vmatpush.msra.mxu0 0.0
  %1341 = vmatpush.msra.mxu0 0.0
  %1342 = vmatpush.msra.mxu0 0.0
  %1343 = vmatpush.msra.mxu0 0.0
  %1344 = vmatpush.msra.mxu0 0.0
  %1345 = vmatpush.msra.mxu0 %v1327
  %1346 = vmatpush.msra.mxu0 %v1326
  %1347 = vmatpush.msra.mxu0 %v1325
  %1348 = vmatpush.msra.mxu0 %v1324
  %1349 = vmatmul.f32.gmra.mxu0 %v1331
  %v1350 = vpop.f32.mrf.mxu0
  %v1351 = vadd.f32 0.0, %v1350
  %1352 = vdwg.mxu0
  %v1353 = vadd.f32 %v1323, %v1351
  %v1354 = vadd.f32 %v1353, %v1206
  %v1355 = vxor.u32 %v1354, 2147483648
  %v1356 = vmul.f32 %v1355, 1.442695
  %v1357 = vpow.pop %v1356
  %v1358 = vadd.f32 %v1357, 1.0
  %v1359 = vrcp.pop %v1358
  %v1360 = vmul.f32 %v1358, %v1359
  %v1361 = vsub.f32 1.0, %v1360
  %v1362 = vmul.f32 %v1359, %v1361
  %v1363 = vadd.f32 %v1359, %v1362
  %vm1364 = vweird.f32 %v1358
  %vm1365 = vweird.f32 %v1359
  %vm1366 = vmor %vm1364, %vm1365
  %v1367 = vsel %vm1366, %v1359, %v1363
  %v1368 = vand.u32 2147483647, %v1358
  %vm1369 = vcmp.eq.f32.partialorder %v1368, 8.507059e+37
  %v1370 = vand.u32 %v1358, 2147483648
  %v1371 = vor.u32 1.1754944e-38, %v1370
  %v1372 = vsel %vm1369, %v1371, %v1367
  %v1373 = vmul.f32 1.0, %v1372
  %v1374 = vadd.f32 %v1206, %v305
  %1376 = vrot.lane.b32.xlu0 %v1374, 64
  %v1377 = vpop.permute.xlu0 %1376
  %v1379 = vmul.f32 %v1373, %v1377
  %1381 = vrot.lane.b32.xlu0 %v1379, 64
  %v1382 = vpop.permute.xlu0 %1381
  %v1384 = vadd.f32 %v1353, %v1382
  %v1385 = vtanh.pop %v1384
  %v1386 = vsub.f32 1.0, %v1373
  %1388 = vrot.lane.b32.xlu0 %v1385, 96
  %v1389 = vpop.permute.xlu0 %1388
  %v1391 = vmul.f32 %v1386, %v1389
  %v1392 = vmul.f32 %v1373, %v1127
  %v1393 = vadd.f32 %v1391, %v1392
  %1395 = vrot.lane.b32.xlu0 %v1393, 96
  %v1396 = vpop.permute.xlu0 %1395
  %s1398 = scalar_lea.vmem %s7, 8
  %1399 = vst.msk [vmem:[%s1398] sm:$0x3] %vm334, %v1396
  %v1400 = vld [vmem:[%s4] sm:$0xff]
  %v1401 = vld [vmem:[%s4 + $0x8] sm:$0xff]
  %v1402 = vld [vmem:[%s4 + $0x10] sm:$0xff]
  %v1403 = vld [vmem:[%s4 + $0x18] sm:$0xff]
  %1404 = vmatpush.msra.mxu0 0.0
  %1405 = vmatpush.msra.mxu0 0.0
  %1406 = vmatpush.msra.mxu0 0.0
  %1407 = vmatpush.msra.mxu0 0.0
  %1408 = vmatpush.msra.mxu0 0.0
  %1409 = vmatpush.msra.mxu0 0.0
  %1410 = vmatpush.msra.mxu0 0.0
  %1411 = vmatpush.msra.mxu0 0.0
  %1412 = vmatpush.msra.mxu0 0.0
  %1413 = vmatpush.msra.mxu0 0.0
  %1414 = vmatpush.msra.mxu0 0.0
  %1415 = vmatpush.msra.mxu0 0.0
  %1416 = vmatpush.msra.mxu0 %v1403
  %1417 = vmatpush.msra.mxu0 %v1402
  %1418 = vmatpush.msra.mxu0 %v1401
  %1419 = vmatpush.msra.mxu0 %v1400
  %1420 = vmatmul.f32.gmra.mxu0 %v1259
  %v1421 = vpop.f32.mrf.mxu0
  %v1422 = vadd.f32 0.0, %v1421
  %1423 = vdwg.mxu0
  %v1424 = vld [vmem:[%s72] sm:$0xff]
  %v1425 = vld [vmem:[%s72 + $0x8] sm:$0xff]
  %v1426 = vld [vmem:[%s72 + $0x10] sm:$0xff]
  %v1427 = vld [vmem:[%s72 + $0x18] sm:$0xff]
  %1428 = vmatpush.msra.mxu0 0.0
  %1429 = vmatpush.msra.mxu0 0.0
  %1430 = vmatpush.msra.mxu0 0.0
  %1431 = vmatpush.msra.mxu0 0.0
  %1432 = vmatpush.msra.mxu0 0.0
  %1433 = vmatpush.msra.mxu0 0.0
  %1434 = vmatpush.msra.mxu0 0.0
  %1435 = vmatpush.msra.mxu0 0.0
  %1436 = vmatpush.msra.mxu0 0.0
  %1437 = vmatpush.msra.mxu0 0.0
  %1438 = vmatpush.msra.mxu0 0.0
  %1439 = vmatpush.msra.mxu0 0.0
  %1440 = vmatpush.msra.mxu0 %v1427
  %1441 = vmatpush.msra.mxu0 %v1426
  %1442 = vmatpush.msra.mxu0 %v1425
  %1443 = vmatpush.msra.mxu0 %v1424
  %1444 = vmatmul.f32.gmra.mxu0 %v1331
  %v1445 = vpop.f32.mrf.mxu0
  %v1446 = vadd.f32 0.0, %v1445
  %1447 = vdwg.mxu0
  %v1448 = vld [vmem:[%s100] sm:$0xff]
  %v1449 = vld [vmem:[%s100 + $0x8] sm:$0xff]
  %v1450 = vld [vmem:[%s100 + $0x10] sm:$0xff]
  %v1451 = vld [vmem:[%s100 + $0x18] sm:$0xff]
  %v1452 = vsel %vm48, %v1396, 0
  %1454 = vmatpush.msra.mxu0 0.0
  %1455 = vmatpush.msra.mxu0 0.0
  %1456 = vmatpush.msra.mxu0 0.0
  %1457 = vmatpush.msra.mxu0 0.0
  %1458 = vmatpush.msra.mxu0 0.0
  %1459 = vmatpush.msra.mxu0 0.0
  %1460 = vmatpush.msra.mxu0 0.0
  %1461 = vmatpush.msra.mxu0 0.0
  %1462 = vmatpush.msra.mxu0 0.0
  %1463 = vmatpush.msra.mxu0 0.0
  %1464 = vmatpush.msra.mxu0 0.0
  %1465 = vmatpush.msra.mxu0 0.0
  %1466 = vmatpush.msra.mxu0 %v1451
  %1467 = vmatpush.msra.mxu0 %v1450
  %1468 = vmatpush.msra.mxu0 %v1449
  %1469 = vmatpush.msra.mxu0 %v1448
  %1470 = vmatmul.f32.gmra.mxu0 %v1452
  %v1471 = vpop.f32.mrf.mxu0
  %v1472 = vadd.f32 0.0, %v1471
  %1473 = vdwg.mxu0
  %s1474 = scalar_lea.vmem %s0, 10
  %v1475 = vld [vmem:[%s1474] sm:$0x3]
  %v1476 = vadd.f32 %v1475, %v1422
  %v1477 = vxor.u32 %v1476, 2147483648
  %v1478 = vmul.f32 %v1477, 1.442695
  %v1479 = vpow.pop %v1478
  %v1480 = vadd.f32 %v1479, 1.0
  %v1481 = vrcp.pop %v1480
  %v1482 = vmul.f32 %v1480, %v1481
  %v1483 = vsub.f32 1.0, %v1482
  %v1484 = vmul.f32 %v1481, %v1483
  %v1485 = vadd.f32 %v1481, %v1484
  %vm1486 = vweird.f32 %v1480
  %vm1487 = vweird.f32 %v1481
  %vm1488 = vmor %vm1486, %vm1487
  %v1489 = vsel %vm1488, %v1481, %v1485
  %v1490 = vand.u32 2147483647, %v1480
  %vm1491 = vcmp.eq.f32.partialorder %v1490, 8.507059e+37
  %v1492 = vand.u32 %v1480, 2147483648
  %v1493 = vor.u32 1.1754944e-38, %v1492
  %v1494 = vsel %vm1491, %v1493, %v1489
  %v1495 = vmul.f32 1.0, %v1494
  %v1496 = vadd.f32 %v1422, %v150
  %1498 = vrot.lane.b32.xlu0 %v1496, 64
  %v1499 = vpop.permute.xlu0 %1498
  %v1501 = vmul.f32 %v1495, %v1499
  %1503 = vrot.lane.b32.xlu0 %v1501, 64
  %v1504 = vpop.permute.xlu0 %1503
  %v1506 = vadd.f32 %v1475, %v1504
  %v1507 = vtanh.pop %v1506
  %v1508 = vsub.f32 1.0, %v1495
  %1510 = vrot.lane.b32.xlu0 %v1507, 96
  %v1511 = vpop.permute.xlu0 %1510
  %v1513 = vmul.f32 %v1508, %v1511
  %v1514 = vmul.f32 %v1495, %v1249
  %v1515 = vadd.f32 %v1513, %v1514
  %s1516 = scalar_lea.vmem %s1, 10
  %v1517 = vld [vmem:[%s1516] sm:$0x3]
  %v1518 = vld [vmem:[%s5] sm:$0xff]
  %v1519 = vld [vmem:[%s5 + $0x8] sm:$0xff]
  %v1520 = vld [vmem:[%s5 + $0x10] sm:$0xff]
  %v1521 = vld [vmem:[%s5 + $0x18] sm:$0xff]
  %1523 = vrot.lane.b32.xlu0 %v1515, 96
  %v1524 = vpop.permute.xlu0 %1523
  %v1525 = vsel %vm48, %v1524, 0
  %1527 = vmatpush.msra.mxu0 0.0
  %1528 = vmatpush.msra.mxu0 0.0
  %1529 = vmatpush.msra.mxu0 0.0
  %1530 = vmatpush.msra.mxu0 0.0
  %1531 = vmatpush.msra.mxu0 0.0
  %1532 = vmatpush.msra.mxu0 0.0
  %1533 = vmatpush.msra.mxu0 0.0
  %1534 = vmatpush.msra.mxu0 0.0
  %1535 = vmatpush.msra.mxu0 0.0
  %1536 = vmatpush.msra.mxu0 0.0
  %1537 = vmatpush.msra.mxu0 0.0
  %1538 = vmatpush.msra.mxu0 0.0
  %1539 = vmatpush.msra.mxu0 %v1521
  %1540 = vmatpush.msra.mxu0 %v1520
  %1541 = vmatpush.msra.mxu0 %v1519
  %1542 = vmatpush.msra.mxu0 %v1518
  %1543 = vmatmul.f32.gmra.mxu0 %v1525
  %v1544 = vpop.f32.mrf.mxu0
  %v1545 = vadd.f32 0.0, %v1544
  %1546 = vdwg.mxu0
  %v1547 = vadd.f32 %v1517, %v1545
  %v1548 = vadd.f32 %v1547, %v1446
  %v1549 = vxor.u32 %v1548, 2147483648
  %v1550 = vmul.f32 %v1549, 1.442695
  %v1551 = vpow.pop %v1550
  %v1552 = vadd.f32 %v1551, 1.0
  %v1553 = vrcp.pop %v1552
  %v1554 = vmul.f32 %v1552, %v1553
  %v1555 = vsub.f32 1.0, %v1554
  %v1556 = vmul.f32 %v1553, %v1555
  %v1557 = vadd.f32 %v1553, %v1556
  %vm1558 = vweird.f32 %v1552
  %vm1559 = vweird.f32 %v1553
  %vm1560 = vmor %vm1558, %vm1559
  %v1561 = vsel %vm1560, %v1553, %v1557
  %v1562 = vand.u32 2147483647, %v1552
  %vm1563 = vcmp.eq.f32.partialorder %v1562, 8.507059e+37
  %v1564 = vand.u32 %v1552, 2147483648
  %v1565 = vor.u32 1.1754944e-38, %v1564
  %v1566 = vsel %vm1563, %v1565, %v1561
  %v1567 = vmul.f32 1.0, %v1566
  %v1568 = vadd.f32 %v1446, %v227
  %1570 = vrot.lane.b32.xlu0 %v1568, 64
  %v1571 = vpop.permute.xlu0 %1570
  %v1573 = vmul.f32 %v1567, %v1571
  %1575 = vrot.lane.b32.xlu0 %v1573, 64
  %v1576 = vpop.permute.xlu0 %1575
  %v1578 = vadd.f32 %v1547, %v1576
  %v1579 = vtanh.pop %v1578
  %v1580 = vsub.f32 1.0, %v1567
  %1582 = vrot.lane.b32.xlu0 %v1579, 96
  %v1583 = vpop.permute.xlu0 %1582
  %v1585 = vmul.f32 %v1580, %v1583
  %v1586 = vmul.f32 %v1567, %v1321
  %v1587 = vadd.f32 %v1585, %v1586
  %s1588 = scalar_lea.vmem %s2, 10
  %v1589 = vld [vmem:[%s1588] sm:$0x3]
  %v1590 = vld [vmem:[%s253] sm:$0xff]
  %v1591 = vld [vmem:[%s253 + $0x8] sm:$0xff]
  %v1592 = vld [vmem:[%s253 + $0x10] sm:$0xff]
  %v1593 = vld [vmem:[%s253 + $0x18] sm:$0xff]
  %1595 = vrot.lane.b32.xlu0 %v1587, 96
  %v1596 = vpop.permute.xlu0 %1595
  %v1597 = vsel %vm48, %v1596, 0
  %1599 = vmatpush.msra.mxu0 0.0
  %1600 = vmatpush.msra.mxu0 0.0
  %1601 = vmatpush.msra.mxu0 0.0
  %1602 = vmatpush.msra.mxu0 0.0
  %1603 = vmatpush.msra.mxu0 0.0
  %1604 = vmatpush.msra.mxu0 0.0
  %1605 = vmatpush.msra.mxu0 0.0
  %1606 = vmatpush.msra.mxu0 0.0
  %1607 = vmatpush.msra.mxu0 0.0
  %1608 = vmatpush.msra.mxu0 0.0
  %1609 = vmatpush.msra.mxu0 0.0
  %1610 = vmatpush.msra.mxu0 0.0
  %1611 = vmatpush.msra.mxu0 %v1593
  %1612 = vmatpush.msra.mxu0 %v1592
  %1613 = vmatpush.msra.mxu0 %v1591
  %1614 = vmatpush.msra.mxu0 %v1590
  %1615 = vmatmul.f32.gmra.mxu0 %v1597
  %v1616 = vpop.f32.mrf.mxu0
  %v1617 = vadd.f32 0.0, %v1616
  %1618 = vdwg.mxu0
  %v1619 = vadd.f32 %v1589, %v1617
  %v1620 = vadd.f32 %v1619, %v1472
  %v1621 = vxor.u32 %v1620, 2147483648
  %v1622 = vmul.f32 %v1621, 1.442695
  %v1623 = vpow.pop %v1622
  %v1624 = vadd.f32 %v1623, 1.0
  %v1625 = vrcp.pop %v1624
  %v1626 = vmul.f32 %v1624, %v1625
  %v1627 = vsub.f32 1.0, %v1626
  %v1628 = vmul.f32 %v1625, %v1627
  %v1629 = vadd.f32 %v1625, %v1628
  %vm1630 = vweird.f32 %v1624
  %vm1631 = vweird.f32 %v1625
  %vm1632 = vmor %vm1630, %vm1631
  %v1633 = vsel %vm1632, %v1625, %v1629
  %v1634 = vand.u32 2147483647, %v1624
  %vm1635 = vcmp.eq.f32.partialorder %v1634, 8.507059e+37
  %v1636 = vand.u32 %v1624, 2147483648
  %v1637 = vor.u32 1.1754944e-38, %v1636
  %v1638 = vsel %vm1635, %v1637, %v1633
  %v1639 = vmul.f32 1.0, %v1638
  %v1640 = vadd.f32 %v1472, %v305
  %1642 = vrot.lane.b32.xlu0 %v1640, 64
  %v1643 = vpop.permute.xlu0 %1642
  %v1645 = vmul.f32 %v1639, %v1643
  %1647 = vrot.lane.b32.xlu0 %v1645, 64
  %v1648 = vpop.permute.xlu0 %1647
  %v1650 = vadd.f32 %v1619, %v1648
  %v1651 = vtanh.pop %v1650
  %v1652 = vsub.f32 1.0, %v1639
  %1654 = vrot.lane.b32.xlu0 %v1651, 96
  %v1655 = vpop.permute.xlu0 %1654
  %v1657 = vmul.f32 %v1652, %v1655
  %v1658 = vmul.f32 %v1639, %v1393
  %v1659 = vadd.f32 %v1657, %v1658
  %1661 = vrot.lane.b32.xlu0 %v1659, 96
  %v1662 = vpop.permute.xlu0 %1661
  %s1664 = scalar_lea.vmem %s7, 10
  %1665 = vst.msk [vmem:[%s1664] sm:$0x3] %vm334, %v1662
  %v1666 = vld [vmem:[%s4] sm:$0xff]
  %v1667 = vld [vmem:[%s4 + $0x8] sm:$0xff]
  %v1668 = vld [vmem:[%s4 + $0x10] sm:$0xff]
  %v1669 = vld [vmem:[%s4 + $0x18] sm:$0xff]
  %1670 = vmatpush.msra.mxu0 0.0
  %1671 = vmatpush.msra.mxu0 0.0
  %1672 = vmatpush.msra.mxu0 0.0
  %1673 = vmatpush.msra.mxu0 0.0
  %1674 = vmatpush.msra.mxu0 0.0
  %1675 = vmatpush.msra.mxu0 0.0
  %1676 = vmatpush.msra.mxu0 0.0
  %1677 = vmatpush.msra.mxu0 0.0
  %1678 = vmatpush.msra.mxu0 0.0
  %1679 = vmatpush.msra.mxu0 0.0
  %1680 = vmatpush.msra.mxu0 0.0
  %1681 = vmatpush.msra.mxu0 0.0
  %1682 = vmatpush.msra.mxu0 %v1669
  %1683 = vmatpush.msra.mxu0 %v1668
  %1684 = vmatpush.msra.mxu0 %v1667
  %1685 = vmatpush.msra.mxu0 %v1666
  %1686 = vmatmul.f32.gmra.mxu0 %v1525
  %v1687 = vpop.f32.mrf.mxu0
  %v1688 = vadd.f32 0.0, %v1687
  %1689 = vdwg.mxu0
  %v1690 = vld [vmem:[%s72] sm:$0xff]
  %v1691 = vld [vmem:[%s72 + $0x8] sm:$0xff]
  %v1692 = vld [vmem:[%s72 + $0x10] sm:$0xff]
  %v1693 = vld [vmem:[%s72 + $0x18] sm:$0xff]
  %1694 = vmatpush.msra.mxu0 0.0
  %1695 = vmatpush.msra.mxu0 0.0
  %1696 = vmatpush.msra.mxu0 0.0
  %1697 = vmatpush.msra.mxu0 0.0
  %1698 = vmatpush.msra.mxu0 0.0
  %1699 = vmatpush.msra.mxu0 0.0
  %1700 = vmatpush.msra.mxu0 0.0
  %1701 = vmatpush.msra.mxu0 0.0
  %1702 = vmatpush.msra.mxu0 0.0
  %1703 = vmatpush.msra.mxu0 0.0
  %1704 = vmatpush.msra.mxu0 0.0
  %1705 = vmatpush.msra.mxu0 0.0
  %1706 = vmatpush.msra.mxu0 %v1693
  %1707 = vmatpush.msra.mxu0 %v1692
  %1708 = vmatpush.msra.mxu0 %v1691
  %1709 = vmatpush.msra.mxu0 %v1690
  %1710 = vmatmul.f32.gmra.mxu0 %v1597
  %v1711 = vpop.f32.mrf.mxu0
  %v1712 = vadd.f32 0.0, %v1711
  %1713 = vdwg.mxu0
  %v1714 = vld [vmem:[%s100] sm:$0xff]
  %v1715 = vld [vmem:[%s100 + $0x8] sm:$0xff]
  %v1716 = vld [vmem:[%s100 + $0x10] sm:$0xff]
  %v1717 = vld [vmem:[%s100 + $0x18] sm:$0xff]
  %v1718 = vsel %vm48, %v1662, 0
  %1720 = vmatpush.msra.mxu0 0.0
  %1721 = vmatpush.msra.mxu0 0.0
  %1722 = vmatpush.msra.mxu0 0.0
  %1723 = vmatpush.msra.mxu0 0.0
  %1724 = vmatpush.msra.mxu0 0.0
  %1725 = vmatpush.msra.mxu0 0.0
  %1726 = vmatpush.msra.mxu0 0.0
  %1727 = vmatpush.msra.mxu0 0.0
  %1728 = vmatpush.msra.mxu0 0.0
  %1729 = vmatpush.msra.mxu0 0.0
  %1730 = vmatpush.msra.mxu0 0.0
  %1731 = vmatpush.msra.mxu0 0.0
  %1732 = vmatpush.msra.mxu0 %v1717
  %1733 = vmatpush.msra.mxu0 %v1716
  %1734 = vmatpush.msra.mxu0 %v1715
  %1735 = vmatpush.msra.mxu0 %v1714
  %1736 = vmatmul.f32.gmra.mxu0 %v1718
  %v1737 = vpop.f32.mrf.mxu0
  %v1738 = vadd.f32 0.0, %v1737
  %1739 = vdwg.mxu0
  %s1740 = scalar_lea.vmem %s0, 12
  %v1741 = vld [vmem:[%s1740] sm:$0x3]
  %v1742 = vadd.f32 %v1741, %v1688
  %v1743 = vxor.u32 %v1742, 2147483648
  %v1744 = vmul.f32 %v1743, 1.442695
  %v1745 = vpow.pop %v1744
  %v1746 = vadd.f32 %v1745, 1.0
  %v1747 = vrcp.pop %v1746
  %v1748 = vmul.f32 %v1746, %v1747
  %v1749 = vsub.f32 1.0, %v1748
  %v1750 = vmul.f32 %v1747, %v1749
  %v1751 = vadd.f32 %v1747, %v1750
  %vm1752 = vweird.f32 %v1746
  %vm1753 = vweird.f32 %v1747
  %vm1754 = vmor %vm1752, %vm1753
  %v1755 = vsel %vm1754, %v1747, %v1751
  %v1756 = vand.u32 2147483647, %v1746
  %vm1757 = vcmp.eq.f32.partialorder %v1756, 8.507059e+37
  %v1758 = vand.u32 %v1746, 2147483648
  %v1759 = vor.u32 1.1754944e-38, %v1758
  %v1760 = vsel %vm1757, %v1759, %v1755
  %v1761 = vmul.f32 1.0, %v1760
  %v1762 = vadd.f32 %v1688, %v150
  %1764 = vrot.lane.b32.xlu0 %v1762, 64
  %v1765 = vpop.permute.xlu0 %1764
  %v1767 = vmul.f32 %v1761, %v1765
  %1769 = vrot.lane.b32.xlu0 %v1767, 64
  %v1770 = vpop.permute.xlu0 %1769
  %v1772 = vadd.f32 %v1741, %v1770
  %v1773 = vtanh.pop %v1772
  %v1774 = vsub.f32 1.0, %v1761
  %1776 = vrot.lane.b32.xlu0 %v1773, 96
  %v1777 = vpop.permute.xlu0 %1776
  %v1779 = vmul.f32 %v1774, %v1777
  %v1780 = vmul.f32 %v1761, %v1515
  %v1781 = vadd.f32 %v1779, %v1780
  %s1782 = scalar_lea.vmem %s1, 12
  %v1783 = vld [vmem:[%s1782] sm:$0x3]
  %v1784 = vld [vmem:[%s5] sm:$0xff]
  %v1785 = vld [vmem:[%s5 + $0x8] sm:$0xff]
  %v1786 = vld [vmem:[%s5 + $0x10] sm:$0xff]
  %v1787 = vld [vmem:[%s5 + $0x18] sm:$0xff]
  %1789 = vrot.lane.b32.xlu0 %v1781, 96
  %v1790 = vpop.permute.xlu0 %1789
  %v1791 = vsel %vm48, %v1790, 0
  %1793 = vmatpush.msra.mxu0 0.0
  %1794 = vmatpush.msra.mxu0 0.0
  %1795 = vmatpush.msra.mxu0 0.0
  %1796 = vmatpush.msra.mxu0 0.0
  %1797 = vmatpush.msra.mxu0 0.0
  %1798 = vmatpush.msra.mxu0 0.0
  %1799 = vmatpush.msra.mxu0 0.0
  %1800 = vmatpush.msra.mxu0 0.0
  %1801 = vmatpush.msra.mxu0 0.0
  %1802 = vmatpush.msra.mxu0 0.0
  %1803 = vmatpush.msra.mxu0 0.0
  %1804 = vmatpush.msra.mxu0 0.0
  %1805 = vmatpush.msra.mxu0 %v1787
  %1806 = vmatpush.msra.mxu0 %v1786
  %1807 = vmatpush.msra.mxu0 %v1785
  %1808 = vmatpush.msra.mxu0 %v1784
  %1809 = vmatmul.f32.gmra.mxu0 %v1791
  %v1810 = vpop.f32.mrf.mxu0
  %v1811 = vadd.f32 0.0, %v1810
  %1812 = vdwg.mxu0
  %v1813 = vadd.f32 %v1783, %v1811
  %v1814 = vadd.f32 %v1813, %v1712
  %v1815 = vxor.u32 %v1814, 2147483648
  %v1816 = vmul.f32 %v1815, 1.442695
  %v1817 = vpow.pop %v1816
  %v1818 = vadd.f32 %v1817, 1.0
  %v1819 = vrcp.pop %v1818
  %v1820 = vmul.f32 %v1818, %v1819
  %v1821 = vsub.f32 1.0, %v1820
  %v1822 = vmul.f32 %v1819, %v1821
  %v1823 = vadd.f32 %v1819, %v1822
  %vm1824 = vweird.f32 %v1818
  %vm1825 = vweird.f32 %v1819
  %vm1826 = vmor %vm1824, %vm1825
  %v1827 = vsel %vm1826, %v1819, %v1823
  %v1828 = vand.u32 2147483647, %v1818
  %vm1829 = vcmp.eq.f32.partialorder %v1828, 8.507059e+37
  %v1830 = vand.u32 %v1818, 2147483648
  %v1831 = vor.u32 1.1754944e-38, %v1830
  %v1832 = vsel %vm1829, %v1831, %v1827
  %v1833 = vmul.f32 1.0, %v1832
  %v1834 = vadd.f32 %v1712, %v227
  %1836 = vrot.lane.b32.xlu0 %v1834, 64
  %v1837 = vpop.permute.xlu0 %1836
  %v1839 = vmul.f32 %v1833, %v1837
  %1841 = vrot.lane.b32.xlu0 %v1839, 64
  %v1842 = vpop.permute.xlu0 %1841
  %v1844 = vadd.f32 %v1813, %v1842
  %v1845 = vtanh.pop %v1844
  %v1846 = vsub.f32 1.0, %v1833
  %1848 = vrot.lane.b32.xlu0 %v1845, 96
  %v1849 = vpop.permute.xlu0 %1848
  %v1851 = vmul.f32 %v1846, %v1849
  %v1852 = vmul.f32 %v1833, %v1587
  %v1853 = vadd.f32 %v1851, %v1852
  %s1854 = scalar_lea.vmem %s2, 12
  %v1855 = vld [vmem:[%s1854] sm:$0x3]
  %v1856 = vld [vmem:[%s253] sm:$0xff]
  %v1857 = vld [vmem:[%s253 + $0x8] sm:$0xff]
  %v1858 = vld [vmem:[%s253 + $0x10] sm:$0xff]
  %v1859 = vld [vmem:[%s253 + $0x18] sm:$0xff]
  %1861 = vrot.lane.b32.xlu0 %v1853, 96
  %v1862 = vpop.permute.xlu0 %1861
  %v1863 = vsel %vm48, %v1862, 0
  %1865 = vmatpush.msra.mxu0 0.0
  %1866 = vmatpush.msra.mxu0 0.0
  %1867 = vmatpush.msra.mxu0 0.0
  %1868 = vmatpush.msra.mxu0 0.0
  %1869 = vmatpush.msra.mxu0 0.0
  %1870 = vmatpush.msra.mxu0 0.0
  %1871 = vmatpush.msra.mxu0 0.0
  %1872 = vmatpush.msra.mxu0 0.0
  %1873 = vmatpush.msra.mxu0 0.0
  %1874 = vmatpush.msra.mxu0 0.0
  %1875 = vmatpush.msra.mxu0 0.0
  %1876 = vmatpush.msra.mxu0 0.0
  %1877 = vmatpush.msra.mxu0 %v1859
  %1878 = vmatpush.msra.mxu0 %v1858
  %1879 = vmatpush.msra.mxu0 %v1857
  %1880 = vmatpush.msra.mxu0 %v1856
  %1881 = vmatmul.f32.gmra.mxu0 %v1863
  %v1882 = vpop.f32.mrf.mxu0
  %v1883 = vadd.f32 0.0, %v1882
  %1884 = vdwg.mxu0
  %v1885 = vadd.f32 %v1855, %v1883
  %v1886 = vadd.f32 %v1885, %v1738
  %v1887 = vxor.u32 %v1886, 2147483648
  %v1888 = vmul.f32 %v1887, 1.442695
  %v1889 = vpow.pop %v1888
  %v1890 = vadd.f32 %v1889, 1.0
  %v1891 = vrcp.pop %v1890
  %v1892 = vmul.f32 %v1890, %v1891
  %v1893 = vsub.f32 1.0, %v1892
  %v1894 = vmul.f32 %v1891, %v1893
  %v1895 = vadd.f32 %v1891, %v1894
  %vm1896 = vweird.f32 %v1890
  %vm1897 = vweird.f32 %v1891
  %vm1898 = vmor %vm1896, %vm1897
  %v1899 = vsel %vm1898, %v1891, %v1895
  %v1900 = vand.u32 2147483647, %v1890
  %vm1901 = vcmp.eq.f32.partialorder %v1900, 8.507059e+37
  %v1902 = vand.u32 %v1890, 2147483648
  %v1903 = vor.u32 1.1754944e-38, %v1902
  %v1904 = vsel %vm1901, %v1903, %v1899
  %v1905 = vmul.f32 1.0, %v1904
  %v1906 = vadd.f32 %v1738, %v305
  %1908 = vrot.lane.b32.xlu0 %v1906, 64
  %v1909 = vpop.permute.xlu0 %1908
  %v1911 = vmul.f32 %v1905, %v1909
  %1913 = vrot.lane.b32.xlu0 %v1911, 64
  %v1914 = vpop.permute.xlu0 %1913
  %v1916 = vadd.f32 %v1885, %v1914
  %v1917 = vtanh.pop %v1916
  %v1918 = vsub.f32 1.0, %v1905
  %1920 = vrot.lane.b32.xlu0 %v1917, 96
  %v1921 = vpop.permute.xlu0 %1920
  %v1923 = vmul.f32 %v1918, %v1921
  %v1924 = vmul.f32 %v1905, %v1659
  %v1925 = vadd.f32 %v1923, %v1924
  %1927 = vrot.lane.b32.xlu0 %v1925, 96
  %v1928 = vpop.permute.xlu0 %1927
  %s1930 = scalar_lea.vmem %s7, 12
  %1931 = vst.msk [vmem:[%s1930] sm:$0x3] %vm334, %v1928
  %v1932 = vld [vmem:[%s4] sm:$0xff]
  %v1933 = vld [vmem:[%s4 + $0x8] sm:$0xff]
  %v1934 = vld [vmem:[%s4 + $0x10] sm:$0xff]
  %v1935 = vld [vmem:[%s4 + $0x18] sm:$0xff]
  %1936 = vmatpush.msra.mxu0 0.0
  %1937 = vmatpush.msra.mxu0 0.0
  %1938 = vmatpush.msra.mxu0 0.0
  %1939 = vmatpush.msra.mxu0 0.0
  %1940 = vmatpush.msra.mxu0 0.0
  %1941 = vmatpush.msra.mxu0 0.0
  %1942 = vmatpush.msra.mxu0 0.0
  %1943 = vmatpush.msra.mxu0 0.0
  %1944 = vmatpush.msra.mxu0 0.0
  %1945 = vmatpush.msra.mxu0 0.0
  %1946 = vmatpush.msra.mxu0 0.0
  %1947 = vmatpush.msra.mxu0 0.0
  %1948 = vmatpush.msra.mxu0 %v1935
  %1949 = vmatpush.msra.mxu0 %v1934
  %1950 = vmatpush.msra.mxu0 %v1933
  %1951 = vmatpush.msra.mxu0 %v1932
  %1952 = vmatmul.f32.gmra.mxu0 %v1791
  %v1953 = vpop.f32.mrf.mxu0
  %v1954 = vadd.f32 0.0, %v1953
  %1955 = vdwg.mxu0
  %v1956 = vld [vmem:[%s72] sm:$0xff]
  %v1957 = vld [vmem:[%s72 + $0x8] sm:$0xff]
  %v1958 = vld [vmem:[%s72 + $0x10] sm:$0xff]
  %v1959 = vld [vmem:[%s72 + $0x18] sm:$0xff]
  %1960 = vmatpush.msra.mxu0 0.0
  %1961 = vmatpush.msra.mxu0 0.0
  %1962 = vmatpush.msra.mxu0 0.0
  %1963 = vmatpush.msra.mxu0 0.0
  %1964 = vmatpush.msra.mxu0 0.0
  %1965 = vmatpush.msra.mxu0 0.0
  %1966 = vmatpush.msra.mxu0 0.0
  %1967 = vmatpush.msra.mxu0 0.0
  %1968 = vmatpush.msra.mxu0 0.0
  %1969 = vmatpush.msra.mxu0 0.0
  %1970 = vmatpush.msra.mxu0 0.0
  %1971 = vmatpush.msra.mxu0 0.0
  %1972 = vmatpush.msra.mxu0 %v1959
  %1973 = vmatpush.msra.mxu0 %v1958
  %1974 = vmatpush.msra.mxu0 %v1957
  %1975 = vmatpush.msra.mxu0 %v1956
  %1976 = vmatmul.f32.gmra.mxu0 %v1863
  %v1977 = vpop.f32.mrf.mxu0
  %v1978 = vadd.f32 0.0, %v1977
  %1979 = vdwg.mxu0
  %v1980 = vld [vmem:[%s100] sm:$0xff]
  %v1981 = vld [vmem:[%s100 + $0x8] sm:$0xff]
  %v1982 = vld [vmem:[%s100 + $0x10] sm:$0xff]
  %v1983 = vld [vmem:[%s100 + $0x18] sm:$0xff]
  %v1984 = vsel %vm48, %v1928, 0
  %1986 = vmatpush.msra.mxu0 0.0
  %1987 = vmatpush.msra.mxu0 0.0
  %1988 = vmatpush.msra.mxu0 0.0
  %1989 = vmatpush.msra.mxu0 0.0
  %1990 = vmatpush.msra.mxu0 0.0
  %1991 = vmatpush.msra.mxu0 0.0
  %1992 = vmatpush.msra.mxu0 0.0
  %1993 = vmatpush.msra.mxu0 0.0
  %1994 = vmatpush.msra.mxu0 0.0
  %1995 = vmatpush.msra.mxu0 0.0
  %1996 = vmatpush.msra.mxu0 0.0
  %1997 = vmatpush.msra.mxu0 0.0
  %1998 = vmatpush.msra.mxu0 %v1983
  %1999 = vmatpush.msra.mxu0 %v1982
  %2000 = vmatpush.msra.mxu0 %v1981
  %2001 = vmatpush.msra.mxu0 %v1980
  %2002 = vmatmul.f32.gmra.mxu0 %v1984
  %v2003 = vpop.f32.mrf.mxu0
  %v2004 = vadd.f32 0.0, %v2003
  %2005 = vdwg.mxu0
  %s2006 = scalar_lea.vmem %s0, 14
  %v2007 = vld [vmem:[%s2006] sm:$0x3]
  %v2008 = vadd.f32 %v2007, %v1954
  %v2009 = vxor.u32 %v2008, 2147483648
  %v2010 = vmul.f32 %v2009, 1.442695
  %v2011 = vpow.pop %v2010
  %v2012 = vadd.f32 %v2011, 1.0
  %v2013 = vrcp.pop %v2012
  %v2014 = vmul.f32 %v2012, %v2013
  %v2015 = vsub.f32 1.0, %v2014
  %v2016 = vmul.f32 %v2013, %v2015
  %v2017 = vadd.f32 %v2013, %v2016
  %vm2018 = vweird.f32 %v2012
  %vm2019 = vweird.f32 %v2013
  %vm2020 = vmor %vm2018, %vm2019
  %v2021 = vsel %vm2020, %v2013, %v2017
  %v2022 = vand.u32 2147483647, %v2012
  %vm2023 = vcmp.eq.f32.partialorder %v2022, 8.507059e+37
  %v2024 = vand.u32 %v2012, 2147483648
  %v2025 = vor.u32 1.1754944e-38, %v2024
  %v2026 = vsel %vm2023, %v2025, %v2021
  %v2027 = vmul.f32 1.0, %v2026
  %v2028 = vadd.f32 %v1954, %v150
  %2030 = vrot.lane.b32.xlu0 %v2028, 64
  %v2031 = vpop.permute.xlu0 %2030
  %v2033 = vmul.f32 %v2027, %v2031
  %2035 = vrot.lane.b32.xlu0 %v2033, 64
  %v2036 = vpop.permute.xlu0 %2035
  %v2038 = vadd.f32 %v2007, %v2036
  %v2039 = vtanh.pop %v2038
  %v2040 = vsub.f32 1.0, %v2027
  %2042 = vrot.lane.b32.xlu0 %v2039, 96
  %v2043 = vpop.permute.xlu0 %2042
  %v2045 = vmul.f32 %v2040, %v2043
  %v2046 = vmul.f32 %v2027, %v1781
  %v2047 = vadd.f32 %v2045, %v2046
  %s2048 = scalar_lea.vmem %s1, 14
  %v2049 = vld [vmem:[%s2048] sm:$0x3]
  %v2050 = vld [vmem:[%s5] sm:$0xff]
  %v2051 = vld [vmem:[%s5 + $0x8] sm:$0xff]
  %v2052 = vld [vmem:[%s5 + $0x10] sm:$0xff]
  %v2053 = vld [vmem:[%s5 + $0x18] sm:$0xff]
  %2055 = vrot.lane.b32.xlu0 %v2047, 96
  %v2056 = vpop.permute.xlu0 %2055
  %v2057 = vsel %vm48, %v2056, 0
  %2059 = vmatpush.msra.mxu0 0.0
  %2060 = vmatpush.msra.mxu0 0.0
  %2061 = vmatpush.msra.mxu0 0.0
  %2062 = vmatpush.msra.mxu0 0.0
  %2063 = vmatpush.msra.mxu0 0.0
  %2064 = vmatpush.msra.mxu0 0.0
  %2065 = vmatpush.msra.mxu0 0.0
  %2066 = vmatpush.msra.mxu0 0.0
  %2067 = vmatpush.msra.mxu0 0.0
  %2068 = vmatpush.msra.mxu0 0.0
  %2069 = vmatpush.msra.mxu0 0.0
  %2070 = vmatpush.msra.mxu0 0.0
  %2071 = vmatpush.msra.mxu0 %v2053
  %2072 = vmatpush.msra.mxu0 %v2052
  %2073 = vmatpush.msra.mxu0 %v2051
  %2074 = vmatpush.msra.mxu0 %v2050
  %2075 = vmatmul.f32.gmra.mxu0 %v2057
  %v2076 = vpop.f32.mrf.mxu0
  %v2077 = vadd.f32 0.0, %v2076
  %2078 = vdwg.mxu0
  %v2079 = vadd.f32 %v2049, %v2077
  %v2080 = vadd.f32 %v2079, %v1978
  %v2081 = vxor.u32 %v2080, 2147483648
  %v2082 = vmul.f32 %v2081, 1.442695
  %v2083 = vpow.pop %v2082
  %v2084 = vadd.f32 %v2083, 1.0
  %v2085 = vrcp.pop %v2084
  %v2086 = vmul.f32 %v2084, %v2085
  %v2087 = vsub.f32 1.0, %v2086
  %v2088 = vmul.f32 %v2085, %v2087
  %v2089 = vadd.f32 %v2085, %v2088
  %vm2090 = vweird.f32 %v2084
  %vm2091 = vweird.f32 %v2085
  %vm2092 = vmor %vm2090, %vm2091
  %v2093 = vsel %vm2092, %v2085, %v2089
  %v2094 = vand.u32 2147483647, %v2084
  %vm2095 = vcmp.eq.f32.partialorder %v2094, 8.507059e+37
  %v2096 = vand.u32 %v2084, 2147483648
  %v2097 = vor.u32 1.1754944e-38, %v2096
  %v2098 = vsel %vm2095, %v2097, %v2093
  %v2099 = vmul.f32 1.0, %v2098
  %v2100 = vadd.f32 %v1978, %v227
  %2102 = vrot.lane.b32.xlu0 %v2100, 64
  %v2103 = vpop.permute.xlu0 %2102
  %v2105 = vmul.f32 %v2099, %v2103
  %2107 = vrot.lane.b32.xlu0 %v2105, 64
  %v2108 = vpop.permute.xlu0 %2107
  %v2110 = vadd.f32 %v2079, %v2108
  %v2111 = vtanh.pop %v2110
  %v2112 = vsub.f32 1.0, %v2099
  %2114 = vrot.lane.b32.xlu0 %v2111, 96
  %v2115 = vpop.permute.xlu0 %2114
  %v2117 = vmul.f32 %v2112, %v2115
  %v2118 = vmul.f32 %v2099, %v1853
  %v2119 = vadd.f32 %v2117, %v2118
  %s2120 = scalar_lea.vmem %s2, 14
  %v2121 = vld [vmem:[%s2120] sm:$0x3]
  %v2122 = vld [vmem:[%s253] sm:$0xff]
  %v2123 = vld [vmem:[%s253 + $0x8] sm:$0xff]
  %v2124 = vld [vmem:[%s253 + $0x10] sm:$0xff]
  %v2125 = vld [vmem:[%s253 + $0x18] sm:$0xff]
  %2127 = vrot.lane.b32.xlu0 %v2119, 96
  %v2128 = vpop.permute.xlu0 %2127
  %v2129 = vsel %vm48, %v2128, 0
  %2131 = vmatpush.msra.mxu0 0.0
  %2132 = vmatpush.msra.mxu0 0.0
  %2133 = vmatpush.msra.mxu0 0.0
  %2134 = vmatpush.msra.mxu0 0.0
  %2135 = vmatpush.msra.mxu0 0.0
  %2136 = vmatpush.msra.mxu0 0.0
  %2137 = vmatpush.msra.mxu0 0.0
  %2138 = vmatpush.msra.mxu0 0.0
  %2139 = vmatpush.msra.mxu0 0.0
  %2140 = vmatpush.msra.mxu0 0.0
  %2141 = vmatpush.msra.mxu0 0.0
  %2142 = vmatpush.msra.mxu0 0.0
  %2143 = vmatpush.msra.mxu0 %v2125
  %2144 = vmatpush.msra.mxu0 %v2124
  %2145 = vmatpush.msra.mxu0 %v2123
  %2146 = vmatpush.msra.mxu0 %v2122
  %2147 = vmatmul.f32.gmra.mxu0 %v2129
  %v2148 = vpop.f32.mrf.mxu0
  %v2149 = vadd.f32 0.0, %v2148
  %2150 = vdwg.mxu0
  %v2151 = vadd.f32 %v2121, %v2149
  %v2152 = vadd.f32 %v2151, %v2004
  %v2153 = vxor.u32 %v2152, 2147483648
  %v2154 = vmul.f32 %v2153, 1.442695
  %v2155 = vpow.pop %v2154
  %v2156 = vadd.f32 %v2155, 1.0
  %v2157 = vrcp.pop %v2156
  %v2158 = vmul.f32 %v2156, %v2157
  %v2159 = vsub.f32 1.0, %v2158
  %v2160 = vmul.f32 %v2157, %v2159
  %v2161 = vadd.f32 %v2157, %v2160
  %vm2162 = vweird.f32 %v2156
  %vm2163 = vweird.f32 %v2157
  %vm2164 = vmor %vm2162, %vm2163
  %v2165 = vsel %vm2164, %v2157, %v2161
  %v2166 = vand.u32 2147483647, %v2156
  %vm2167 = vcmp.eq.f32.partialorder %v2166, 8.507059e+37
  %v2168 = vand.u32 %v2156, 2147483648
  %v2169 = vor.u32 1.1754944e-38, %v2168
  %v2170 = vsel %vm2167, %v2169, %v2165
  %v2171 = vmul.f32 1.0, %v2170
  %v2172 = vadd.f32 %v2004, %v305
  %2174 = vrot.lane.b32.xlu0 %v2172, 64
  %v2175 = vpop.permute.xlu0 %2174
  %v2177 = vmul.f32 %v2171, %v2175
  %2179 = vrot.lane.b32.xlu0 %v2177, 64
  %v2180 = vpop.permute.xlu0 %2179
  %v2182 = vadd.f32 %v2151, %v2180
  %v2183 = vtanh.pop %v2182
  %v2184 = vsub.f32 1.0, %v2171
  %2186 = vrot.lane.b32.xlu0 %v2183, 96
  %v2187 = vpop.permute.xlu0 %2186
  %v2189 = vmul.f32 %v2184, %v2187
  %v2190 = vmul.f32 %v2171, %v1925
  %v2191 = vadd.f32 %v2189, %v2190
  %2193 = vrot.lane.b32.xlu0 %v2191, 96
  %v2194 = vpop.permute.xlu0 %2193
  %s2196 = scalar_lea.vmem %s7, 14
  %2197 = vst.msk [vmem:[%s2196] sm:$0x3] %vm334, %v2194
  %2199 = vst.msk [vmem:[%s8] sm:$0x3] %vm334, %v2056
  %s2201 = scalar_lea.vmem %s8, 2
  %2202 = vst.msk [vmem:[%s2201] sm:$0x3] %vm334, %v2128
  %s2203 = scalar_lea.vmem %s8, 4
  %2204 = vst.msk [vmem:[%s2203] sm:$0x3] %vm334, %v2194
  // Predicated region
  $region30: #{gru_with_cells_forward.1} parent=0 // pred_check
    _
  $region31: #{gru_with_cells_forward.1} parent=0 // pred_check_branch
    %2206 = sbr.rel (0) target = $region33
  $region32: #{gru_with_cells_forward.1} parent=0 // pred_region
    _
  $region33: #{gru_with_cells_forward.1} parent=0 // pred_fallthru
    _
  // Predicated region
  $region34: #{gru_with_cells_forward.1} parent=0 // pred_check
    _
  $region35: #{gru_with_cells_forward.1} parent=0 // pred_check_branch
    %2208 = sbr.rel (0) target = $region37
  $region36: #{gru_with_cells_forward.1} parent=0 // pred_region
    _
  $region37: #{gru_with_cells_forward.1} parent=0 // pred_fallthru
    _
  // Predicated region
  $region38: #{gru_with_cells_forward.1} parent=0 // pred_check
    _
  $region39: #{gru_with_cells_forward.1} parent=0 // pred_check_branch
    %2210 = sbr.rel (0) target = $region41
  $region40: #{gru_with_cells_forward.1} parent=0 // pred_region
    _
  $region41: #{gru_with_cells_forward.1} parent=0 // pred_fallthru
    _
  // Predicated region
  $region42: #{gru_with_cells_forward.1} parent=0 // pred_check
    _
  $region43: #{gru_with_cells_forward.1} parent=0 // pred_check_branch
    %2212 = sbr.rel (0) target = $region45
  $region44: #{gru_with_cells_forward.1} parent=0 // pred_region
    _
  $region45: #{gru_with_cells_forward.1} parent=0 // pred_fallthru
    _

</llo_original>
